<compile_context>
chip_gen: v6e
topology: v6e:2x2x1
jax: 0.10.0
libtpu: 0.0.40
codegen_flags: <defaults>
</compile_context>

<pallas_src>
import functools
import math

import jax
import jax.numpy as jnp
from jax.experimental import pallas as pl
from jax.experimental.pallas import tpu as pltpu

_VMEM_LIMIT = 32 * 1024 * 1024     # explicit scoped-VMEM budget: safe on v5e/v6e (128 MiB) and v7x (64 MiB)
_ROW_BLOCK = 512                   # rows per grid step (multiple of 8); small enough for every generation
_VMEM_SPEC = pl.BlockSpec(memory_space=pltpu.MemorySpace.VMEM)


def _pick_row_block(rows, target=_ROW_BLOCK):
    """Largest row block <= target that tiles `rows` (multiple of 8), else all rows."""
    if rows <= target:
        return rows
    for blk in range(target - target % 8, 7, -8):
        if rows % blk == 0:
            return blk
    return rows


# ----------------------------------------------------------------------------
# Pallas kernels
# ----------------------------------------------------------------------------
def _conv_kernel(*refs, relu_out, has_residual):
    """Fused 3x3-conv step on one row block: one big-K matmul + bias (+res) (+relu).

    refs = (patch_ref[(bm, 9*Cin) bf16], w_ref[(9*Cin, Cout) bf16],
            b_ref[(1, Cout) f32], [res_ref[(bm, Cout) f32]], out_ref[(bm, Cout) f32])
    """
    if has_residual:
        p_ref, w_ref, b_ref, r_ref, o_ref = refs
    else:
        p_ref, w_ref, b_ref, o_ref = refs
    acc = jnp.dot(p_ref[...], w_ref[...], preferred_element_type=jnp.float32)
    acc = acc + b_ref[...]
    if has_residual:
        acc = acc + r_ref[...]                 # ImpalaResidual: conv2(out) + x
    if relu_out:
        acc = jnp.maximum(acc, 0.0)
    o_ref[...] = acc


def _pool_kernel(t_ref, o_ref):
    """MaxPool2d(3, stride=2, padding=1): max over 9 pre-shifted window taps."""
    m = t_ref[0]
    for t in range(1, 9):
        m = jnp.maximum(m, t_ref[t])
    o_ref[...] = m


def _head_kernel(f_ref, wl_ref, bl_ref, wc_ref, bc_ref, h_ref, v_ref):
    """relu -> Linear(feat, hidden) -> relu, then critic Linear(hidden, 1)."""
    f = jnp.maximum(f_ref[...], 0.0)
    h = jnp.dot(f.astype(jnp.bfloat16), wl_ref[...],
                preferred_element_type=jnp.float32) + bl_ref[...]
    h = jnp.maximum(h, 0.0)
    v = jnp.dot(h.astype(jnp.bfloat16), wc_ref[...],
                preferred_element_type=jnp.float32) + bc_ref[...]
    h_ref[...] = h
    v_ref[...] = v


# ----------------------------------------------------------------------------
# Wrappers (JAX glue: padding, im2col/pool-window slicing, reshapes)
# ----------------------------------------------------------------------------
def conv3x3(x, p, *, relu_out=False, residual=None):
    """x: (N,H,W,Cin) f32 NHWC; p['w']: (9*Cin, Cout) bf16; p['b']: (1, Cout) f32."""
    n, h, w, cin = x.shape
    kdim, cout = p["w"].shape
    assert kdim == 9 * cin
    # im2col built with cheap XLA slices, folded into the contraction dim so the
    # kernel runs ONE (rows x 9Cin) x (9Cin x Cout) matmul.
    xpad = jnp.pad(x, ((0, 0), (1, 1), (1, 1), (0, 0)))
    patches = jnp.concatenate(
        [xpad[:, dy:dy + h, dx:dx + w, :] for dy in range(3) for dx in range(3)],
        axis=-1).reshape(n * h * w, kdim).astype(jnp.bfloat16)
    rows = n * h * w
    bm = _pick_row_block(rows)

    args = [patches, p["w"], p["b"]]
    in_specs = [pl.BlockSpec((bm, kdim), lambda i: (i, 0)),
                pl.BlockSpec((kdim, cout), lambda i: (0, 0)),
                pl.BlockSpec((1, cout), lambda i: (0, 0))]
    if residual is not None:
        args.append(residual.reshape(rows, cout))
        in_specs.append(pl.BlockSpec((bm, cout), lambda i: (i, 0)))

    bytes_accessed = (rows * kdim * 2 + kdim * cout * 2 + cout * 4
                      + rows * cout * 4 * (2 if residual is not None else 1))
    out = pl.pallas_call(
        functools.partial(_conv_kernel, relu_out=relu_out,
                          has_residual=residual is not None),
        grid=(rows // bm,),
        in_specs=in_specs,
        out_specs=pl.BlockSpec((bm, cout), lambda i: (i, 0)),
        out_shape=jax.ShapeDtypeStruct((rows, cout), jnp.float32),
        compiler_params=pltpu.CompilerParams(
            dimension_semantics=("parallel",), vmem_limit_bytes=_VMEM_LIMIT),
        cost_estimate=pl.CostEstimate(flops=2 * rows * kdim * cout,
                                      transcendentals=0,
                                      bytes_accessed=int(bytes_accessed)),
    )(*args)
    return out.reshape(n, h, w, cout)


def maxpool3x3s2(x):
    """MaxPool2d(kernel=3, stride=2, padding=1) on NHWC input."""
    n, h, w, c = x.shape
    ho, wo = -(-h // 2), -(-w // 2)                          # ceil(H/2), ceil(W/2)
    neg = jnp.finfo(jnp.float32).min
    xpad = jnp.pad(x, ((0, 0), (1, 1), (1, 1), (0, 0)), constant_values=neg)
    # Explicit slice bounds: exactly ho/wo elements per tap, no reliance on clamping.
    taps = jnp.stack(
        [xpad[:, dy:dy + 2 * (ho - 1) + 1:2, dx:dx + 2 * (wo - 1) + 1:2, :]
         .reshape(n * ho * wo, c)
         for dy in range(3) for dx in range(3)], axis=0)
    rows = n * ho * wo
    bm = _pick_row_block(rows)
    out = pl.pallas_call(
        _pool_kernel,
        grid=(rows // bm,),
        in_specs=[pl.BlockSpec((9, bm, c), lambda i: (0, i, 0))],
        out_specs=pl.BlockSpec((bm, c), lambda i: (i, 0)),
        out_shape=jax.ShapeDtypeStruct((rows, c), jnp.float32),
        compiler_params=pltpu.CompilerParams(
            dimension_semantics=("parallel",), vmem_limit_bytes=_VMEM_LIMIT),
    )(taps)
    return out.reshape(n, ho, wo, c)


def head(feat, p):
    n = feat.shape[0]
    hidden = p["wl"].shape[1]
    return pl.pallas_call(
        _head_kernel,
        out_shape=(jax.ShapeDtypeStruct((n, hidden), jnp.float32),
                   jax.ShapeDtypeStruct((n, 1), jnp.float32)),
        in_specs=[_VMEM_SPEC] * 5,
        out_specs=(_VMEM_SPEC, _VMEM_SPEC),
        compiler_params=pltpu.CompilerParams(vmem_limit_bytes=_VMEM_LIMIT),
    )(feat, p["wl"], p["bl"], p["wc"], p["bc"])


# ----------------------------------------------------------------------------
# Parameters (deterministic, synthetic; shapes match the PyTorch module)
# ----------------------------------------------------------------------------
def init_params(key, num_channels, hidden_size, image_size):
    ortho = jax.nn.initializers.orthogonal
    relu_gain = math.sqrt(2.0)                     # nn.init.calculate_gain('relu')

    def conv_p(k, cin, cout, gain):
        # HWIO; equivalent to torch Conv2d weight (Cout, Cin, 3, 3) transposed.
        return {"w": ortho(scale=gain)(k, (3, 3, cin, cout), jnp.float32),
                "b": jnp.zeros((cout,), jnp.float32)}

    keys = iter(jax.random.split(key, 32))
    stages = []
    depth_in = num_channels
    for depth_out in (16, 32, 32):
        stages.append({
            "conv": conv_p(next(keys), depth_in, depth_out, relu_gain),
            "res": [{"conv1": conv_p(next(keys), depth_out, depth_out, relu_gain),
                     "conv2": conv_p(next(keys), depth_out, depth_out, relu_gain)}
                    for _ in range(2)],
        })
        depth_in = depth_out
    feat = (math.ceil(image_size / 8) ** 2) * depth_in
    linear = {"w": ortho(scale=1.0)(next(keys), (feat, hidden_size), jnp.float32),
              "b": jnp.zeros((hidden_size,), jnp.float32)}
    critic = {"w": ortho(scale=1.0)(next(keys), (hidden_size, 1), jnp.float32),
              "b": jnp.zeros((1,), jnp.float32)}
    return {"stages": stages, "linear": linear, "critic": critic}


def prepare_params(raw, image_size):
    """One-time host-side weight shuffle into kernel-friendly layouts.

    * conv weights -> (9*Cin, Cout) bf16 with the /255 input scale folded into
      the first conv's weights,
    * linear weight rows permuted from torch's NCHW flatten order to the NHWC
      flatten order used here (so no transpose on the activation path),
    * MXU weights in bf16, biases in f32.
    """
    def prep_conv(c, scale=None):
        w = c["w"].reshape(-1, c["w"].shape[-1])        # (9*Cin, Cout), (dy,dx,cin)-major
        if scale is not None:
            w = w * scale                               # fold inputs/255.0 into weights
        return {"w": w.astype(jnp.bfloat16),
                "b": c["b"].reshape(1, -1).astype(jnp.float32)}

    stages, first = [], True
    for st in raw["stages"]:
        stages.append({
            "conv": prep_conv(st["conv"], (1.0 / 255.0) if first else None),
            "res": [{"conv1": prep_conv(r["conv1"]),
                     "conv2": prep_conv(r["conv2"])} for r in st["res"]],
        })
        first = False

    s = math.ceil(image_size / 8)
    c = raw["stages"][-1]["conv"]["b"].shape[0]
    yy, xx, cc = jnp.meshgrid(jnp.arange(s), jnp.arange(s), jnp.arange(c), indexing="ij")
    perm = (cc * s * s + yy * s + xx).reshape(-1)       # NHWC-flat idx -> NCHW-flat row
    head_p = {"wl": raw["linear"]["w"][perm, :].astype(jnp.bfloat16),
              "bl": raw["linear"]["b"].reshape(1, -1).astype(jnp.float32),
              "wc": raw["critic"]["w"].astype(jnp.bfloat16),
              "bc": raw["critic"]["b"].reshape(1, 1).astype(jnp.float32)}
    return {"stages": stages, "head": head_p}


# ----------------------------------------------------------------------------
# ImpalaCNNBase.forward (recurrent=False)
# ----------------------------------------------------------------------------
def impala_cnn_base_forward(params, inputs, rnn_hxs, masks):
    """inputs: (N, C, H, W) f32 (NCHW, like PyTorch).
    Returns (critic_value (N,1), hidden (N,hidden), rnn_hxs)."""
    del masks  # non-recurrent: GRU path is never taken (is_recurrent == False)
    # TODO(synk): the recurrent GRU branch (_forward_gru) is not implemented; the
    # default module config has recurrent=False so it is never executed.
    x = jnp.transpose(inputs, (0, 2, 3, 1)).astype(jnp.float32)   # NCHW -> NHWC
    for stage in params["stages"]:
        x = conv3x3(x, stage["conv"])            # Conv2d(3, pad=1); /255 folded into w
        x = maxpool3x3s2(x)                      # MaxPool2d(3, 2, 1)
        for res in stage["res"]:                 # 2x ImpalaResidual
            # relu applied ONCE on the un-duplicated activation, relu after conv1
            # and the skip-add of conv2 fused into the kernel epilogues.
            t = conv3x3(jnp.maximum(x, 0.0), res["conv1"], relu_out=True)
            x = conv3x3(t, res["conv2"], residual=x)
    n = x.shape[0]
    feat = x.reshape(n, -1)      # NHWC flatten; linear rows were pre-permuted to match
    hidden, value = head(feat, params["head"])
    return value, hidden, rnn_hxs


if __name__ == "__main__":
    key = jax.random.PRNGKey(0)
    kp, kx = jax.random.split(key)
    N, C, S, HID = 2, 4, 16, 32        # batch=2, channels=4, image_size=16, hidden=32
    raw = init_params(kp, num_channels=C, hidden_size=HID, image_size=S)
    params = prepare_params(raw, image_size=S)
    inputs = jax.random.uniform(kx, (N, C, S, S), jnp.float32, 0.0, 255.0)
    rnn_hxs = jnp.zeros((N, 1), jnp.float32)   # recurrent_hidden_state_size == 1
    masks = jnp.ones((N, 1), jnp.float32)

    fwd = jax.jit(impala_cnn_base_forward)
    value, hidden, hxs = fwd(params, inputs, rnn_hxs, masks)
    jax.block_until_ready((value, hidden, hxs))

    assert value.shape == (N, 1), value.shape
    assert hidden.shape == (N, HID), hidden.shape
    assert hxs.shape == (N, 1), hxs.shape
    assert bool(jnp.all(jnp.isfinite(value))) and bool(jnp.all(jnp.isfinite(hidden)))
    print("KERNEL_OK")
</pallas_src>

<mosaic_0001>
module attributes {stable_mosaic.version = 11 : i64} {
  func.func @_conv_kernel(%arg0: i32, %arg1: memref<512x36xbf16, #tpu.memory_space<vmem>>, %arg2: memref<36x16xbf16, #tpu.memory_space<vmem>>, %arg3: memref<1x16xf32, #tpu.memory_space<vmem>>, %arg4: memref<512x16xf32, #tpu.memory_space<vmem>>) attributes {dimension_semantics = [#tpu.dimension_semantics<parallel>], iteration_bounds = array<i64: 1>, scalar_prefetch = 0 : i64, scratch_operands = 0 : i64, tpu.core_type = #tpu.core_type<tc>, window_params = [{transform_indices = @transform_0, window_bounds = array<i64: 512, 36>}, {pipeline_mode = #tpu.pipeline_mode<synchronous>, transform_indices = @transform_1, window_bounds = array<i64: 36, 16>}, {pipeline_mode = #tpu.pipeline_mode<synchronous>, transform_indices = @transform_2, window_bounds = array<i64: 1, 16>}, {transform_indices = @transform_3, window_bounds = array<i64: 512, 16>}]} {
    %c0 = arith.constant 0 : index
    %c0_0 = arith.constant 0 : index
    %0 = vector.load %arg1[%c0, %c0_0] : memref<512x36xbf16, #tpu.memory_space<vmem>>, vector<512x36xbf16>
    %c0_1 = arith.constant 0 : index
    %c0_2 = arith.constant 0 : index
    %1 = vector.load %arg2[%c0_1, %c0_2] : memref<36x16xbf16, #tpu.memory_space<vmem>>, vector<36x16xbf16>
    %cst = arith.constant dense<0.000000e+00> : vector<512x16xf32>
    %2 = tpu.matmul %0, %1, %cst {dimension_numbers = #tpu.dot_dimension_numbers<[1], [0], [0], [1], [0, 0, 1, 1], [], []>} : vector<512x36xbf16>, vector<36x16xbf16>, vector<512x16xf32> -> vector<512x16xf32>
    %c0_3 = arith.constant 0 : index
    %c0_4 = arith.constant 0 : index
    %3 = vector.load %arg3[%c0_3, %c0_4] : memref<1x16xf32, #tpu.memory_space<vmem>>, vector<1x16xf32>
    %4 = vector.broadcast %3 : vector<1x16xf32> to vector<512x16xf32>
    %5 = arith.addf %2, %4 : vector<512x16xf32>
    %c0_5 = arith.constant 0 : index
    %c0_6 = arith.constant 0 : index
    %6 = vector.load %arg4[%c0_5, %c0_6] : memref<512x16xf32, #tpu.memory_space<vmem>>, vector<512x16xf32>
    tpu.vector_store %arg4[%c0_5, %c0_6], %5 {strides = array<i32>} : memref<512x16xf32, #tpu.memory_space<vmem>>, vector<512x16xf32>,
    return
  }
  func.func @transform_0(%arg0: i32) -> (i32, i32) {
    %c0_i32 = arith.constant 0 : i32
    %c0_i32_0 = arith.constant 0 : i32
    return %arg0, %c0_i32 : i32, i32
  }
  func.func @transform_1(%arg0: i32) -> (i32, i32) {
    %c0_i32 = arith.constant 0 : i32
    %c0_i32_0 = arith.constant 0 : i32
    %c0_i32_1 = arith.constant 0 : i32
    return %c0_i32, %c0_i32_0 : i32, i32
  }
  func.func @transform_2(%arg0: i32) -> (i32, i32) {
    %c0_i32 = arith.constant 0 : i32
    %c0_i32_0 = arith.constant 0 : i32
    %c0_i32_1 = arith.constant 0 : i32
    return %c0_i32, %c0_i32_0 : i32, i32
  }
  func.func @transform_3(%arg0: i32) -> (i32, i32) {
    %c0_i32 = arith.constant 0 : i32
    %c0_i32_0 = arith.constant 0 : i32
    return %arg0, %c0_i32 : i32, i32
  }
}

module attributes {stable_mosaic.version = 11 : i64} {
  func.func @_pool_kernel(%arg0: i32, %arg1: memref<9x128x16xf32, #tpu.memory_space<vmem>>, %arg2: memref<128x16xf32, #tpu.memory_space<vmem>>) attributes {dimension_semantics = [#tpu.dimension_semantics<parallel>], iteration_bounds = array<i64: 1>, scalar_prefetch = 0 : i64, scratch_operands = 0 : i64, tpu.core_type = #tpu.core_type<tc>, window_params = [{transform_indices = @transform_0, window_bounds = array<i64: 9, 128, 16>}, {transform_indices = @transform_1, window_bounds = array<i64: 128, 16>}]} {
    %c0 = arith.constant 0 : index
    %c0_0 = arith.constant 0 : index
    %c0_1 = arith.constant 0 : index
    %0 = vector.load %arg1[%c0, %c0_0, %c0_1] : memref<9x128x16xf32, #tpu.memory_space<vmem>>, vector<1x128x16xf32>
    %1 = vector.shape_cast %0 : vector<1x128x16xf32> to vector<128x16xf32>
    %c1 = arith.constant 1 : index
    %c0_2 = arith.constant 0 : index
    %c0_3 = arith.constant 0 : index
    %2 = vector.load %arg1[%c1, %c0_2, %c0_3] : memref<9x128x16xf32, #tpu.memory_space<vmem>>, vector<1x128x16xf32>
    %3 = vector.shape_cast %2 : vector<1x128x16xf32> to vector<128x16xf32>
    %4 = arith.maximumf %1, %3 : vector<128x16xf32>
    %c2 = arith.constant 2 : index
    %c0_4 = arith.constant 0 : index
    %c0_5 = arith.constant 0 : index
    %5 = vector.load %arg1[%c2, %c0_4, %c0_5] : memref<9x128x16xf32, #tpu.memory_space<vmem>>, vector<1x128x16xf32>
    %6 = vector.shape_cast %5 : vector<1x128x16xf32> to vector<128x16xf32>
    %7 = arith.maximumf %4, %6 : vector<128x16xf32>
    %c3 = arith.constant 3 : index
    %c0_6 = arith.constant 0 : index
    %c0_7 = arith.constant 0 : index
    %8 = vector.load %arg1[%c3, %c0_6, %c0_7] : memref<9x128x16xf32, #tpu.memory_space<vmem>>, vector<1x128x16xf32>
    %9 = vector.shape_cast %8 : vector<1x128x16xf32> to vector<128x16xf32>
    %10 = arith.maximumf %7, %9 : vector<128x16xf32>
    %c4 = arith.constant 4 : index
    %c0_8 = arith.constant 0 : index
    %c0_9 = arith.constant 0 : index
    %11 = vector.load %arg1[%c4, %c0_8, %c0_9] : memref<9x128x16xf32, #tpu.memory_space<vmem>>, vector<1x128x16xf32>
    %12 = vector.shape_cast %11 : vector<1x128x16xf32> to vector<128x16xf32>
    %13 = arith.maximumf %10, %12 : vector<128x16xf32>
    %c5 = arith.constant 5 : index
    %c0_10 = arith.constant 0 : index
    %c0_11 = arith.constant 0 : index
    %14 = vector.load %arg1[%c5, %c0_10, %c0_11] : memref<9x128x16xf32, #tpu.memory_space<vmem>>, vector<1x128x16xf32>
    %15 = vector.shape_cast %14 : vector<1x128x16xf32> to vector<128x16xf32>
    %16 = arith.maximumf %13, %15 : vector<128x16xf32>
    %c6 = arith.constant 6 : index
    %c0_12 = arith.constant 0 : index
    %c0_13 = arith.constant 0 : index
    %17 = vector.load %arg1[%c6, %c0_12, %c0_13] : memref<9x128x16xf32, #tpu.memory_space<vmem>>, vector<1x128x16xf32>
    %18 = vector.shape_cast %17 : vector<1x128x16xf32> to vector<128x16xf32>
    %19 = arith.maximumf %16, %18 : vector<128x16xf32>
    %c7 = arith.constant 7 : index
    %c0_14 = arith.constant 0 : index
    %c0_15 = arith.constant 0 : index
    %20 = vector.load %arg1[%c7, %c0_14, %c0_15] : memref<9x128x16xf32, #tpu.memory_space<vmem>>, vector<1x128x16xf32>
    %21 = vector.shape_cast %20 : vector<1x128x16xf32> to vector<128x16xf32>
    %22 = arith.maximumf %19, %21 : vector<128x16xf32>
    %c8 = arith.constant 8 : index
    %c0_16 = arith.constant 0 : index
    %c0_17 = arith.constant 0 : index
    %23 = vector.load %arg1[%c8, %c0_16, %c0_17] : memref<9x128x16xf32, #tpu.memory_space<vmem>>, vector<1x128x16xf32>
    %24 = vector.shape_cast %23 : vector<1x128x16xf32> to vector<128x16xf32>
    %25 = arith.maximumf %22, %24 : vector<128x16xf32>
    %c0_18 = arith.constant 0 : index
    %c0_19 = arith.constant 0 : index
    %26 = vector.load %arg2[%c0_18, %c0_19] : memref<128x16xf32, #tpu.memory_space<vmem>>, vector<128x16xf32>
    tpu.vector_store %arg2[%c0_18, %c0_19], %25 {strides = array<i32>} : memref<128x16xf32, #tpu.memory_space<vmem>>, vector<128x16xf32>,
    return
  }
  func.func @transform_0(%arg0: i32) -> (i32, i32, i32) {
    %c0_i32 = arith.constant 0 : i32
    %c0_i32_0 = arith.constant 0 : i32
    %c0_i32_1 = arith.constant 0 : i32
    return %c0_i32, %arg0, %c0_i32_0 : i32, i32, i32
  }
  func.func @transform_1(%arg0: i32) -> (i32, i32) {
    %c0_i32 = arith.constant 0 : i32
    %c0_i32_0 = arith.constant 0 : i32
    return %arg0, %c0_i32 : i32, i32
  }
}

module attributes {stable_mosaic.version = 11 : i64} {
  func.func @_conv_kernel(%arg0: i32, %arg1: memref<128x144xbf16, #tpu.memory_space<vmem>>, %arg2: memref<144x16xbf16, #tpu.memory_space<vmem>>, %arg3: memref<1x16xf32, #tpu.memory_space<vmem>>, %arg4: memref<128x16xf32, #tpu.memory_space<vmem>>) attributes {dimension_semantics = [#tpu.dimension_semantics<parallel>], iteration_bounds = array<i64: 1>, scalar_prefetch = 0 : i64, scratch_operands = 0 : i64, tpu.core_type = #tpu.core_type<tc>, window_params = [{transform_indices = @transform_0, window_bounds = array<i64: 128, 144>}, {pipeline_mode = #tpu.pipeline_mode<synchronous>, transform_indices = @transform_1, window_bounds = array<i64: 144, 16>}, {pipeline_mode = #tpu.pipeline_mode<synchronous>, transform_indices = @transform_2, window_bounds = array<i64: 1, 16>}, {transform_indices = @transform_3, window_bounds = array<i64: 128, 16>}]} {
    %c0 = arith.constant 0 : index
    %c0_0 = arith.constant 0 : index
    %0 = vector.load %arg1[%c0, %c0_0] : memref<128x144xbf16, #tpu.memory_space<vmem>>, vector<128x144xbf16>
    %c0_1 = arith.constant 0 : index
    %c0_2 = arith.constant 0 : index
    %1 = vector.load %arg2[%c0_1, %c0_2] : memref<144x16xbf16, #tpu.memory_space<vmem>>, vector<144x16xbf16>
    %cst = arith.constant dense<0.000000e+00> : vector<128x16xf32>
    %2 = tpu.matmul %0, %1, %cst {dimension_numbers = #tpu.dot_dimension_numbers<[1], [0], [0], [1], [0, 0, 1, 1], [], []>} : vector<128x144xbf16>, vector<144x16xbf16>, vector<128x16xf32> -> vector<128x16xf32>
    %c0_3 = arith.constant 0 : index
    %c0_4 = arith.constant 0 : index
    %3 = vector.load %arg3[%c0_3, %c0_4] : memref<1x16xf32, #tpu.memory_space<vmem>>, vector<1x16xf32>
    %4 = vector.broadcast %3 : vector<1x16xf32> to vector<128x16xf32>
    %5 = arith.addf %2, %4 : vector<128x16xf32>
    %cst_5 = arith.constant 0.000000e+00 : f32
    %6 = vector.broadcast %cst_5 : f32 to vector<128x16xf32>
    %7 = arith.maximumf %5, %6 : vector<128x16xf32>
    %c0_6 = arith.constant 0 : index
    %c0_7 = arith.constant 0 : index
    %8 = vector.load %arg4[%c0_6, %c0_7] : memref<128x16xf32, #tpu.memory_space<vmem>>, vector<128x16xf32>
    tpu.vector_store %arg4[%c0_6, %c0_7], %7 {strides = array<i32>} : memref<128x16xf32, #tpu.memory_space<vmem>>, vector<128x16xf32>,
    return
  }
  func.func @transform_0(%arg0: i32) -> (i32, i32) {
    %c0_i32 = arith.constant 0 : i32
    %c0_i32_0 = arith.constant 0 : i32
    return %arg0, %c0_i32 : i32, i32
  }
  func.func @transform_1(%arg0: i32) -> (i32, i32) {
    %c0_i32 = arith.constant 0 : i32
    %c0_i32_0 = arith.constant 0 : i32
    %c0_i32_1 = arith.constant 0 : i32
    return %c0_i32, %c0_i32_0 : i32, i32
  }
  func.func @transform_2(%arg0: i32) -> (i32, i32) {
    %c0_i32 = arith.constant 0 : i32
    %c0_i32_0 = arith.constant 0 : i32
    %c0_i32_1 = arith.constant 0 : i32
    return %c0_i32, %c0_i32_0 : i32, i32
  }
  func.func @transform_3(%arg0: i32) -> (i32, i32) {
    %c0_i32 = arith.constant 0 : i32
    %c0_i32_0 = arith.constant 0 : i32
    return %arg0, %c0_i32 : i32, i32
  }
}

module attributes {stable_mosaic.version = 11 : i64} {
  func.func @_conv_kernel(%arg0: i32, %arg1: memref<128x144xbf16, #tpu.memory_space<vmem>>, %arg2: memref<144x16xbf16, #tpu.memory_space<vmem>>, %arg3: memref<1x16xf32, #tpu.memory_space<vmem>>, %arg4: memref<128x16xf32, #tpu.memory_space<vmem>>, %arg5: memref<128x16xf32, #tpu.memory_space<vmem>>) attributes {dimension_semantics = [#tpu.dimension_semantics<parallel>], iteration_bounds = array<i64: 1>, scalar_prefetch = 0 : i64, scratch_operands = 0 : i64, tpu.core_type = #tpu.core_type<tc>, window_params = [{transform_indices = @transform_0, window_bounds = array<i64: 128, 144>}, {pipeline_mode = #tpu.pipeline_mode<synchronous>, transform_indices = @transform_1, window_bounds = array<i64: 144, 16>}, {pipeline_mode = #tpu.pipeline_mode<synchronous>, transform_indices = @transform_2, window_bounds = array<i64: 1, 16>}, {transform_indices = @transform_3, window_bounds = array<i64: 128, 16>}, {transform_indices = @transform_4, window_bounds = array<i64: 128, 16>}]} {
    %c0 = arith.constant 0 : index
    %c0_0 = arith.constant 0 : index
    %0 = vector.load %arg1[%c0, %c0_0] : memref<128x144xbf16, #tpu.memory_space<vmem>>, vector<128x144xbf16>
    %c0_1 = arith.constant 0 : index
    %c0_2 = arith.constant 0 : index
    %1 = vector.load %arg2[%c0_1, %c0_2] : memref<144x16xbf16, #tpu.memory_space<vmem>>, vector<144x16xbf16>
    %cst = arith.constant dense<0.000000e+00> : vector<128x16xf32>
    %2 = tpu.matmul %0, %1, %cst {dimension_numbers = #tpu.dot_dimension_numbers<[1], [0], [0], [1], [0, 0, 1, 1], [], []>} : vector<128x144xbf16>, vector<144x16xbf16>, vector<128x16xf32> -> vector<128x16xf32>
    %c0_3 = arith.constant 0 : index
    %c0_4 = arith.constant 0 : index
    %3 = vector.load %arg3[%c0_3, %c0_4] : memref<1x16xf32, #tpu.memory_space<vmem>>, vector<1x16xf32>
    %4 = vector.broadcast %3 : vector<1x16xf32> to vector<128x16xf32>
    %5 = arith.addf %2, %4 : vector<128x16xf32>
    %c0_5 = arith.constant 0 : index
    %c0_6 = arith.constant 0 : index
    %6 = vector.load %arg4[%c0_5, %c0_6] : memref<128x16xf32, #tpu.memory_space<vmem>>, vector<128x16xf32>
    %7 = arith.addf %5, %6 : vector<128x16xf32>
    %c0_7 = arith.constant 0 : index
    %c0_8 = arith.constant 0 : index
    %8 = vector.load %arg5[%c0_7, %c0_8] : memref<128x16xf32, #tpu.memory_space<vmem>>, vector<128x16xf32>
    tpu.vector_store %arg5[%c0_7, %c0_8], %7 {strides = array<i32>} : memref<128x16xf32, #tpu.memory_space<vmem>>, vector<128x16xf32>,
    return
  }
  func.func @transform_0(%arg0: i32) -> (i32, i32) {
    %c0_i32 = arith.constant 0 : i32
    %c0_i32_0 = arith.constant 0 : i32
    return %arg0, %c0_i32 : i32, i32
  }
  func.func @transform_1(%arg0: i32) -> (i32, i32) {
    %c0_i32 = arith.constant 0 : i32
    %c0_i32_0 = arith.constant 0 : i32
    %c0_i32_1 = arith.constant 0 : i32
    return %c0_i32, %c0_i32_0 : i32, i32
  }
  func.func @transform_2(%arg0: i32) -> (i32, i32) {
    %c0_i32 = arith.constant 0 : i32
    %c0_i32_0 = arith.constant 0 : i32
    %c0_i32_1 = arith.constant 0 : i32
    return %c0_i32, %c0_i32_0 : i32, i32
  }
  func.func @transform_3(%arg0: i32) -> (i32, i32) {
    %c0_i32 = arith.constant 0 : i32
    %c0_i32_0 = arith.constant 0 : i32
    return %arg0, %c0_i32 : i32, i32
  }
  func.func @transform_4(%arg0: i32) -> (i32, i32) {
    %c0_i32 = arith.constant 0 : i32
    %c0_i32_0 = arith.constant 0 : i32
    return %arg0, %c0_i32 : i32, i32
  }
}

module attributes {stable_mosaic.version = 11 : i64} {
  func.func @_conv_kernel(%arg0: i32, %arg1: memref<128x144xbf16, #tpu.memory_space<vmem>>, %arg2: memref<144x32xbf16, #tpu.memory_space<vmem>>, %arg3: memref<1x32xf32, #tpu.memory_space<vmem>>, %arg4: memref<128x32xf32, #tpu.memory_space<vmem>>) attributes {dimension_semantics = [#tpu.dimension_semantics<parallel>], iteration_bounds = array<i64: 1>, scalar_prefetch = 0 : i64, scratch_operands = 0 : i64, tpu.core_type = #tpu.core_type<tc>, window_params = [{transform_indices = @transform_0, window_bounds = array<i64: 128, 144>}, {pipeline_mode = #tpu.pipeline_mode<synchronous>, transform_indices = @transform_1, window_bounds = array<i64: 144, 32>}, {pipeline_mode = #tpu.pipeline_mode<synchronous>, transform_indices = @transform_2, window_bounds = array<i64: 1, 32>}, {transform_indices = @transform_3, window_bounds = array<i64: 128, 32>}]} {
    %c0 = arith.constant 0 : index
    %c0_0 = arith.constant 0 : index
    %0 = vector.load %arg1[%c0, %c0_0] : memref<128x144xbf16, #tpu.memory_space<vmem>>, vector<128x144xbf16>
    %c0_1 = arith.constant 0 : index
    %c0_2 = arith.constant 0 : index
    %1 = vector.load %arg2[%c0_1, %c0_2] : memref<144x32xbf16, #tpu.memory_space<vmem>>, vector<144x32xbf16>
    %cst = arith.constant dense<0.000000e+00> : vector<128x32xf32>
    %2 = tpu.matmul %0, %1, %cst {dimension_numbers = #tpu.dot_dimension_numbers<[1], [0], [0], [1], [0, 0, 1, 1], [], []>} : vector<128x144xbf16>, vector<144x32xbf16>, vector<128x32xf32> -> vector<128x32xf32>
    %c0_3 = arith.constant 0 : index
    %c0_4 = arith.constant 0 : index
    %3 = vector.load %arg3[%c0_3, %c0_4] : memref<1x32xf32, #tpu.memory_space<vmem>>, vector<1x32xf32>
    %4 = vector.broadcast %3 : vector<1x32xf32> to vector<128x32xf32>
    %5 = arith.addf %2, %4 : vector<128x32xf32>
    %c0_5 = arith.constant 0 : index
    %c0_6 = arith.constant 0 : index
    %6 = vector.load %arg4[%c0_5, %c0_6] : memref<128x32xf32, #tpu.memory_space<vmem>>, vector<128x32xf32>
    tpu.vector_store %arg4[%c0_5, %c0_6], %5 {strides = array<i32>} : memref<128x32xf32, #tpu.memory_space<vmem>>, vector<128x32xf32>,
    return
  }
  func.func @transform_0(%arg0: i32) -> (i32, i32) {
    %c0_i32 = arith.constant 0 : i32
    %c0_i32_0 = arith.constant 0 : i32
    return %arg0, %c0_i32 : i32, i32
  }
  func.func @transform_1(%arg0: i32) -> (i32, i32) {
    %c0_i32 = arith.constant 0 : i32
    %c0_i32_0 = arith.constant 0 : i32
    %c0_i32_1 = arith.constant 0 : i32
    return %c0_i32, %c0_i32_0 : i32, i32
  }
  func.func @transform_2(%arg0: i32) -> (i32, i32) {
    %c0_i32 = arith.constant 0 : i32
    %c0_i32_0 = arith.constant 0 : i32
    %c0_i32_1 = arith.constant 0 : i32
    return %c0_i32, %c0_i32_0 : i32, i32
  }
  func.func @transform_3(%arg0: i32) -> (i32, i32) {
    %c0_i32 = arith.constant 0 : i32
    %c0_i32_0 = arith.constant 0 : i32
    return %arg0, %c0_i32 : i32, i32
  }
}

module attributes {stable_mosaic.version = 11 : i64} {
  func.func @_pool_kernel(%arg0: i32, %arg1: memref<9x32x32xf32, #tpu.memory_space<vmem>>, %arg2: memref<32x32xf32, #tpu.memory_space<vmem>>) attributes {dimension_semantics = [#tpu.dimension_semantics<parallel>], iteration_bounds = array<i64: 1>, scalar_prefetch = 0 : i64, scratch_operands = 0 : i64, tpu.core_type = #tpu.core_type<tc>, window_params = [{transform_indices = @transform_0, window_bounds = array<i64: 9, 32, 32>}, {transform_indices = @transform_1, window_bounds = array<i64: 32, 32>}]} {
    %c0 = arith.constant 0 : index
    %c0_0 = arith.constant 0 : index
    %c0_1 = arith.constant 0 : index
    %0 = vector.load %arg1[%c0, %c0_0, %c0_1] : memref<9x32x32xf32, #tpu.memory_space<vmem>>, vector<1x32x32xf32>
    %1 = vector.shape_cast %0 : vector<1x32x32xf32> to vector<32x32xf32>
    %c1 = arith.constant 1 : index
    %c0_2 = arith.constant 0 : index
    %c0_3 = arith.constant 0 : index
    %2 = vector.load %arg1[%c1, %c0_2, %c0_3] : memref<9x32x32xf32, #tpu.memory_space<vmem>>, vector<1x32x32xf32>
    %3 = vector.shape_cast %2 : vector<1x32x32xf32> to vector<32x32xf32>
    %4 = arith.maximumf %1, %3 : vector<32x32xf32>
    %c2 = arith.constant 2 : index
    %c0_4 = arith.constant 0 : index
    %c0_5 = arith.constant 0 : index
    %5 = vector.load %arg1[%c2, %c0_4, %c0_5] : memref<9x32x32xf32, #tpu.memory_space<vmem>>, vector<1x32x32xf32>
    %6 = vector.shape_cast %5 : vector<1x32x32xf32> to vector<32x32xf32>
    %7 = arith.maximumf %4, %6 : vector<32x32xf32>
    %c3 = arith.constant 3 : index
    %c0_6 = arith.constant 0 : index
    %c0_7 = arith.constant 0 : index
    %8 = vector.load %arg1[%c3, %c0_6, %c0_7] : memref<9x32x32xf32, #tpu.memory_space<vmem>>, vector<1x32x32xf32>
    %9 = vector.shape_cast %8 : vector<1x32x32xf32> to vector<32x32xf32>
    %10 = arith.maximumf %7, %9 : vector<32x32xf32>
    %c4 = arith.constant 4 : index
    %c0_8 = arith.constant 0 : index
    %c0_9 = arith.constant 0 : index
    %11 = vector.load %arg1[%c4, %c0_8, %c0_9] : memref<9x32x32xf32, #tpu.memory_space<vmem>>, vector<1x32x32xf32>
    %12 = vector.shape_cast %11 : vector<1x32x32xf32> to vector<32x32xf32>
    %13 = arith.maximumf %10, %12 : vector<32x32xf32>
    %c5 = arith.constant 5 : index
    %c0_10 = arith.constant 0 : index
    %c0_11 = arith.constant 0 : index
    %14 = vector.load %arg1[%c5, %c0_10, %c0_11] : memref<9x32x32xf32, #tpu.memory_space<vmem>>, vector<1x32x32xf32>
    %15 = vector.shape_cast %14 : vector<1x32x32xf32> to vector<32x32xf32>
    %16 = arith.maximumf %13, %15 : vector<32x32xf32>
    %c6 = arith.constant 6 : index
    %c0_12 = arith.constant 0 : index
    %c0_13 = arith.constant 0 : index
    %17 = vector.load %arg1[%c6, %c0_12, %c0_13] : memref<9x32x32xf32, #tpu.memory_space<vmem>>, vector<1x32x32xf32>
    %18 = vector.shape_cast %17 : vector<1x32x32xf32> to vector<32x32xf32>
    %19 = arith.maximumf %16, %18 : vector<32x32xf32>
    %c7 = arith.constant 7 : index
    %c0_14 = arith.constant 0 : index
    %c0_15 = arith.constant 0 : index
    %20 = vector.load %arg1[%c7, %c0_14, %c0_15] : memref<9x32x32xf32, #tpu.memory_space<vmem>>, vector<1x32x32xf32>
    %21 = vector.shape_cast %20 : vector<1x32x32xf32> to vector<32x32xf32>
    %22 = arith.maximumf %19, %21 : vector<32x32xf32>
    %c8 = arith.constant 8 : index
    %c0_16 = arith.constant 0 : index
    %c0_17 = arith.constant 0 : index
    %23 = vector.load %arg1[%c8, %c0_16, %c0_17] : memref<9x32x32xf32, #tpu.memory_space<vmem>>, vector<1x32x32xf32>
    %24 = vector.shape_cast %23 : vector<1x32x32xf32> to vector<32x32xf32>
    %25 = arith.maximumf %22, %24 : vector<32x32xf32>
    %c0_18 = arith.constant 0 : index
    %c0_19 = arith.constant 0 : index
    %26 = vector.load %arg2[%c0_18, %c0_19] : memref<32x32xf32, #tpu.memory_space<vmem>>, vector<32x32xf32>
    tpu.vector_store %arg2[%c0_18, %c0_19], %25 {strides = array<i32>} : memref<32x32xf32, #tpu.memory_space<vmem>>, vector<32x32xf32>,
    return
  }
  func.func @transform_0(%arg0: i32) -> (i32, i32, i32) {
    %c0_i32 = arith.constant 0 : i32
    %c0_i32_0 = arith.constant 0 : i32
    %c0_i32_1 = arith.constant 0 : i32
    return %c0_i32, %arg0, %c0_i32_0 : i32, i32, i32
  }
  func.func @transform_1(%arg0: i32) -> (i32, i32) {
    %c0_i32 = arith.constant 0 : i32
    %c0_i32_0 = arith.constant 0 : i32
    return %arg0, %c0_i32 : i32, i32
  }
}

module attributes {stable_mosaic.version = 11 : i64} {
  func.func @_conv_kernel(%arg0: i32, %arg1: memref<32x288xbf16, #tpu.memory_space<vmem>>, %arg2: memref<288x32xbf16, #tpu.memory_space<vmem>>, %arg3: memref<1x32xf32, #tpu.memory_space<vmem>>, %arg4: memref<32x32xf32, #tpu.memory_space<vmem>>) attributes {dimension_semantics = [#tpu.dimension_semantics<parallel>], iteration_bounds = array<i64: 1>, scalar_prefetch = 0 : i64, scratch_operands = 0 : i64, tpu.core_type = #tpu.core_type<tc>, window_params = [{transform_indices = @transform_0, window_bounds = array<i64: 32, 288>}, {pipeline_mode = #tpu.pipeline_mode<synchronous>, transform_indices = @transform_1, window_bounds = array<i64: 288, 32>}, {pipeline_mode = #tpu.pipeline_mode<synchronous>, transform_indices = @transform_2, window_bounds = array<i64: 1, 32>}, {transform_indices = @transform_3, window_bounds = array<i64: 32, 32>}]} {
    %c0 = arith.constant 0 : index
    %c0_0 = arith.constant 0 : index
    %0 = vector.load %arg1[%c0, %c0_0] : memref<32x288xbf16, #tpu.memory_space<vmem>>, vector<32x288xbf16>
    %c0_1 = arith.constant 0 : index
    %c0_2 = arith.constant 0 : index
    %1 = vector.load %arg2[%c0_1, %c0_2] : memref<288x32xbf16, #tpu.memory_space<vmem>>, vector<288x32xbf16>
    %cst = arith.constant dense<0.000000e+00> : vector<32x32xf32>
    %2 = tpu.matmul %0, %1, %cst {dimension_numbers = #tpu.dot_dimension_numbers<[1], [0], [0], [1], [0, 0, 1, 1], [], []>} : vector<32x288xbf16>, vector<288x32xbf16>, vector<32x32xf32> -> vector<32x32xf32>
    %c0_3 = arith.constant 0 : index
    %c0_4 = arith.constant 0 : index
    %3 = vector.load %arg3[%c0_3, %c0_4] : memref<1x32xf32, #tpu.memory_space<vmem>>, vector<1x32xf32>
    %4 = vector.broadcast %3 : vector<1x32xf32> to vector<32x32xf32>
    %5 = arith.addf %2, %4 : vector<32x32xf32>
    %cst_5 = arith.constant 0.000000e+00 : f32
    %6 = vector.broadcast %cst_5 : f32 to vector<32x32xf32>
    %7 = arith.maximumf %5, %6 : vector<32x32xf32>
    %c0_6 = arith.constant 0 : index
    %c0_7 = arith.constant 0 : index
    %8 = vector.load %arg4[%c0_6, %c0_7] : memref<32x32xf32, #tpu.memory_space<vmem>>, vector<32x32xf32>
    tpu.vector_store %arg4[%c0_6, %c0_7], %7 {strides = array<i32>} : memref<32x32xf32, #tpu.memory_space<vmem>>, vector<32x32xf32>,
    return
  }
  func.func @transform_0(%arg0: i32) -> (i32, i32) {
    %c0_i32 = arith.constant 0 : i32
    %c0_i32_0 = arith.constant 0 : i32
    return %arg0, %c0_i32 : i32, i32
  }
  func.func @transform_1(%arg0: i32) -> (i32, i32) {
    %c0_i32 = arith.constant 0 : i32
    %c0_i32_0 = arith.constant 0 : i32
    %c0_i32_1 = arith.constant 0 : i32
    return %c0_i32, %c0_i32_0 : i32, i32
  }
  func.func @transform_2(%arg0: i32) -> (i32, i32) {
    %c0_i32 = arith.constant 0 : i32
    %c0_i32_0 = arith.constant 0 : i32
    %c0_i32_1 = arith.constant 0 : i32
    return %c0_i32, %c0_i32_0 : i32, i32
  }
  func.func @transform_3(%arg0: i32) -> (i32, i32) {
    %c0_i32 = arith.constant 0 : i32
    %c0_i32_0 = arith.constant 0 : i32
    return %arg0, %c0_i32 : i32, i32
  }
}

module attributes {stable_mosaic.version = 11 : i64} {
  func.func @_conv_kernel(%arg0: i32, %arg1: memref<32x288xbf16, #tpu.memory_space<vmem>>, %arg2: memref<288x32xbf16, #tpu.memory_space<vmem>>, %arg3: memref<1x32xf32, #tpu.memory_space<vmem>>, %arg4: memref<32x32xf32, #tpu.memory_space<vmem>>) attributes {dimension_semantics = [#tpu.dimension_semantics<parallel>], iteration_bounds = array<i64: 1>, scalar_prefetch = 0 : i64, scratch_operands = 0 : i64, tpu.core_type = #tpu.core_type<tc>, window_params = [{transform_indices = @transform_0, window_bounds = array<i64: 32, 288>}, {pipeline_mode = #tpu.pipeline_mode<synchronous>, transform_indices = @transform_1, window_bounds = array<i64: 288, 32>}, {pipeline_mode = #tpu.pipeline_mode<synchronous>, transform_indices = @transform_2, window_bounds = array<i64: 1, 32>}, {transform_indices = @transform_3, window_bounds = array<i64: 32, 32>}]} {
    %c0 = arith.constant 0 : index
    %c0_0 = arith.constant 0 : index
    %0 = vector.load %arg1[%c0, %c0_0] : memref<32x288xbf16, #tpu.memory_space<vmem>>, vector<32x288xbf16>
    %c0_1 = arith.constant 0 : index
    %c0_2 = arith.constant 0 : index
    %1 = vector.load %arg2[%c0_1, %c0_2] : memref<288x32xbf16, #tpu.memory_space<vmem>>, vector<288x32xbf16>
    %cst = arith.constant dense<0.000000e+00> : vector<32x32xf32>
    %2 = tpu.matmul %0, %1, %cst {dimension_numbers = #tpu.dot_dimension_numbers<[1], [0], [0], [1], [0, 0, 1, 1], [], []>} : vector<32x288xbf16>, vector<288x32xbf16>, vector<32x32xf32> -> vector<32x32xf32>
    %c0_3 = arith.constant 0 : index
    %c0_4 = arith.constant 0 : index
    %3 = vector.load %arg3[%c0_3, %c0_4] : memref<1x32xf32, #tpu.memory_space<vmem>>, vector<1x32xf32>
    %4 = vector.broadcast %3 : vector<1x32xf32> to vector<32x32xf32>
    %5 = arith.addf %2, %4 : vector<32x32xf32>
    %c0_5 = arith.constant 0 : index
    %c0_6 = arith.constant 0 : index
    %6 = vector.load %arg4[%c0_5, %c0_6] : memref<32x32xf32, #tpu.memory_space<vmem>>, vector<32x32xf32>
    tpu.vector_store %arg4[%c0_5, %c0_6], %5 {strides = array<i32>} : memref<32x32xf32, #tpu.memory_space<vmem>>, vector<32x32xf32>,
    return
  }
  func.func @transform_0(%arg0: i32) -> (i32, i32) {
    %c0_i32 = arith.constant 0 : i32
    %c0_i32_0 = arith.constant 0 : i32
    return %arg0, %c0_i32 : i32, i32
  }
  func.func @transform_1(%arg0: i32) -> (i32, i32) {
    %c0_i32 = arith.constant 0 : i32
    %c0_i32_0 = arith.constant 0 : i32
    %c0_i32_1 = arith.constant 0 : i32
    return %c0_i32, %c0_i32_0 : i32, i32
  }
  func.func @transform_2(%arg0: i32) -> (i32, i32) {
    %c0_i32 = arith.constant 0 : i32
    %c0_i32_0 = arith.constant 0 : i32
    %c0_i32_1 = arith.constant 0 : i32
    return %c0_i32, %c0_i32_0 : i32, i32
  }
  func.func @transform_3(%arg0: i32) -> (i32, i32) {
    %c0_i32 = arith.constant 0 : i32
    %c0_i32_0 = arith.constant 0 : i32
    return %arg0, %c0_i32 : i32, i32
  }
}

module attributes {stable_mosaic.version = 11 : i64} {
  func.func @_conv_kernel(%arg0: i32, %arg1: memref<32x288xbf16, #tpu.memory_space<vmem>>, %arg2: memref<288x32xbf16, #tpu.memory_space<vmem>>, %arg3: memref<1x32xf32, #tpu.memory_space<vmem>>, %arg4: memref<32x32xf32, #tpu.memory_space<vmem>>, %arg5: memref<32x32xf32, #tpu.memory_space<vmem>>) attributes {dimension_semantics = [#tpu.dimension_semantics<parallel>], iteration_bounds = array<i64: 1>, scalar_prefetch = 0 : i64, scratch_operands = 0 : i64, tpu.core_type = #tpu.core_type<tc>, window_params = [{transform_indices = @transform_0, window_bounds = array<i64: 32, 288>}, {pipeline_mode = #tpu.pipeline_mode<synchronous>, transform_indices = @transform_1, window_bounds = array<i64: 288, 32>}, {pipeline_mode = #tpu.pipeline_mode<synchronous>, transform_indices = @transform_2, window_bounds = array<i64: 1, 32>}, {transform_indices = @transform_3, window_bounds = array<i64: 32, 32>}, {transform_indices = @transform_4, window_bounds = array<i64: 32, 32>}]} {
    %c0 = arith.constant 0 : index
    %c0_0 = arith.constant 0 : index
    %0 = vector.load %arg1[%c0, %c0_0] : memref<32x288xbf16, #tpu.memory_space<vmem>>, vector<32x288xbf16>
    %c0_1 = arith.constant 0 : index
    %c0_2 = arith.constant 0 : index
    %1 = vector.load %arg2[%c0_1, %c0_2] : memref<288x32xbf16, #tpu.memory_space<vmem>>, vector<288x32xbf16>
    %cst = arith.constant dense<0.000000e+00> : vector<32x32xf32>
    %2 = tpu.matmul %0, %1, %cst {dimension_numbers = #tpu.dot_dimension_numbers<[1], [0], [0], [1], [0, 0, 1, 1], [], []>} : vector<32x288xbf16>, vector<288x32xbf16>, vector<32x32xf32> -> vector<32x32xf32>
    %c0_3 = arith.constant 0 : index
    %c0_4 = arith.constant 0 : index
    %3 = vector.load %arg3[%c0_3, %c0_4] : memref<1x32xf32, #tpu.memory_space<vmem>>, vector<1x32xf32>
    %4 = vector.broadcast %3 : vector<1x32xf32> to vector<32x32xf32>
    %5 = arith.addf %2, %4 : vector<32x32xf32>
    %c0_5 = arith.constant 0 : index
    %c0_6 = arith.constant 0 : index
    %6 = vector.load %arg4[%c0_5, %c0_6] : memref<32x32xf32, #tpu.memory_space<vmem>>, vector<32x32xf32>
    %7 = arith.addf %5, %6 : vector<32x32xf32>
    %c0_7 = arith.constant 0 : index
    %c0_8 = arith.constant 0 : index
    %8 = vector.load %arg5[%c0_7, %c0_8] : memref<32x32xf32, #tpu.memory_space<vmem>>, vector<32x32xf32>
    tpu.vector_store %arg5[%c0_7, %c0_8], %7 {strides = array<i32>} : memref<32x32xf32, #tpu.memory_space<vmem>>, vector<32x32xf32>,
    return
  }
  func.func @transform_0(%arg0: i32) -> (i32, i32) {
    %c0_i32 = arith.constant 0 : i32
    %c0_i32_0 = arith.constant 0 : i32
    return %arg0, %c0_i32 : i32, i32
  }
  func.func @transform_1(%arg0: i32) -> (i32, i32) {
    %c0_i32 = arith.constant 0 : i32
    %c0_i32_0 = arith.constant 0 : i32
    %c0_i32_1 = arith.constant 0 : i32
    return %c0_i32, %c0_i32_0 : i32, i32
  }
  func.func @transform_2(%arg0: i32) -> (i32, i32) {
    %c0_i32 = arith.constant 0 : i32
    %c0_i32_0 = arith.constant 0 : i32
    %c0_i32_1 = arith.constant 0 : i32
    return %c0_i32, %c0_i32_0 : i32, i32
  }
  func.func @transform_3(%arg0: i32) -> (i32, i32) {
    %c0_i32 = arith.constant 0 : i32
    %c0_i32_0 = arith.constant 0 : i32
    return %arg0, %c0_i32 : i32, i32
  }
  func.func @transform_4(%arg0: i32) -> (i32, i32) {
    %c0_i32 = arith.constant 0 : i32
    %c0_i32_0 = arith.constant 0 : i32
    return %arg0, %c0_i32 : i32, i32
  }
}

module attributes {stable_mosaic.version = 11 : i64} {
  func.func @_pool_kernel(%arg0: i32, %arg1: memref<9x8x32xf32, #tpu.memory_space<vmem>>, %arg2: memref<8x32xf32, #tpu.memory_space<vmem>>) attributes {dimension_semantics = [#tpu.dimension_semantics<parallel>], iteration_bounds = array<i64: 1>, scalar_prefetch = 0 : i64, scratch_operands = 0 : i64, tpu.core_type = #tpu.core_type<tc>, window_params = [{transform_indices = @transform_0, window_bounds = array<i64: 9, 8, 32>}, {transform_indices = @transform_1, window_bounds = array<i64: 8, 32>}]} {
    %c0 = arith.constant 0 : index
    %c0_0 = arith.constant 0 : index
    %c0_1 = arith.constant 0 : index
    %0 = vector.load %arg1[%c0, %c0_0, %c0_1] : memref<9x8x32xf32, #tpu.memory_space<vmem>>, vector<1x8x32xf32>
    %1 = vector.shape_cast %0 : vector<1x8x32xf32> to vector<8x32xf32>
    %c1 = arith.constant 1 : index
    %c0_2 = arith.constant 0 : index
    %c0_3 = arith.constant 0 : index
    %2 = vector.load %arg1[%c1, %c0_2, %c0_3] : memref<9x8x32xf32, #tpu.memory_space<vmem>>, vector<1x8x32xf32>
    %3 = vector.shape_cast %2 : vector<1x8x32xf32> to vector<8x32xf32>
    %4 = arith.maximumf %1, %3 : vector<8x32xf32>
    %c2 = arith.constant 2 : index
    %c0_4 = arith.constant 0 : index
    %c0_5 = arith.constant 0 : index
    %5 = vector.load %arg1[%c2, %c0_4, %c0_5] : memref<9x8x32xf32, #tpu.memory_space<vmem>>, vector<1x8x32xf32>
    %6 = vector.shape_cast %5 : vector<1x8x32xf32> to vector<8x32xf32>
    %7 = arith.maximumf %4, %6 : vector<8x32xf32>
    %c3 = arith.constant 3 : index
    %c0_6 = arith.constant 0 : index
    %c0_7 = arith.constant 0 : index
    %8 = vector.load %arg1[%c3, %c0_6, %c0_7] : memref<9x8x32xf32, #tpu.memory_space<vmem>>, vector<1x8x32xf32>
    %9 = vector.shape_cast %8 : vector<1x8x32xf32> to vector<8x32xf32>
    %10 = arith.maximumf %7, %9 : vector<8x32xf32>
    %c4 = arith.constant 4 : index
    %c0_8 = arith.constant 0 : index
    %c0_9 = arith.constant 0 : index
    %11 = vector.load %arg1[%c4, %c0_8, %c0_9] : memref<9x8x32xf32, #tpu.memory_space<vmem>>, vector<1x8x32xf32>
    %12 = vector.shape_cast %11 : vector<1x8x32xf32> to vector<8x32xf32>
    %13 = arith.maximumf %10, %12 : vector<8x32xf32>
    %c5 = arith.constant 5 : index
    %c0_10 = arith.constant 0 : index
    %c0_11 = arith.constant 0 : index
    %14 = vector.load %arg1[%c5, %c0_10, %c0_11] : memref<9x8x32xf32, #tpu.memory_space<vmem>>, vector<1x8x32xf32>
    %15 = vector.shape_cast %14 : vector<1x8x32xf32> to vector<8x32xf32>
    %16 = arith.maximumf %13, %15 : vector<8x32xf32>
    %c6 = arith.constant 6 : index
    %c0_12 = arith.constant 0 : index
    %c0_13 = arith.constant 0 : index
    %17 = vector.load %arg1[%c6, %c0_12, %c0_13] : memref<9x8x32xf32, #tpu.memory_space<vmem>>, vector<1x8x32xf32>
    %18 = vector.shape_cast %17 : vector<1x8x32xf32> to vector<8x32xf32>
    %19 = arith.maximumf %16, %18 : vector<8x32xf32>
    %c7 = arith.constant 7 : index
    %c0_14 = arith.constant 0 : index
    %c0_15 = arith.constant 0 : index
    %20 = vector.load %arg1[%c7, %c0_14, %c0_15] : memref<9x8x32xf32, #tpu.memory_space<vmem>>, vector<1x8x32xf32>
    %21 = vector.shape_cast %20 : vector<1x8x32xf32> to vector<8x32xf32>
    %22 = arith.maximumf %19, %21 : vector<8x32xf32>
    %c8 = arith.constant 8 : index
    %c0_16 = arith.constant 0 : index
    %c0_17 = arith.constant 0 : index
    %23 = vector.load %arg1[%c8, %c0_16, %c0_17] : memref<9x8x32xf32, #tpu.memory_space<vmem>>, vector<1x8x32xf32>
    %24 = vector.shape_cast %23 : vector<1x8x32xf32> to vector<8x32xf32>
    %25 = arith.maximumf %22, %24 : vector<8x32xf32>
    %c0_18 = arith.constant 0 : index
    %c0_19 = arith.constant 0 : index
    %26 = vector.load %arg2[%c0_18, %c0_19] : memref<8x32xf32, #tpu.memory_space<vmem>>, vector<8x32xf32>
    tpu.vector_store %arg2[%c0_18, %c0_19], %25 {strides = array<i32>} : memref<8x32xf32, #tpu.memory_space<vmem>>, vector<8x32xf32>,
    return
  }
  func.func @transform_0(%arg0: i32) -> (i32, i32, i32) {
    %c0_i32 = arith.constant 0 : i32
    %c0_i32_0 = arith.constant 0 : i32
    %c0_i32_1 = arith.constant 0 : i32
    return %c0_i32, %arg0, %c0_i32_0 : i32, i32, i32
  }
  func.func @transform_1(%arg0: i32) -> (i32, i32) {
    %c0_i32 = arith.constant 0 : i32
    %c0_i32_0 = arith.constant 0 : i32
    return %arg0, %c0_i32 : i32, i32
  }
}

module attributes {stable_mosaic.version = 11 : i64} {
  func.func @_conv_kernel(%arg0: i32, %arg1: memref<8x288xbf16, #tpu.memory_space<vmem>>, %arg2: memref<288x32xbf16, #tpu.memory_space<vmem>>, %arg3: memref<1x32xf32, #tpu.memory_space<vmem>>, %arg4: memref<8x32xf32, #tpu.memory_space<vmem>>) attributes {dimension_semantics = [#tpu.dimension_semantics<parallel>], iteration_bounds = array<i64: 1>, scalar_prefetch = 0 : i64, scratch_operands = 0 : i64, tpu.core_type = #tpu.core_type<tc>, window_params = [{transform_indices = @transform_0, window_bounds = array<i64: 8, 288>}, {pipeline_mode = #tpu.pipeline_mode<synchronous>, transform_indices = @transform_1, window_bounds = array<i64: 288, 32>}, {pipeline_mode = #tpu.pipeline_mode<synchronous>, transform_indices = @transform_2, window_bounds = array<i64: 1, 32>}, {transform_indices = @transform_3, window_bounds = array<i64: 8, 32>}]} {
    %c0 = arith.constant 0 : index
    %c0_0 = arith.constant 0 : index
    %0 = vector.load %arg1[%c0, %c0_0] : memref<8x288xbf16, #tpu.memory_space<vmem>>, vector<8x288xbf16>
    %c0_1 = arith.constant 0 : index
    %c0_2 = arith.constant 0 : index
    %1 = vector.load %arg2[%c0_1, %c0_2] : memref<288x32xbf16, #tpu.memory_space<vmem>>, vector<288x32xbf16>
    %cst = arith.constant dense<0.000000e+00> : vector<8x32xf32>
    %2 = tpu.matmul %0, %1, %cst {dimension_numbers = #tpu.dot_dimension_numbers<[1], [0], [0], [1], [0, 0, 1, 1], [], []>} : vector<8x288xbf16>, vector<288x32xbf16>, vector<8x32xf32> -> vector<8x32xf32>
    %c0_3 = arith.constant 0 : index
    %c0_4 = arith.constant 0 : index
    %3 = vector.load %arg3[%c0_3, %c0_4] : memref<1x32xf32, #tpu.memory_space<vmem>>, vector<1x32xf32>
    %4 = vector.broadcast %3 : vector<1x32xf32> to vector<8x32xf32>
    %5 = arith.addf %2, %4 : vector<8x32xf32>
    %cst_5 = arith.constant 0.000000e+00 : f32
    %6 = vector.broadcast %cst_5 : f32 to vector<8x32xf32>
    %7 = arith.maximumf %5, %6 : vector<8x32xf32>
    %c0_6 = arith.constant 0 : index
    %c0_7 = arith.constant 0 : index
    %8 = vector.load %arg4[%c0_6, %c0_7] : memref<8x32xf32, #tpu.memory_space<vmem>>, vector<8x32xf32>
    tpu.vector_store %arg4[%c0_6, %c0_7], %7 {strides = array<i32>} : memref<8x32xf32, #tpu.memory_space<vmem>>, vector<8x32xf32>,
    return
  }
  func.func @transform_0(%arg0: i32) -> (i32, i32) {
    %c0_i32 = arith.constant 0 : i32
    %c0_i32_0 = arith.constant 0 : i32
    return %arg0, %c0_i32 : i32, i32
  }
  func.func @transform_1(%arg0: i32) -> (i32, i32) {
    %c0_i32 = arith.constant 0 : i32
    %c0_i32_0 = arith.constant 0 : i32
    %c0_i32_1 = arith.constant 0 : i32
    return %c0_i32, %c0_i32_0 : i32, i32
  }
  func.func @transform_2(%arg0: i32) -> (i32, i32) {
    %c0_i32 = arith.constant 0 : i32
    %c0_i32_0 = arith.constant 0 : i32
    %c0_i32_1 = arith.constant 0 : i32
    return %c0_i32, %c0_i32_0 : i32, i32
  }
  func.func @transform_3(%arg0: i32) -> (i32, i32) {
    %c0_i32 = arith.constant 0 : i32
    %c0_i32_0 = arith.constant 0 : i32
    return %arg0, %c0_i32 : i32, i32
  }
}

module attributes {stable_mosaic.version = 11 : i64} {
  func.func @_conv_kernel(%arg0: i32, %arg1: memref<8x288xbf16, #tpu.memory_space<vmem>>, %arg2: memref<288x32xbf16, #tpu.memory_space<vmem>>, %arg3: memref<1x32xf32, #tpu.memory_space<vmem>>, %arg4: memref<8x32xf32, #tpu.memory_space<vmem>>, %arg5: memref<8x32xf32, #tpu.memory_space<vmem>>) attributes {dimension_semantics = [#tpu.dimension_semantics<parallel>], iteration_bounds = array<i64: 1>, scalar_prefetch = 0 : i64, scratch_operands = 0 : i64, tpu.core_type = #tpu.core_type<tc>, window_params = [{transform_indices = @transform_0, window_bounds = array<i64: 8, 288>}, {pipeline_mode = #tpu.pipeline_mode<synchronous>, transform_indices = @transform_1, window_bounds = array<i64: 288, 32>}, {pipeline_mode = #tpu.pipeline_mode<synchronous>, transform_indices = @transform_2, window_bounds = array<i64: 1, 32>}, {transform_indices = @transform_3, window_bounds = array<i64: 8, 32>}, {transform_indices = @transform_4, window_bounds = array<i64: 8, 32>}]} {
    %c0 = arith.constant 0 : index
    %c0_0 = arith.constant 0 : index
    %0 = vector.load %arg1[%c0, %c0_0] : memref<8x288xbf16, #tpu.memory_space<vmem>>, vector<8x288xbf16>
    %c0_1 = arith.constant 0 : index
    %c0_2 = arith.constant 0 : index
    %1 = vector.load %arg2[%c0_1, %c0_2] : memref<288x32xbf16, #tpu.memory_space<vmem>>, vector<288x32xbf16>
    %cst = arith.constant dense<0.000000e+00> : vector<8x32xf32>
    %2 = tpu.matmul %0, %1, %cst {dimension_numbers = #tpu.dot_dimension_numbers<[1], [0], [0], [1], [0, 0, 1, 1], [], []>} : vector<8x288xbf16>, vector<288x32xbf16>, vector<8x32xf32> -> vector<8x32xf32>
    %c0_3 = arith.constant 0 : index
    %c0_4 = arith.constant 0 : index
    %3 = vector.load %arg3[%c0_3, %c0_4] : memref<1x32xf32, #tpu.memory_space<vmem>>, vector<1x32xf32>
    %4 = vector.broadcast %3 : vector<1x32xf32> to vector<8x32xf32>
    %5 = arith.addf %2, %4 : vector<8x32xf32>
    %c0_5 = arith.constant 0 : index
    %c0_6 = arith.constant 0 : index
    %6 = vector.load %arg4[%c0_5, %c0_6] : memref<8x32xf32, #tpu.memory_space<vmem>>, vector<8x32xf32>
    %7 = arith.addf %5, %6 : vector<8x32xf32>
    %c0_7 = arith.constant 0 : index
    %c0_8 = arith.constant 0 : index
    %8 = vector.load %arg5[%c0_7, %c0_8] : memref<8x32xf32, #tpu.memory_space<vmem>>, vector<8x32xf32>
    tpu.vector_store %arg5[%c0_7, %c0_8], %7 {strides = array<i32>} : memref<8x32xf32, #tpu.memory_space<vmem>>, vector<8x32xf32>,
    return
  }
  func.func @transform_0(%arg0: i32) -> (i32, i32) {
    %c0_i32 = arith.constant 0 : i32
    %c0_i32_0 = arith.constant 0 : i32
    return %arg0, %c0_i32 : i32, i32
  }
  func.func @transform_1(%arg0: i32) -> (i32, i32) {
    %c0_i32 = arith.constant 0 : i32
    %c0_i32_0 = arith.constant 0 : i32
    %c0_i32_1 = arith.constant 0 : i32
    return %c0_i32, %c0_i32_0 : i32, i32
  }
  func.func @transform_2(%arg0: i32) -> (i32, i32) {
    %c0_i32 = arith.constant 0 : i32
    %c0_i32_0 = arith.constant 0 : i32
    %c0_i32_1 = arith.constant 0 : i32
    return %c0_i32, %c0_i32_0 : i32, i32
  }
  func.func @transform_3(%arg0: i32) -> (i32, i32) {
    %c0_i32 = arith.constant 0 : i32
    %c0_i32_0 = arith.constant 0 : i32
    return %arg0, %c0_i32 : i32, i32
  }
  func.func @transform_4(%arg0: i32) -> (i32, i32) {
    %c0_i32 = arith.constant 0 : i32
    %c0_i32_0 = arith.constant 0 : i32
    return %arg0, %c0_i32 : i32, i32
  }
}

module attributes {stable_mosaic.version = 11 : i64} {
  func.func @_head_kernel(%arg0: memref<2x128xf32, #tpu.memory_space<vmem>>, %arg1: memref<128x32xbf16, #tpu.memory_space<vmem>>, %arg2: memref<1x32xf32, #tpu.memory_space<vmem>>, %arg3: memref<32x1xbf16, #tpu.memory_space<vmem>>, %arg4: memref<1x1xf32, #tpu.memory_space<vmem>>, %arg5: memref<2x32xf32, #tpu.memory_space<vmem>>, %arg6: memref<2x1xf32, #tpu.memory_space<vmem>>) attributes {dimension_semantics = [], scalar_prefetch = 0 : i64, scratch_operands = 0 : i64, tpu.core_type = #tpu.core_type<tc>} {
    %c0 = arith.constant 0 : index
    %c0_0 = arith.constant 0 : index
    %0 = vector.load %arg0[%c0, %c0_0] : memref<2x128xf32, #tpu.memory_space<vmem>>, vector<2x128xf32>
    %cst = arith.constant 0.000000e+00 : f32
    %1 = vector.broadcast %cst : f32 to vector<2x128xf32>
    %2 = arith.maximumf %0, %1 : vector<2x128xf32>
    %3 = arith.truncf %2 : vector<2x128xf32> to vector<2x128xbf16>
    %c0_1 = arith.constant 0 : index
    %c0_2 = arith.constant 0 : index
    %4 = vector.load %arg1[%c0_1, %c0_2] : memref<128x32xbf16, #tpu.memory_space<vmem>>, vector<128x32xbf16>
    %cst_3 = arith.constant dense<0.000000e+00> : vector<2x32xf32>
    %5 = tpu.matmul %3, %4, %cst_3 {dimension_numbers = #tpu.dot_dimension_numbers<[1], [0], [0], [1], [0, 0, 1, 1], [], []>} : vector<2x128xbf16>, vector<128x32xbf16>, vector<2x32xf32> -> vector<2x32xf32>
    %c0_4 = arith.constant 0 : index
    %c0_5 = arith.constant 0 : index
    %6 = vector.load %arg2[%c0_4, %c0_5] : memref<1x32xf32, #tpu.memory_space<vmem>>, vector<1x32xf32>
    %7 = vector.broadcast %6 : vector<1x32xf32> to vector<2x32xf32>
    %8 = arith.addf %5, %7 : vector<2x32xf32>
    %cst_6 = arith.constant 0.000000e+00 : f32
    %9 = vector.broadcast %cst_6 : f32 to vector<2x32xf32>
    %10 = arith.maximumf %8, %9 : vector<2x32xf32>
    %11 = arith.truncf %10 : vector<2x32xf32> to vector<2x32xbf16>
    %c0_7 = arith.constant 0 : index
    %c0_8 = arith.constant 0 : index
    %12 = vector.load %arg3[%c0_7, %c0_8] : memref<32x1xbf16, #tpu.memory_space<vmem>>, vector<32x1xbf16>
    %cst_9 = arith.constant dense<0.000000e+00> : vector<2x1xf32>
    %13 = tpu.matmul %11, %12, %cst_9 {dimension_numbers = #tpu.dot_dimension_numbers<[1], [0], [0], [1], [0, 0, 1, 1], [], []>} : vector<2x32xbf16>, vector<32x1xbf16>, vector<2x1xf32> -> vector<2x1xf32>
    %c0_10 = arith.constant 0 : index
    %c0_11 = arith.constant 0 : index
    %14 = vector.load %arg4[%c0_10, %c0_11] : memref<1x1xf32, #tpu.memory_space<vmem>>, vector<1x1xf32>
    %15 = vector.broadcast %14 : vector<1x1xf32> to vector<2x1xf32>
    %16 = arith.addf %13, %15 : vector<2x1xf32>
    %c0_12 = arith.constant 0 : index
    %c0_13 = arith.constant 0 : index
    %17 = vector.load %arg5[%c0_12, %c0_13] : memref<2x32xf32, #tpu.memory_space<vmem>>, vector<2x32xf32>
    tpu.vector_store %arg5[%c0_12, %c0_13], %10 {strides = array<i32>} : memref<2x32xf32, #tpu.memory_space<vmem>>, vector<2x32xf32>,
    %c0_14 = arith.constant 0 : index
    %c0_15 = arith.constant 0 : index
    %18 = vector.load %arg6[%c0_14, %c0_15] : memref<2x1xf32, #tpu.memory_space<vmem>>, vector<2x1xf32>
    tpu.vector_store %arg6[%c0_14, %c0_15], %16 {strides = array<i32>} : memref<2x1xf32, #tpu.memory_space<vmem>>, vector<2x1xf32>,
    return
  }
}

</mosaic_0001>

<llo_original>
// kernel: impala_cnn_base_forward.19
$region0: #{impala_cnn_base_forward.19}
  #allocation0 [shape = 'u32[]', space=smem, size = 0x4, offset = 0x4, fixed_abs, tag = 'smem constant byte address 0x4 - core index']
  #allocation1 [shape = 'u32[144,128]{1,0:T(1,128)}', space=vmem, size = 0x12000, scoped, tag = 'internal scratch']
  %s0 = inlined_call_operand.vmem [shape: bf16[512,36], index: 0, kind: input, shape index: {}]
  %s1 = inlined_call_operand.vmem [shape: bf16[36,16], index: 1, kind: input, shape index: {}]
  %s2 = inlined_call_operand.vmem [shape: f32[1,16], index: 2, kind: input, shape index: {}]
  %s3 = inlined_call_operand.vmem [shape: f32[512,16], index: 3, kind: output, shape index: {}]
  %s4 = sld [smem:[#allocation0]]
  $region22: #{impala_cnn_base_forward.19} parent=0
    _
  %s6 = ssub.s32 1, %s4
  %s7 = scalar_select 0, %s6, %s4
  // Predicated region
  $region2: #{impala_cnn_base_forward.19} parent=0 // pred_check
    _
  $region3: #{impala_cnn_base_forward.19} parent=0 // pred_check_branch
    %9 = sbr.rel (0) target = $region5
  $region4: #{impala_cnn_base_forward.19} parent=0 // pred_region
    _
  $region5: #{impala_cnn_base_forward.19} parent=0 // pred_fallthru
    _
  // Predicated region
  $region6: #{impala_cnn_base_forward.19} parent=0 // pred_check
    _
  $region7: #{impala_cnn_base_forward.19} parent=0 // pred_check_branch
    %11 = sbr.rel (0) target = $region9
  $region8: #{impala_cnn_base_forward.19} parent=0 // pred_region
    _
  $region9: #{impala_cnn_base_forward.19} parent=0 // pred_fallthru
    _
  // Predicated region
  $region10: #{impala_cnn_base_forward.19} parent=0 // pred_check
    _
  $region11: #{impala_cnn_base_forward.19} parent=0 // pred_check_branch
    %13 = sbr.rel (0) target = $region13
  $region12: #{impala_cnn_base_forward.19} parent=0 // pred_region
    _
  $region13: #{impala_cnn_base_forward.19} parent=0 // pred_fallthru
    _
  %v15 = vld [vmem:[%s0] sm:$0xf]
  %v16 = vld [vmem:[%s0 + $0x4] sm:$0xf]
  %v17 = vld [vmem:[%s0 + $0x8] sm:$0xf]
  %v18 = vld [vmem:[%s0 + $0xc] sm:$0xf]
  %v19 = vld [vmem:[%s0 + $0x10] sm:$0xf]
  %v20 = vld [vmem:[%s0 + $0x14] sm:$0xf]
  %v21 = vld [vmem:[%s0 + $0x18] sm:$0xf]
  %v22 = vld [vmem:[%s0 + $0x1c] sm:$0xf]
  %v23 = vld [vmem:[%s0 + $0x20] sm:$0xf]
  %v24 = vld [vmem:[%s0 + $0x24] sm:$0xf]
  %v25 = vld [vmem:[%s0 + $0x28] sm:$0xf]
  %v26 = vld [vmem:[%s0 + $0x2c] sm:$0xf]
  %v27 = vld [vmem:[%s0 + $0x30] sm:$0xf]
  %v28 = vld [vmem:[%s0 + $0x34] sm:$0xf]
  %v29 = vld [vmem:[%s0 + $0x38] sm:$0xf]
  %v30 = vld [vmem:[%s0 + $0x3c] sm:$0xf]
  %v31 = vld [vmem:[%s0 + $0x40] sm:$0xf]
  %v32 = vld [vmem:[%s0 + $0x44] sm:$0xf]
  %v33 = vld [vmem:[%s0 + $0x48] sm:$0xf]
  %v34 = vld [vmem:[%s0 + $0x4c] sm:$0xf]
  %v35 = vld [vmem:[%s0 + $0x50] sm:$0xf]
  %v36 = vld [vmem:[%s0 + $0x54] sm:$0xf]
  %v37 = vld [vmem:[%s0 + $0x58] sm:$0xf]
  %v38 = vld [vmem:[%s0 + $0x5c] sm:$0xf]
  %v39 = vld [vmem:[%s0 + $0x60] sm:$0xf]
  %v40 = vld [vmem:[%s0 + $0x64] sm:$0xf]
  %v41 = vld [vmem:[%s0 + $0x68] sm:$0xf]
  %v42 = vld [vmem:[%s0 + $0x6c] sm:$0xf]
  %v43 = vld [vmem:[%s0 + $0x70] sm:$0xf]
  %v44 = vld [vmem:[%s0 + $0x74] sm:$0xf]
  %v45 = vld [vmem:[%s0 + $0x78] sm:$0xf]
  %v46 = vld [vmem:[%s0 + $0x7c] sm:$0xf]
  %v47 = vld [vmem:[%s0 + $0x80] sm:$0xf]
  %v48 = vld [vmem:[%s0 + $0x84] sm:$0xf]
  %v49 = vld [vmem:[%s0 + $0x88] sm:$0xf]
  %v50 = vld [vmem:[%s0 + $0x8c] sm:$0xf]
  %v51 = vld [vmem:[%s0 + $0x90] sm:$0xf]
  %v52 = vld [vmem:[%s0 + $0x94] sm:$0xf]
  %v53 = vld [vmem:[%s0 + $0x98] sm:$0xf]
  %v54 = vld [vmem:[%s0 + $0x9c] sm:$0xf]
  %v55 = vld [vmem:[%s0 + $0xa0] sm:$0xf]
  %v56 = vld [vmem:[%s0 + $0xa4] sm:$0xf]
  %v57 = vld [vmem:[%s0 + $0xa8] sm:$0xf]
  %v58 = vld [vmem:[%s0 + $0xac] sm:$0xf]
  %v59 = vld [vmem:[%s0 + $0xb0] sm:$0xf]
  %v60 = vld [vmem:[%s0 + $0xb4] sm:$0xf]
  %v61 = vld [vmem:[%s0 + $0xb8] sm:$0xf]
  %v62 = vld [vmem:[%s0 + $0xbc] sm:$0xf]
  %v63 = vld [vmem:[%s0 + $0xc0] sm:$0xf]
  %v64 = vld [vmem:[%s0 + $0xc4] sm:$0xf]
  %v65 = vld [vmem:[%s0 + $0xc8] sm:$0xf]
  %v66 = vld [vmem:[%s0 + $0xcc] sm:$0xf]
  %v67 = vld [vmem:[%s0 + $0xd0] sm:$0xf]
  %v68 = vld [vmem:[%s0 + $0xd4] sm:$0xf]
  %v69 = vld [vmem:[%s0 + $0xd8] sm:$0xf]
  %v70 = vld [vmem:[%s0 + $0xdc] sm:$0xf]
  %v71 = vld [vmem:[%s0 + $0xe0] sm:$0xf]
  %v72 = vld [vmem:[%s0 + $0xe4] sm:$0xf]
  %v73 = vld [vmem:[%s0 + $0xe8] sm:$0xf]
  %v74 = vld [vmem:[%s0 + $0xec] sm:$0xf]
  %v75 = vld [vmem:[%s0 + $0xf0] sm:$0xf]
  %v76 = vld [vmem:[%s0 + $0xf4] sm:$0xf]
  %v77 = vld [vmem:[%s0 + $0xf8] sm:$0xf]
  %v78 = vld [vmem:[%s0 + $0xfc] sm:$0xf]
  %v79 = vld [vmem:[%s1] sm:$0xf]
  %v80 = vld [vmem:[%s1 + $0x4] sm:$0xf]
  %v81 = vld [vmem:[%s1 + $0x8] sm:$0xf]
  %v82 = vld [vmem:[%s1 + $0xc] sm:$0xf]
  %v83 = vld [vmem:[%s1 + $0x10] sm:$0x3]
  %v84 = vld [vmem:[%s2] sm:$0x1]
  %v86 = vlaneseq
  %v87 = vshrl.u32 %v86, 7
  %v88 = vsub.s32 0, %v87
  %v89 = vrot.slane %v84, %v88
  %v155 = vunpack.c.l.b16 %v15
  %v156 = vunpack.c.l.b16 %v16
  %v157 = vunpack.c.l.b16 %v17
  %v158 = vunpack.c.l.b16 %v18
  %v159 = vunpack.c.l.b16 %v19
  %v160 = vunpack.c.l.b16 %v20
  %v161 = vunpack.c.l.b16 %v21
  %v162 = vunpack.c.l.b16 %v22
  %v163 = vunpack.c.l.b16 %v23
  %v164 = vunpack.c.l.b16 %v24
  %v165 = vunpack.c.l.b16 %v25
  %v166 = vunpack.c.l.b16 %v26
  %v167 = vunpack.c.l.b16 %v27
  %v168 = vunpack.c.l.b16 %v28
  %v169 = vunpack.c.l.b16 %v29
  %v170 = vunpack.c.l.b16 %v30
  %v171 = vunpack.c.l.b16 %v31
  %v172 = vunpack.c.l.b16 %v32
  %v173 = vunpack.c.l.b16 %v33
  %v174 = vunpack.c.l.b16 %v34
  %v175 = vunpack.c.l.b16 %v35
  %v176 = vunpack.c.l.b16 %v36
  %v177 = vunpack.c.l.b16 %v37
  %v178 = vunpack.c.l.b16 %v38
  %v179 = vunpack.c.l.b16 %v39
  %v180 = vunpack.c.l.b16 %v40
  %v181 = vunpack.c.l.b16 %v41
  %v182 = vunpack.c.l.b16 %v42
  %v183 = vunpack.c.l.b16 %v43
  %v184 = vunpack.c.l.b16 %v44
  %v185 = vunpack.c.l.b16 %v45
  %v186 = vunpack.c.l.b16 %v46
  %v187 = vunpack.c.l.b16 %v47
  %v188 = vunpack.c.l.b16 %v48
  %v189 = vunpack.c.l.b16 %v49
  %v190 = vunpack.c.l.b16 %v50
  %v191 = vunpack.c.l.b16 %v51
  %v192 = vunpack.c.l.b16 %v52
  %v193 = vunpack.c.l.b16 %v53
  %v194 = vunpack.c.l.b16 %v54
  %v195 = vunpack.c.l.b16 %v55
  %v196 = vunpack.c.l.b16 %v56
  %v197 = vunpack.c.l.b16 %v57
  %v198 = vunpack.c.l.b16 %v58
  %v199 = vunpack.c.l.b16 %v59
  %v200 = vunpack.c.l.b16 %v60
  %v201 = vunpack.c.l.b16 %v61
  %v202 = vunpack.c.l.b16 %v62
  %v203 = vunpack.c.l.b16 %v63
  %v204 = vunpack.c.l.b16 %v64
  %v205 = vunpack.c.l.b16 %v65
  %v206 = vunpack.c.l.b16 %v66
  %v207 = vunpack.c.l.b16 %v67
  %v208 = vunpack.c.l.b16 %v68
  %v209 = vunpack.c.l.b16 %v69
  %v210 = vunpack.c.l.b16 %v70
  %v211 = vunpack.c.l.b16 %v71
  %v212 = vunpack.c.l.b16 %v72
  %v213 = vunpack.c.l.b16 %v73
  %v214 = vunpack.c.l.b16 %v74
  %v215 = vunpack.c.l.b16 %v75
  %v216 = vunpack.c.l.b16 %v76
  %v217 = vunpack.c.l.b16 %v77
  %v218 = vunpack.c.l.b16 %v78
  %v219 = vpack.c.b16 %v156, %v155
  %v220 = vpack.c.b16 %v158, %v157
  %v221 = vpack.c.b16 %v160, %v159
  %v222 = vpack.c.b16 %v162, %v161
  %v223 = vpack.c.b16 %v164, %v163
  %v224 = vpack.c.b16 %v166, %v165
  %v225 = vpack.c.b16 %v168, %v167
  %v226 = vpack.c.b16 %v170, %v169
  %v227 = vpack.c.b16 %v172, %v171
  %v228 = vpack.c.b16 %v174, %v173
  %v229 = vpack.c.b16 %v176, %v175
  %v230 = vpack.c.b16 %v178, %v177
  %v231 = vpack.c.b16 %v180, %v179
  %v232 = vpack.c.b16 %v182, %v181
  %v233 = vpack.c.b16 %v184, %v183
  %v234 = vpack.c.b16 %v186, %v185
  %v235 = vpack.c.b16 %v188, %v187
  %v236 = vpack.c.b16 %v190, %v189
  %v237 = vpack.c.b16 %v192, %v191
  %v238 = vpack.c.b16 %v194, %v193
  %v239 = vpack.c.b16 %v196, %v195
  %v240 = vpack.c.b16 %v198, %v197
  %v241 = vpack.c.b16 %v200, %v199
  %v242 = vpack.c.b16 %v202, %v201
  %v243 = vpack.c.b16 %v204, %v203
  %v244 = vpack.c.b16 %v206, %v205
  %v245 = vpack.c.b16 %v208, %v207
  %v246 = vpack.c.b16 %v210, %v209
  %v247 = vpack.c.b16 %v212, %v211
  %v248 = vpack.c.b16 %v214, %v213
  %v249 = vpack.c.b16 %v216, %v215
  %v250 = vpack.c.b16 %v218, %v217
  %v256 = vunpack.c.l.b16 %v79
  %v257 = vunpack.c.l.b16 %v80
  %v258 = vunpack.c.l.b16 %v81
  %v259 = vunpack.c.l.b16 %v82
  %v260 = vunpack.c.l.b16 %v83
  %v261 = vpack.c.b16 %v257, %v256
  %v262 = vpack.c.b16 %v259, %v258
  %v263 = vpack.c.b16 %v260, %v260
  %vm266 = vcmask 293888
  %v268 = vsel %vm266, %v219, 0
  %v271 = vsel %vm266, %v220, 0
  %v274 = vsel %vm266, %v221, 0
  %v277 = vsel %vm266, %v222, 0
  %v280 = vsel %vm266, %v223, 0
  %v283 = vsel %vm266, %v224, 0
  %v286 = vsel %vm266, %v225, 0
  %v289 = vsel %vm266, %v226, 0
  %v292 = vsel %vm266, %v227, 0
  %v295 = vsel %vm266, %v228, 0
  %v298 = vsel %vm266, %v229, 0
  %v301 = vsel %vm266, %v230, 0
  %v304 = vsel %vm266, %v231, 0
  %v307 = vsel %vm266, %v232, 0
  %v310 = vsel %vm266, %v233, 0
  %v313 = vsel %vm266, %v234, 0
  %v316 = vsel %vm266, %v235, 0
  %v319 = vsel %vm266, %v236, 0
  %v322 = vsel %vm266, %v237, 0
  %v325 = vsel %vm266, %v238, 0
  %v328 = vsel %vm266, %v239, 0
  %v331 = vsel %vm266, %v240, 0
  %v334 = vsel %vm266, %v241, 0
  %v337 = vsel %vm266, %v242, 0
  %v340 = vsel %vm266, %v243, 0
  %v343 = vsel %vm266, %v244, 0
  %v346 = vsel %vm266, %v245, 0
  %v349 = vsel %vm266, %v246, 0
  %v352 = vsel %vm266, %v247, 0
  %v355 = vsel %vm266, %v248, 0
  %v358 = vsel %vm266, %v249, 0
  %v361 = vsel %vm266, %v250, 0
  %vm363 = vcmask 1041408
  %v365 = vsel %vm363, %v263, 0
  %367 = vmatprep.subr.bf16.mxu0 0
  %368 = vmatpush1.bf16.msra.mxu0 0
  %369 = vmatprep.subr.bf16.mxu0 0
  %370 = vmatpush1.bf16.msra.mxu0 0
  %371 = vmatprep.subr.bf16.mxu0 0
  %372 = vmatpush1.bf16.msra.mxu0 0
  %373 = vmatprep.subr.bf16.mxu0 0
  %374 = vmatpush1.bf16.msra.mxu0 0
  %375 = vmatprep.subr.bf16.mxu0 0
  %376 = vmatpush1.bf16.msra.mxu0 0
  %377 = vmatprep.subr.bf16.mxu0 0
  %378 = vmatpush1.bf16.msra.mxu0 %v365
  %379 = vmatprep.subr.bf16.mxu0 0
  %380 = vmatpush1.bf16.msra.mxu0 %v262
  %381 = vmatprep.subr.bf16.mxu0 0
  %382 = vmatpush1.bf16.msra.mxu0 %v261
  %383 = vmatprep.subr.bf16.mxu0 0
  %384 = vmatpush2.bf16.msra.mxu0 0
  %385 = vmatprep.subr.bf16.mxu0 0
  %386 = vmatpush2.bf16.msra.mxu0 0
  %387 = vmatprep.subr.bf16.mxu0 0
  %388 = vmatpush2.bf16.msra.mxu0 0
  %389 = vmatprep.subr.bf16.mxu0 0
  %390 = vmatpush2.bf16.msra.mxu0 0
  %391 = vmatprep.subr.bf16.mxu0 0
  %392 = vmatpush2.bf16.msra.mxu0 0
  %393 = vmatprep.subr.bf16.mxu0 0
  %394 = vmatpush2.bf16.msra.mxu0 0
  %395 = vmatprep.subr.bf16.mxu0 0
  %396 = vmatpush2.bf16.msra.mxu0 0
  %397 = vmatprep.subr.bf16.mxu0 0
  %398 = vmatpush2.bf16.msra.mxu0 0
  %399 = vmatprep.mubr.bf16.mxu0 0
  %400 = vmatmul.mubr.bf16.gmra.mxu0 %v268
  %v401 = vpop.f32.mrf.mxu0
  %v402 = vadd.f32 %v89, %v401
  %v403 = vpop.f32.mrf.mxu0
  %v404 = vpop.f32.mrf.mxu0
  %v405 = vadd.f32 %v89, %v404
  %v406 = vpop.f32.mrf.mxu0
  %407 = vmatprep.mubr.bf16.mxu0 0
  %408 = vmatmul.mubr.bf16.gmra.mxu0 %v271
  %v409 = vpop.f32.mrf.mxu0
  %v410 = vadd.f32 %v89, %v409
  %v411 = vpop.f32.mrf.mxu0
  %v412 = vpop.f32.mrf.mxu0
  %v413 = vadd.f32 %v89, %v412
  %v414 = vpop.f32.mrf.mxu0
  %415 = vmatprep.mubr.bf16.mxu0 0
  %416 = vmatmul.mubr.bf16.gmra.mxu0 %v274
  %v417 = vpop.f32.mrf.mxu0
  %v418 = vadd.f32 %v89, %v417
  %v419 = vpop.f32.mrf.mxu0
  %v420 = vpop.f32.mrf.mxu0
  %v421 = vadd.f32 %v89, %v420
  %v422 = vpop.f32.mrf.mxu0
  %423 = vmatprep.mubr.bf16.mxu0 0
  %424 = vmatmul.mubr.bf16.gmra.mxu0 %v277
  %v425 = vpop.f32.mrf.mxu0
  %v426 = vadd.f32 %v89, %v425
  %v427 = vpop.f32.mrf.mxu0
  %v428 = vpop.f32.mrf.mxu0
  %v429 = vadd.f32 %v89, %v428
  %v430 = vpop.f32.mrf.mxu0
  %431 = vmatprep.mubr.bf16.mxu0 0
  %432 = vmatmul.mubr.bf16.gmra.mxu0 %v280
  %v433 = vpop.f32.mrf.mxu0
  %v434 = vadd.f32 %v89, %v433
  %v435 = vpop.f32.mrf.mxu0
  %v436 = vpop.f32.mrf.mxu0
  %v437 = vadd.f32 %v89, %v436
  %v438 = vpop.f32.mrf.mxu0
  %439 = vmatprep.mubr.bf16.mxu0 0
  %440 = vmatmul.mubr.bf16.gmra.mxu0 %v283
  %v441 = vpop.f32.mrf.mxu0
  %v442 = vadd.f32 %v89, %v441
  %v443 = vpop.f32.mrf.mxu0
  %v444 = vpop.f32.mrf.mxu0
  %v445 = vadd.f32 %v89, %v444
  %v446 = vpop.f32.mrf.mxu0
  %447 = vmatprep.mubr.bf16.mxu0 0
  %448 = vmatmul.mubr.bf16.gmra.mxu0 %v286
  %v449 = vpop.f32.mrf.mxu0
  %v450 = vadd.f32 %v89, %v449
  %v451 = vpop.f32.mrf.mxu0
  %v452 = vpop.f32.mrf.mxu0
  %v453 = vadd.f32 %v89, %v452
  %v454 = vpop.f32.mrf.mxu0
  %455 = vmatprep.mubr.bf16.mxu0 0
  %456 = vmatmul.mubr.bf16.gmra.mxu0 %v289
  %v457 = vpop.f32.mrf.mxu0
  %v458 = vadd.f32 %v89, %v457
  %v459 = vpop.f32.mrf.mxu0
  %v460 = vpop.f32.mrf.mxu0
  %v461 = vadd.f32 %v89, %v460
  %v462 = vpop.f32.mrf.mxu0
  %463 = vmatprep.mubr.bf16.mxu0 0
  %464 = vmatmul.mubr.bf16.gmra.mxu0 %v292
  %v465 = vpop.f32.mrf.mxu0
  %v466 = vadd.f32 %v89, %v465
  %v467 = vpop.f32.mrf.mxu0
  %v468 = vpop.f32.mrf.mxu0
  %v469 = vadd.f32 %v89, %v468
  %v470 = vpop.f32.mrf.mxu0
  %471 = vmatprep.mubr.bf16.mxu0 0
  %472 = vmatmul.mubr.bf16.gmra.mxu0 %v295
  %v473 = vpop.f32.mrf.mxu0
  %v474 = vadd.f32 %v89, %v473
  %v475 = vpop.f32.mrf.mxu0
  %v476 = vpop.f32.mrf.mxu0
  %v477 = vadd.f32 %v89, %v476
  %v478 = vpop.f32.mrf.mxu0
  %479 = vmatprep.mubr.bf16.mxu0 0
  %480 = vmatmul.mubr.bf16.gmra.mxu0 %v298
  %v481 = vpop.f32.mrf.mxu0
  %v482 = vadd.f32 %v89, %v481
  %v483 = vpop.f32.mrf.mxu0
  %v484 = vpop.f32.mrf.mxu0
  %v485 = vadd.f32 %v89, %v484
  %v486 = vpop.f32.mrf.mxu0
  %487 = vmatprep.mubr.bf16.mxu0 0
  %488 = vmatmul.mubr.bf16.gmra.mxu0 %v301
  %v489 = vpop.f32.mrf.mxu0
  %v490 = vadd.f32 %v89, %v489
  %v491 = vpop.f32.mrf.mxu0
  %v492 = vpop.f32.mrf.mxu0
  %v493 = vadd.f32 %v89, %v492
  %v494 = vpop.f32.mrf.mxu0
  %495 = vmatprep.mubr.bf16.mxu0 0
  %496 = vmatmul.mubr.bf16.gmra.mxu0 %v304
  %v497 = vpop.f32.mrf.mxu0
  %v498 = vadd.f32 %v89, %v497
  %v499 = vpop.f32.mrf.mxu0
  %v500 = vpop.f32.mrf.mxu0
  %v501 = vadd.f32 %v89, %v500
  %v502 = vpop.f32.mrf.mxu0
  %503 = vmatprep.mubr.bf16.mxu0 0
  %504 = vmatmul.mubr.bf16.gmra.mxu0 %v307
  %v505 = vpop.f32.mrf.mxu0
  %v506 = vadd.f32 %v89, %v505
  %v507 = vpop.f32.mrf.mxu0
  %v508 = vpop.f32.mrf.mxu0
  %v509 = vadd.f32 %v89, %v508
  %v510 = vpop.f32.mrf.mxu0
  %511 = vmatprep.mubr.bf16.mxu0 0
  %512 = vmatmul.mubr.bf16.gmra.mxu0 %v310
  %v513 = vpop.f32.mrf.mxu0
  %v514 = vadd.f32 %v89, %v513
  %v515 = vpop.f32.mrf.mxu0
  %v516 = vpop.f32.mrf.mxu0
  %v517 = vadd.f32 %v89, %v516
  %v518 = vpop.f32.mrf.mxu0
  %519 = vmatprep.mubr.bf16.mxu0 0
  %520 = vmatmul.mubr.bf16.gmra.mxu0 %v313
  %v521 = vpop.f32.mrf.mxu0
  %v522 = vadd.f32 %v89, %v521
  %v523 = vpop.f32.mrf.mxu0
  %v524 = vpop.f32.mrf.mxu0
  %v525 = vadd.f32 %v89, %v524
  %v526 = vpop.f32.mrf.mxu0
  %527 = vmatprep.mubr.bf16.mxu0 0
  %528 = vmatmul.mubr.bf16.gmra.mxu0 %v316
  %v529 = vpop.f32.mrf.mxu0
  %v530 = vadd.f32 %v89, %v529
  %v531 = vpop.f32.mrf.mxu0
  %v532 = vpop.f32.mrf.mxu0
  %v533 = vadd.f32 %v89, %v532
  %v534 = vpop.f32.mrf.mxu0
  %535 = vmatprep.mubr.bf16.mxu0 0
  %536 = vmatmul.mubr.bf16.gmra.mxu0 %v319
  %v537 = vpop.f32.mrf.mxu0
  %v538 = vadd.f32 %v89, %v537
  %v539 = vpop.f32.mrf.mxu0
  %v540 = vpop.f32.mrf.mxu0
  %v541 = vadd.f32 %v89, %v540
  %v542 = vpop.f32.mrf.mxu0
  %543 = vmatprep.mubr.bf16.mxu0 0
  %544 = vmatmul.mubr.bf16.gmra.mxu0 %v322
  %v545 = vpop.f32.mrf.mxu0
  %v546 = vadd.f32 %v89, %v545
  %v547 = vpop.f32.mrf.mxu0
  %v548 = vpop.f32.mrf.mxu0
  %v549 = vadd.f32 %v89, %v548
  %v550 = vpop.f32.mrf.mxu0
  %551 = vmatprep.mubr.bf16.mxu0 0
  %552 = vmatmul.mubr.bf16.gmra.mxu0 %v325
  %v553 = vpop.f32.mrf.mxu0
  %v554 = vadd.f32 %v89, %v553
  %v555 = vpop.f32.mrf.mxu0
  %v556 = vpop.f32.mrf.mxu0
  %v557 = vadd.f32 %v89, %v556
  %v558 = vpop.f32.mrf.mxu0
  %559 = vmatprep.mubr.bf16.mxu0 0
  %560 = vmatmul.mubr.bf16.gmra.mxu0 %v328
  %v561 = vpop.f32.mrf.mxu0
  %v562 = vadd.f32 %v89, %v561
  %v563 = vpop.f32.mrf.mxu0
  %v564 = vpop.f32.mrf.mxu0
  %v565 = vadd.f32 %v89, %v564
  %v566 = vpop.f32.mrf.mxu0
  %567 = vmatprep.mubr.bf16.mxu0 0
  %568 = vmatmul.mubr.bf16.gmra.mxu0 %v331
  %v569 = vpop.f32.mrf.mxu0
  %v570 = vadd.f32 %v89, %v569
  %v571 = vpop.f32.mrf.mxu0
  %v572 = vpop.f32.mrf.mxu0
  %v573 = vadd.f32 %v89, %v572
  %v574 = vpop.f32.mrf.mxu0
  %575 = vmatprep.mubr.bf16.mxu0 0
  %576 = vmatmul.mubr.bf16.gmra.mxu0 %v334
  %v577 = vpop.f32.mrf.mxu0
  %v578 = vadd.f32 %v89, %v577
  %v579 = vpop.f32.mrf.mxu0
  %v580 = vpop.f32.mrf.mxu0
  %v581 = vadd.f32 %v89, %v580
  %v582 = vpop.f32.mrf.mxu0
  %583 = vmatprep.mubr.bf16.mxu0 0
  %584 = vmatmul.mubr.bf16.gmra.mxu0 %v337
  %v585 = vpop.f32.mrf.mxu0
  %v586 = vadd.f32 %v89, %v585
  %v587 = vpop.f32.mrf.mxu0
  %v588 = vpop.f32.mrf.mxu0
  %v589 = vadd.f32 %v89, %v588
  %v590 = vpop.f32.mrf.mxu0
  %591 = vmatprep.mubr.bf16.mxu0 0
  %592 = vmatmul.mubr.bf16.gmra.mxu0 %v340
  %v593 = vpop.f32.mrf.mxu0
  %v594 = vadd.f32 %v89, %v593
  %v595 = vpop.f32.mrf.mxu0
  %v596 = vpop.f32.mrf.mxu0
  %v597 = vadd.f32 %v89, %v596
  %v598 = vpop.f32.mrf.mxu0
  %599 = vmatprep.mubr.bf16.mxu0 0
  %600 = vmatmul.mubr.bf16.gmra.mxu0 %v343
  %v601 = vpop.f32.mrf.mxu0
  %v602 = vadd.f32 %v89, %v601
  %v603 = vpop.f32.mrf.mxu0
  %v604 = vpop.f32.mrf.mxu0
  %v605 = vadd.f32 %v89, %v604
  %v606 = vpop.f32.mrf.mxu0
  %607 = vmatprep.mubr.bf16.mxu0 0
  %608 = vmatmul.mubr.bf16.gmra.mxu0 %v346
  %v609 = vpop.f32.mrf.mxu0
  %v610 = vadd.f32 %v89, %v609
  %v611 = vpop.f32.mrf.mxu0
  %v612 = vpop.f32.mrf.mxu0
  %v613 = vadd.f32 %v89, %v612
  %v614 = vpop.f32.mrf.mxu0
  %615 = vmatprep.mubr.bf16.mxu0 0
  %616 = vmatmul.mubr.bf16.gmra.mxu0 %v349
  %v617 = vpop.f32.mrf.mxu0
  %v618 = vadd.f32 %v89, %v617
  %v619 = vpop.f32.mrf.mxu0
  %v620 = vpop.f32.mrf.mxu0
  %v621 = vadd.f32 %v89, %v620
  %v622 = vpop.f32.mrf.mxu0
  %623 = vmatprep.mubr.bf16.mxu0 0
  %624 = vmatmul.mubr.bf16.gmra.mxu0 %v352
  %v625 = vpop.f32.mrf.mxu0
  %v626 = vadd.f32 %v89, %v625
  %v627 = vpop.f32.mrf.mxu0
  %v628 = vpop.f32.mrf.mxu0
  %v629 = vadd.f32 %v89, %v628
  %v630 = vpop.f32.mrf.mxu0
  %631 = vmatprep.mubr.bf16.mxu0 0
  %632 = vmatmul.mubr.bf16.gmra.mxu0 %v355
  %v633 = vpop.f32.mrf.mxu0
  %v634 = vadd.f32 %v89, %v633
  %v635 = vpop.f32.mrf.mxu0
  %v636 = vpop.f32.mrf.mxu0
  %v637 = vadd.f32 %v89, %v636
  %v638 = vpop.f32.mrf.mxu0
  %639 = vmatprep.mubr.bf16.mxu0 0
  %640 = vmatmul.mubr.bf16.gmra.mxu0 %v358
  %v641 = vpop.f32.mrf.mxu0
  %v642 = vadd.f32 %v89, %v641
  %v643 = vpop.f32.mrf.mxu0
  %v644 = vpop.f32.mrf.mxu0
  %v645 = vadd.f32 %v89, %v644
  %v646 = vpop.f32.mrf.mxu0
  %647 = vmatprep.mubr.bf16.mxu0 0
  %648 = vmatmul.mubr.bf16.gmra.mxu0 %v361
  %v649 = vpop.f32.mrf.mxu0
  %v650 = vadd.f32 %v89, %v649
  %v651 = vpop.f32.mrf.mxu0
  %v652 = vpop.f32.mrf.mxu0
  %v653 = vadd.f32 %v89, %v652
  %v654 = vpop.f32.mrf.mxu0
  %655 = vdwg.mxu0
  %vm656 = vcmask 130048
  %657 = vst.msk [vmem:[%s3] sm:$0xff] %vm656, %v402
  %658 = vst.msk [vmem:[%s3 + $0x8] sm:$0xff] %vm656, %v405
  %659 = vst.msk [vmem:[%s3 + $0x10] sm:$0xff] %vm656, %v410
  %660 = vst.msk [vmem:[%s3 + $0x18] sm:$0xff] %vm656, %v413
  %661 = vst.msk [vmem:[%s3 + $0x20] sm:$0xff] %vm656, %v418
  %662 = vst.msk [vmem:[%s3 + $0x28] sm:$0xff] %vm656, %v421
  %663 = vst.msk [vmem:[%s3 + $0x30] sm:$0xff] %vm656, %v426
  %664 = vst.msk [vmem:[%s3 + $0x38] sm:$0xff] %vm656, %v429
  %665 = vst.msk [vmem:[%s3 + $0x40] sm:$0xff] %vm656, %v434
  %666 = vst.msk [vmem:[%s3 + $0x48] sm:$0xff] %vm656, %v437
  %667 = vst.msk [vmem:[%s3 + $0x50] sm:$0xff] %vm656, %v442
  %668 = vst.msk [vmem:[%s3 + $0x58] sm:$0xff] %vm656, %v445
  %669 = vst.msk [vmem:[%s3 + $0x60] sm:$0xff] %vm656, %v450
  %670 = vst.msk [vmem:[%s3 + $0x68] sm:$0xff] %vm656, %v453
  %671 = vst.msk [vmem:[%s3 + $0x70] sm:$0xff] %vm656, %v458
  %672 = vst.msk [vmem:[%s3 + $0x78] sm:$0xff] %vm656, %v461
  %673 = vst.msk [vmem:[%s3 + $0x80] sm:$0xff] %vm656, %v466
  %674 = vst.msk [vmem:[%s3 + $0x88] sm:$0xff] %vm656, %v469
  %675 = vst.msk [vmem:[%s3 + $0x90] sm:$0xff] %vm656, %v474
  %676 = vst.msk [vmem:[%s3 + $0x98] sm:$0xff] %vm656, %v477
  %677 = vst.msk [vmem:[%s3 + $0xa0] sm:$0xff] %vm656, %v482
  %678 = vst.msk [vmem:[%s3 + $0xa8] sm:$0xff] %vm656, %v485
  %679 = vst.msk [vmem:[%s3 + $0xb0] sm:$0xff] %vm656, %v490
  %680 = vst.msk [vmem:[%s3 + $0xb8] sm:$0xff] %vm656, %v493
  %681 = vst.msk [vmem:[%s3 + $0xc0] sm:$0xff] %vm656, %v498
  %682 = vst.msk [vmem:[%s3 + $0xc8] sm:$0xff] %vm656, %v501
  %683 = vst.msk [vmem:[%s3 + $0xd0] sm:$0xff] %vm656, %v506
  %684 = vst.msk [vmem:[%s3 + $0xd8] sm:$0xff] %vm656, %v509
  %685 = vst.msk [vmem:[%s3 + $0xe0] sm:$0xff] %vm656, %v514
  %686 = vst.msk [vmem:[%s3 + $0xe8] sm:$0xff] %vm656, %v517
  %687 = vst.msk [vmem:[%s3 + $0xf0] sm:$0xff] %vm656, %v522
  %688 = vst.msk [vmem:[%s3 + $0xf8] sm:$0xff] %vm656, %v525
  %689 = vst.msk [vmem:[%s3 + $0x100] sm:$0xff] %vm656, %v530
  %690 = vst.msk [vmem:[%s3 + $0x108] sm:$0xff] %vm656, %v533
  %691 = vst.msk [vmem:[%s3 + $0x110] sm:$0xff] %vm656, %v538
  %692 = vst.msk [vmem:[%s3 + $0x118] sm:$0xff] %vm656, %v541
  %693 = vst.msk [vmem:[%s3 + $0x120] sm:$0xff] %vm656, %v546
  %694 = vst.msk [vmem:[%s3 + $0x128] sm:$0xff] %vm656, %v549
  %695 = vst.msk [vmem:[%s3 + $0x130] sm:$0xff] %vm656, %v554
  %696 = vst.msk [vmem:[%s3 + $0x138] sm:$0xff] %vm656, %v557
  %697 = vst.msk [vmem:[%s3 + $0x140] sm:$0xff] %vm656, %v562
  %698 = vst.msk [vmem:[%s3 + $0x148] sm:$0xff] %vm656, %v565
  %699 = vst.msk [vmem:[%s3 + $0x150] sm:$0xff] %vm656, %v570
  %700 = vst.msk [vmem:[%s3 + $0x158] sm:$0xff] %vm656, %v573
  %701 = vst.msk [vmem:[%s3 + $0x160] sm:$0xff] %vm656, %v578
  %702 = vst.msk [vmem:[%s3 + $0x168] sm:$0xff] %vm656, %v581
  %703 = vst.msk [vmem:[%s3 + $0x170] sm:$0xff] %vm656, %v586
  %704 = vst.msk [vmem:[%s3 + $0x178] sm:$0xff] %vm656, %v589
  %705 = vst.msk [vmem:[%s3 + $0x180] sm:$0xff] %vm656, %v594
  %706 = vst.msk [vmem:[%s3 + $0x188] sm:$0xff] %vm656, %v597
  %707 = vst.msk [vmem:[%s3 + $0x190] sm:$0xff] %vm656, %v602
  %708 = vst.msk [vmem:[%s3 + $0x198] sm:$0xff] %vm656, %v605
  %709 = vst.msk [vmem:[%s3 + $0x1a0] sm:$0xff] %vm656, %v610
  %710 = vst.msk [vmem:[%s3 + $0x1a8] sm:$0xff] %vm656, %v613
  %711 = vst.msk [vmem:[%s3 + $0x1b0] sm:$0xff] %vm656, %v618
  %712 = vst.msk [vmem:[%s3 + $0x1b8] sm:$0xff] %vm656, %v621
  %713 = vst.msk [vmem:[%s3 + $0x1c0] sm:$0xff] %vm656, %v626
  %714 = vst.msk [vmem:[%s3 + $0x1c8] sm:$0xff] %vm656, %v629
  %715 = vst.msk [vmem:[%s3 + $0x1d0] sm:$0xff] %vm656, %v634
  %716 = vst.msk [vmem:[%s3 + $0x1d8] sm:$0xff] %vm656, %v637
  %717 = vst.msk [vmem:[%s3 + $0x1e0] sm:$0xff] %vm656, %v642
  %718 = vst.msk [vmem:[%s3 + $0x1e8] sm:$0xff] %vm656, %v645
  %719 = vst.msk [vmem:[%s3 + $0x1f0] sm:$0xff] %vm656, %v650
  %720 = vst.msk [vmem:[%s3 + $0x1f8] sm:$0xff] %vm656, %v653
  // Predicated region
  $region14: #{impala_cnn_base_forward.19} parent=0 // pred_check
    _
  $region15: #{impala_cnn_base_forward.19} parent=0 // pred_check_branch
    %722 = sbr.rel (0) target = $region17
  $region16: #{impala_cnn_base_forward.19} parent=0 // pred_region
    _
  $region17: #{impala_cnn_base_forward.19} parent=0 // pred_fallthru
    _
  // Predicated region
  $region18: #{impala_cnn_base_forward.19} parent=0 // pred_check
    _
  $region19: #{impala_cnn_base_forward.19} parent=0 // pred_check_branch
    %724 = sbr.rel (0) target = $region21
  $region20: #{impala_cnn_base_forward.19} parent=0 // pred_region
    _
  $region21: #{impala_cnn_base_forward.19} parent=0 // pred_fallthru
    _

// kernel: impala_cnn_base_forward.20
$region0: #{impala_cnn_base_forward.20}
  #allocation0 [shape = 'u32[]', space=smem, size = 0x4, offset = 0x4, fixed_abs, tag = 'smem constant byte address 0x4 - core index']
  #allocation1 [shape = 'u32[144,128]{1,0:T(1,128)}', space=vmem, size = 0x12000, scoped, tag = 'internal scratch']
  %s0 = inlined_call_operand.vmem [shape: f32[9,128,16], index: 0, kind: input, shape index: {}]
  %s1 = inlined_call_operand.vmem [shape: f32[128,16], index: 1, kind: output, shape index: {}]
  %s2 = sld [smem:[#allocation0]]
  $region14: #{impala_cnn_base_forward.20} parent=0
    _
  %s4 = ssub.s32 1, %s2
  %s5 = scalar_select 0, %s4, %s2
  // Predicated region
  $region2: #{impala_cnn_base_forward.20} parent=0 // pred_check
    _
  $region3: #{impala_cnn_base_forward.20} parent=0 // pred_check_branch
    %7 = sbr.rel (0) target = $region5
  $region4: #{impala_cnn_base_forward.20} parent=0 // pred_region
    _
  $region5: #{impala_cnn_base_forward.20} parent=0 // pred_fallthru
    _
  %v8 = vld [vmem:[%s0] sm:$0xff]
  %v9 = vld [vmem:[%s0 + $0x8] sm:$0xff]
  %v10 = vld [vmem:[%s0 + $0x10] sm:$0xff]
  %v11 = vld [vmem:[%s0 + $0x18] sm:$0xff]
  %v12 = vld [vmem:[%s0 + $0x20] sm:$0xff]
  %v13 = vld [vmem:[%s0 + $0x28] sm:$0xff]
  %v14 = vld [vmem:[%s0 + $0x30] sm:$0xff]
  %v15 = vld [vmem:[%s0 + $0x38] sm:$0xff]
  %v16 = vld [vmem:[%s0 + $0x40] sm:$0xff]
  %v17 = vld [vmem:[%s0 + $0x48] sm:$0xff]
  %v18 = vld [vmem:[%s0 + $0x50] sm:$0xff]
  %v19 = vld [vmem:[%s0 + $0x58] sm:$0xff]
  %v20 = vld [vmem:[%s0 + $0x60] sm:$0xff]
  %v21 = vld [vmem:[%s0 + $0x68] sm:$0xff]
  %v22 = vld [vmem:[%s0 + $0x70] sm:$0xff]
  %v23 = vld [vmem:[%s0 + $0x78] sm:$0xff]
  %s24 = scalar_lea.vmem %s0, 128
  %v25 = vld [vmem:[%s24] sm:$0xff]
  %v26 = vld [vmem:[%s24 + $0x8] sm:$0xff]
  %v27 = vld [vmem:[%s24 + $0x10] sm:$0xff]
  %v28 = vld [vmem:[%s24 + $0x18] sm:$0xff]
  %v29 = vld [vmem:[%s24 + $0x20] sm:$0xff]
  %v30 = vld [vmem:[%s24 + $0x28] sm:$0xff]
  %v31 = vld [vmem:[%s24 + $0x30] sm:$0xff]
  %v32 = vld [vmem:[%s24 + $0x38] sm:$0xff]
  %v33 = vld [vmem:[%s24 + $0x40] sm:$0xff]
  %v34 = vld [vmem:[%s24 + $0x48] sm:$0xff]
  %v35 = vld [vmem:[%s24 + $0x50] sm:$0xff]
  %v36 = vld [vmem:[%s24 + $0x58] sm:$0xff]
  %v37 = vld [vmem:[%s24 + $0x60] sm:$0xff]
  %v38 = vld [vmem:[%s24 + $0x68] sm:$0xff]
  %v39 = vld [vmem:[%s24 + $0x70] sm:$0xff]
  %v40 = vld [vmem:[%s24 + $0x78] sm:$0xff]
  %v41 = vmax.f32 %v8, %v25
  %v42 = vmax.f32 %v9, %v26
  %v43 = vmax.f32 %v10, %v27
  %v44 = vmax.f32 %v11, %v28
  %v45 = vmax.f32 %v12, %v29
  %v46 = vmax.f32 %v13, %v30
  %v47 = vmax.f32 %v14, %v31
  %v48 = vmax.f32 %v15, %v32
  %v49 = vmax.f32 %v16, %v33
  %v50 = vmax.f32 %v17, %v34
  %v51 = vmax.f32 %v18, %v35
  %v52 = vmax.f32 %v19, %v36
  %v53 = vmax.f32 %v20, %v37
  %v54 = vmax.f32 %v21, %v38
  %v55 = vmax.f32 %v22, %v39
  %v56 = vmax.f32 %v23, %v40
  %s57 = scalar_lea.vmem %s0, 256
  %v58 = vld [vmem:[%s57] sm:$0xff]
  %v59 = vld [vmem:[%s57 + $0x8] sm:$0xff]
  %v60 = vld [vmem:[%s57 + $0x10] sm:$0xff]
  %v61 = vld [vmem:[%s57 + $0x18] sm:$0xff]
  %v62 = vld [vmem:[%s57 + $0x20] sm:$0xff]
  %v63 = vld [vmem:[%s57 + $0x28] sm:$0xff]
  %v64 = vld [vmem:[%s57 + $0x30] sm:$0xff]
  %v65 = vld [vmem:[%s57 + $0x38] sm:$0xff]
  %v66 = vld [vmem:[%s57 + $0x40] sm:$0xff]
  %v67 = vld [vmem:[%s57 + $0x48] sm:$0xff]
  %v68 = vld [vmem:[%s57 + $0x50] sm:$0xff]
  %v69 = vld [vmem:[%s57 + $0x58] sm:$0xff]
  %v70 = vld [vmem:[%s57 + $0x60] sm:$0xff]
  %v71 = vld [vmem:[%s57 + $0x68] sm:$0xff]
  %v72 = vld [vmem:[%s57 + $0x70] sm:$0xff]
  %v73 = vld [vmem:[%s57 + $0x78] sm:$0xff]
  %v74 = vmax.f32 %v41, %v58
  %v75 = vmax.f32 %v42, %v59
  %v76 = vmax.f32 %v43, %v60
  %v77 = vmax.f32 %v44, %v61
  %v78 = vmax.f32 %v45, %v62
  %v79 = vmax.f32 %v46, %v63
  %v80 = vmax.f32 %v47, %v64
  %v81 = vmax.f32 %v48, %v65
  %v82 = vmax.f32 %v49, %v66
  %v83 = vmax.f32 %v50, %v67
  %v84 = vmax.f32 %v51, %v68
  %v85 = vmax.f32 %v52, %v69
  %v86 = vmax.f32 %v53, %v70
  %v87 = vmax.f32 %v54, %v71
  %v88 = vmax.f32 %v55, %v72
  %v89 = vmax.f32 %v56, %v73
  %s90 = scalar_lea.vmem %s0, 384
  %v91 = vld [vmem:[%s90] sm:$0xff]
  %v92 = vld [vmem:[%s90 + $0x8] sm:$0xff]
  %v93 = vld [vmem:[%s90 + $0x10] sm:$0xff]
  %v94 = vld [vmem:[%s90 + $0x18] sm:$0xff]
  %v95 = vld [vmem:[%s90 + $0x20] sm:$0xff]
  %v96 = vld [vmem:[%s90 + $0x28] sm:$0xff]
  %v97 = vld [vmem:[%s90 + $0x30] sm:$0xff]
  %v98 = vld [vmem:[%s90 + $0x38] sm:$0xff]
  %v99 = vld [vmem:[%s90 + $0x40] sm:$0xff]
  %v100 = vld [vmem:[%s90 + $0x48] sm:$0xff]
  %v101 = vld [vmem:[%s90 + $0x50] sm:$0xff]
  %v102 = vld [vmem:[%s90 + $0x58] sm:$0xff]
  %v103 = vld [vmem:[%s90 + $0x60] sm:$0xff]
  %v104 = vld [vmem:[%s90 + $0x68] sm:$0xff]
  %v105 = vld [vmem:[%s90 + $0x70] sm:$0xff]
  %v106 = vld [vmem:[%s90 + $0x78] sm:$0xff]
  %v107 = vmax.f32 %v74, %v91
  %v108 = vmax.f32 %v75, %v92
  %v109 = vmax.f32 %v76, %v93
  %v110 = vmax.f32 %v77, %v94
  %v111 = vmax.f32 %v78, %v95
  %v112 = vmax.f32 %v79, %v96
  %v113 = vmax.f32 %v80, %v97
  %v114 = vmax.f32 %v81, %v98
  %v115 = vmax.f32 %v82, %v99
  %v116 = vmax.f32 %v83, %v100
  %v117 = vmax.f32 %v84, %v101
  %v118 = vmax.f32 %v85, %v102
  %v119 = vmax.f32 %v86, %v103
  %v120 = vmax.f32 %v87, %v104
  %v121 = vmax.f32 %v88, %v105
  %v122 = vmax.f32 %v89, %v106
  %s123 = scalar_lea.vmem %s0, 512
  %v124 = vld [vmem:[%s123] sm:$0xff]
  %v125 = vld [vmem:[%s123 + $0x8] sm:$0xff]
  %v126 = vld [vmem:[%s123 + $0x10] sm:$0xff]
  %v127 = vld [vmem:[%s123 + $0x18] sm:$0xff]
  %v128 = vld [vmem:[%s123 + $0x20] sm:$0xff]
  %v129 = vld [vmem:[%s123 + $0x28] sm:$0xff]
  %v130 = vld [vmem:[%s123 + $0x30] sm:$0xff]
  %v131 = vld [vmem:[%s123 + $0x38] sm:$0xff]
  %v132 = vld [vmem:[%s123 + $0x40] sm:$0xff]
  %v133 = vld [vmem:[%s123 + $0x48] sm:$0xff]
  %v134 = vld [vmem:[%s123 + $0x50] sm:$0xff]
  %v135 = vld [vmem:[%s123 + $0x58] sm:$0xff]
  %v136 = vld [vmem:[%s123 + $0x60] sm:$0xff]
  %v137 = vld [vmem:[%s123 + $0x68] sm:$0xff]
  %v138 = vld [vmem:[%s123 + $0x70] sm:$0xff]
  %v139 = vld [vmem:[%s123 + $0x78] sm:$0xff]
  %v140 = vmax.f32 %v107, %v124
  %v141 = vmax.f32 %v108, %v125
  %v142 = vmax.f32 %v109, %v126
  %v143 = vmax.f32 %v110, %v127
  %v144 = vmax.f32 %v111, %v128
  %v145 = vmax.f32 %v112, %v129
  %v146 = vmax.f32 %v113, %v130
  %v147 = vmax.f32 %v114, %v131
  %v148 = vmax.f32 %v115, %v132
  %v149 = vmax.f32 %v116, %v133
  %v150 = vmax.f32 %v117, %v134
  %v151 = vmax.f32 %v118, %v135
  %v152 = vmax.f32 %v119, %v136
  %v153 = vmax.f32 %v120, %v137
  %v154 = vmax.f32 %v121, %v138
  %v155 = vmax.f32 %v122, %v139
  %s156 = scalar_lea.vmem %s0, 640
  %v157 = vld [vmem:[%s156] sm:$0xff]
  %v158 = vld [vmem:[%s156 + $0x8] sm:$0xff]
  %v159 = vld [vmem:[%s156 + $0x10] sm:$0xff]
  %v160 = vld [vmem:[%s156 + $0x18] sm:$0xff]
  %v161 = vld [vmem:[%s156 + $0x20] sm:$0xff]
  %v162 = vld [vmem:[%s156 + $0x28] sm:$0xff]
  %v163 = vld [vmem:[%s156 + $0x30] sm:$0xff]
  %v164 = vld [vmem:[%s156 + $0x38] sm:$0xff]
  %v165 = vld [vmem:[%s156 + $0x40] sm:$0xff]
  %v166 = vld [vmem:[%s156 + $0x48] sm:$0xff]
  %v167 = vld [vmem:[%s156 + $0x50] sm:$0xff]
  %v168 = vld [vmem:[%s156 + $0x58] sm:$0xff]
  %v169 = vld [vmem:[%s156 + $0x60] sm:$0xff]
  %v170 = vld [vmem:[%s156 + $0x68] sm:$0xff]
  %v171 = vld [vmem:[%s156 + $0x70] sm:$0xff]
  %v172 = vld [vmem:[%s156 + $0x78] sm:$0xff]
  %v173 = vmax.f32 %v140, %v157
  %v174 = vmax.f32 %v141, %v158
  %v175 = vmax.f32 %v142, %v159
  %v176 = vmax.f32 %v143, %v160
  %v177 = vmax.f32 %v144, %v161
  %v178 = vmax.f32 %v145, %v162
  %v179 = vmax.f32 %v146, %v163
  %v180 = vmax.f32 %v147, %v164
  %v181 = vmax.f32 %v148, %v165
  %v182 = vmax.f32 %v149, %v166
  %v183 = vmax.f32 %v150, %v167
  %v184 = vmax.f32 %v151, %v168
  %v185 = vmax.f32 %v152, %v169
  %v186 = vmax.f32 %v153, %v170
  %v187 = vmax.f32 %v154, %v171
  %v188 = vmax.f32 %v155, %v172
  %s189 = scalar_lea.vmem %s0, 768
  %v190 = vld [vmem:[%s189] sm:$0xff]
  %v191 = vld [vmem:[%s189 + $0x8] sm:$0xff]
  %v192 = vld [vmem:[%s189 + $0x10] sm:$0xff]
  %v193 = vld [vmem:[%s189 + $0x18] sm:$0xff]
  %v194 = vld [vmem:[%s189 + $0x20] sm:$0xff]
  %v195 = vld [vmem:[%s189 + $0x28] sm:$0xff]
  %v196 = vld [vmem:[%s189 + $0x30] sm:$0xff]
  %v197 = vld [vmem:[%s189 + $0x38] sm:$0xff]
  %v198 = vld [vmem:[%s189 + $0x40] sm:$0xff]
  %v199 = vld [vmem:[%s189 + $0x48] sm:$0xff]
  %v200 = vld [vmem:[%s189 + $0x50] sm:$0xff]
  %v201 = vld [vmem:[%s189 + $0x58] sm:$0xff]
  %v202 = vld [vmem:[%s189 + $0x60] sm:$0xff]
  %v203 = vld [vmem:[%s189 + $0x68] sm:$0xff]
  %v204 = vld [vmem:[%s189 + $0x70] sm:$0xff]
  %v205 = vld [vmem:[%s189 + $0x78] sm:$0xff]
  %v206 = vmax.f32 %v173, %v190
  %v207 = vmax.f32 %v174, %v191
  %v208 = vmax.f32 %v175, %v192
  %v209 = vmax.f32 %v176, %v193
  %v210 = vmax.f32 %v177, %v194
  %v211 = vmax.f32 %v178, %v195
  %v212 = vmax.f32 %v179, %v196
  %v213 = vmax.f32 %v180, %v197
  %v214 = vmax.f32 %v181, %v198
  %v215 = vmax.f32 %v182, %v199
  %v216 = vmax.f32 %v183, %v200
  %v217 = vmax.f32 %v184, %v201
  %v218 = vmax.f32 %v185, %v202
  %v219 = vmax.f32 %v186, %v203
  %v220 = vmax.f32 %v187, %v204
  %v221 = vmax.f32 %v188, %v205
  %s222 = scalar_lea.vmem %s0, 896
  %v223 = vld [vmem:[%s222] sm:$0xff]
  %v224 = vld [vmem:[%s222 + $0x8] sm:$0xff]
  %v225 = vld [vmem:[%s222 + $0x10] sm:$0xff]
  %v226 = vld [vmem:[%s222 + $0x18] sm:$0xff]
  %v227 = vld [vmem:[%s222 + $0x20] sm:$0xff]
  %v228 = vld [vmem:[%s222 + $0x28] sm:$0xff]
  %v229 = vld [vmem:[%s222 + $0x30] sm:$0xff]
  %v230 = vld [vmem:[%s222 + $0x38] sm:$0xff]
  %v231 = vld [vmem:[%s222 + $0x40] sm:$0xff]
  %v232 = vld [vmem:[%s222 + $0x48] sm:$0xff]
  %v233 = vld [vmem:[%s222 + $0x50] sm:$0xff]
  %v234 = vld [vmem:[%s222 + $0x58] sm:$0xff]
  %v235 = vld [vmem:[%s222 + $0x60] sm:$0xff]
  %v236 = vld [vmem:[%s222 + $0x68] sm:$0xff]
  %v237 = vld [vmem:[%s222 + $0x70] sm:$0xff]
  %v238 = vld [vmem:[%s222 + $0x78] sm:$0xff]
  %v239 = vmax.f32 %v206, %v223
  %v240 = vmax.f32 %v207, %v224
  %v241 = vmax.f32 %v208, %v225
  %v242 = vmax.f32 %v209, %v226
  %v243 = vmax.f32 %v210, %v227
  %v244 = vmax.f32 %v211, %v228
  %v245 = vmax.f32 %v212, %v229
  %v246 = vmax.f32 %v213, %v230
  %v247 = vmax.f32 %v214, %v231
  %v248 = vmax.f32 %v215, %v232
  %v249 = vmax.f32 %v216, %v233
  %v250 = vmax.f32 %v217, %v234
  %v251 = vmax.f32 %v218, %v235
  %v252 = vmax.f32 %v219, %v236
  %v253 = vmax.f32 %v220, %v237
  %v254 = vmax.f32 %v221, %v238
  %s255 = scalar_lea.vmem %s0, 1024
  %v256 = vld [vmem:[%s255] sm:$0xff]
  %v257 = vld [vmem:[%s255 + $0x8] sm:$0xff]
  %v258 = vld [vmem:[%s255 + $0x10] sm:$0xff]
  %v259 = vld [vmem:[%s255 + $0x18] sm:$0xff]
  %v260 = vld [vmem:[%s255 + $0x20] sm:$0xff]
  %v261 = vld [vmem:[%s255 + $0x28] sm:$0xff]
  %v262 = vld [vmem:[%s255 + $0x30] sm:$0xff]
  %v263 = vld [vmem:[%s255 + $0x38] sm:$0xff]
  %v264 = vld [vmem:[%s255 + $0x40] sm:$0xff]
  %v265 = vld [vmem:[%s255 + $0x48] sm:$0xff]
  %v266 = vld [vmem:[%s255 + $0x50] sm:$0xff]
  %v267 = vld [vmem:[%s255 + $0x58] sm:$0xff]
  %v268 = vld [vmem:[%s255 + $0x60] sm:$0xff]
  %v269 = vld [vmem:[%s255 + $0x68] sm:$0xff]
  %v270 = vld [vmem:[%s255 + $0x70] sm:$0xff]
  %v271 = vld [vmem:[%s255 + $0x78] sm:$0xff]
  %v272 = vmax.f32 %v239, %v256
  %v273 = vmax.f32 %v240, %v257
  %v274 = vmax.f32 %v241, %v258
  %v275 = vmax.f32 %v242, %v259
  %v276 = vmax.f32 %v243, %v260
  %v277 = vmax.f32 %v244, %v261
  %v278 = vmax.f32 %v245, %v262
  %v279 = vmax.f32 %v246, %v263
  %v280 = vmax.f32 %v247, %v264
  %v281 = vmax.f32 %v248, %v265
  %v282 = vmax.f32 %v249, %v266
  %v283 = vmax.f32 %v250, %v267
  %v284 = vmax.f32 %v251, %v268
  %v285 = vmax.f32 %v252, %v269
  %v286 = vmax.f32 %v253, %v270
  %v287 = vmax.f32 %v254, %v271
  %vm288 = vcmask 130048
  %289 = vst.msk [vmem:[%s1] sm:$0xff] %vm288, %v272
  %290 = vst.msk [vmem:[%s1 + $0x8] sm:$0xff] %vm288, %v273
  %291 = vst.msk [vmem:[%s1 + $0x10] sm:$0xff] %vm288, %v274
  %292 = vst.msk [vmem:[%s1 + $0x18] sm:$0xff] %vm288, %v275
  %293 = vst.msk [vmem:[%s1 + $0x20] sm:$0xff] %vm288, %v276
  %294 = vst.msk [vmem:[%s1 + $0x28] sm:$0xff] %vm288, %v277
  %295 = vst.msk [vmem:[%s1 + $0x30] sm:$0xff] %vm288, %v278
  %296 = vst.msk [vmem:[%s1 + $0x38] sm:$0xff] %vm288, %v279
  %297 = vst.msk [vmem:[%s1 + $0x40] sm:$0xff] %vm288, %v280
  %298 = vst.msk [vmem:[%s1 + $0x48] sm:$0xff] %vm288, %v281
  %299 = vst.msk [vmem:[%s1 + $0x50] sm:$0xff] %vm288, %v282
  %300 = vst.msk [vmem:[%s1 + $0x58] sm:$0xff] %vm288, %v283
  %301 = vst.msk [vmem:[%s1 + $0x60] sm:$0xff] %vm288, %v284
  %302 = vst.msk [vmem:[%s1 + $0x68] sm:$0xff] %vm288, %v285
  %303 = vst.msk [vmem:[%s1 + $0x70] sm:$0xff] %vm288, %v286
  %304 = vst.msk [vmem:[%s1 + $0x78] sm:$0xff] %vm288, %v287
  // Predicated region
  $region6: #{impala_cnn_base_forward.20} parent=0 // pred_check
    _
  $region7: #{impala_cnn_base_forward.20} parent=0 // pred_check_branch
    %306 = sbr.rel (0) target = $region9
  $region8: #{impala_cnn_base_forward.20} parent=0 // pred_region
    _
  $region9: #{impala_cnn_base_forward.20} parent=0 // pred_fallthru
    _
  // Predicated region
  $region10: #{impala_cnn_base_forward.20} parent=0 // pred_check
    _
  $region11: #{impala_cnn_base_forward.20} parent=0 // pred_check_branch
    %308 = sbr.rel (0) target = $region13
  $region12: #{impala_cnn_base_forward.20} parent=0 // pred_region
    _
  $region13: #{impala_cnn_base_forward.20} parent=0 // pred_fallthru
    _

// kernel: impala_cnn_base_forward.21
$region0: #{impala_cnn_base_forward.21}
  #allocation0 [shape = 'u32[]', space=smem, size = 0x4, offset = 0x4, fixed_abs, tag = 'smem constant byte address 0x4 - core index']
  #allocation1 [shape = 'u32[144,128]{1,0:T(1,128)}', space=vmem, size = 0x12000, scoped, tag = 'internal scratch']
  %s0 = inlined_call_operand.vmem [shape: bf16[128,144], index: 0, kind: input, shape index: {}]
  %s1 = inlined_call_operand.vmem [shape: bf16[144,16], index: 1, kind: input, shape index: {}]
  %s2 = inlined_call_operand.vmem [shape: f32[1,16], index: 2, kind: input, shape index: {}]
  %s3 = inlined_call_operand.vmem [shape: f32[128,16], index: 3, kind: output, shape index: {}]
  %s4 = sld [smem:[#allocation0]]
  $region22: #{impala_cnn_base_forward.21} parent=0
    _
  %s6 = ssub.s32 1, %s4
  %s7 = scalar_select 0, %s6, %s4
  // Predicated region
  $region2: #{impala_cnn_base_forward.21} parent=0 // pred_check
    _
  $region3: #{impala_cnn_base_forward.21} parent=0 // pred_check_branch
    %9 = sbr.rel (0) target = $region5
  $region4: #{impala_cnn_base_forward.21} parent=0 // pred_region
    _
  $region5: #{impala_cnn_base_forward.21} parent=0 // pred_fallthru
    _
  // Predicated region
  $region6: #{impala_cnn_base_forward.21} parent=0 // pred_check
    _
  $region7: #{impala_cnn_base_forward.21} parent=0 // pred_check_branch
    %11 = sbr.rel (0) target = $region9
  $region8: #{impala_cnn_base_forward.21} parent=0 // pred_region
    _
  $region9: #{impala_cnn_base_forward.21} parent=0 // pred_fallthru
    _
  // Predicated region
  $region10: #{impala_cnn_base_forward.21} parent=0 // pred_check
    _
  $region11: #{impala_cnn_base_forward.21} parent=0 // pred_check_branch
    %13 = sbr.rel (0) target = $region13
  $region12: #{impala_cnn_base_forward.21} parent=0 // pred_region
    _
  $region13: #{impala_cnn_base_forward.21} parent=0 // pred_fallthru
    _
  %v15 = vld [vmem:[%s0] sm:$0xff]
  %v16 = vld [vmem:[%s0 + $0x8] sm:$0xff]
  %v17 = vld [vmem:[%s0 + $0x10] sm:$0xff]
  %v18 = vld [vmem:[%s0 + $0x18] sm:$0xff]
  %v19 = vld [vmem:[%s0 + $0x20] sm:$0xff]
  %v20 = vld [vmem:[%s0 + $0x28] sm:$0xff]
  %v21 = vld [vmem:[%s0 + $0x30] sm:$0xff]
  %v22 = vld [vmem:[%s0 + $0x38] sm:$0xff]
  %v23 = vld [vmem:[%s0 + $0x40] sm:$0xff]
  %v24 = vld [vmem:[%s0 + $0x48] sm:$0xff]
  %v25 = vld [vmem:[%s0 + $0x50] sm:$0xff]
  %v26 = vld [vmem:[%s0 + $0x58] sm:$0xff]
  %v27 = vld [vmem:[%s0 + $0x60] sm:$0xff]
  %v28 = vld [vmem:[%s0 + $0x68] sm:$0xff]
  %v29 = vld [vmem:[%s0 + $0x70] sm:$0xff]
  %v30 = vld [vmem:[%s0 + $0x78] sm:$0xff]
  %v31 = vld [vmem:[%s1] sm:$0xf]
  %v32 = vld [vmem:[%s1 + $0x4] sm:$0xf]
  %v33 = vld [vmem:[%s1 + $0x8] sm:$0xf]
  %v34 = vld [vmem:[%s1 + $0xc] sm:$0xf]
  %v35 = vld [vmem:[%s1 + $0x10] sm:$0xf]
  %v36 = vld [vmem:[%s1 + $0x14] sm:$0xf]
  %v37 = vld [vmem:[%s1 + $0x18] sm:$0xf]
  %v38 = vld [vmem:[%s1 + $0x1c] sm:$0xf]
  %v39 = vld [vmem:[%s1 + $0x20] sm:$0xf]
  %v40 = vld [vmem:[%s1 + $0x24] sm:$0xf]
  %v41 = vld [vmem:[%s1 + $0x28] sm:$0xf]
  %v42 = vld [vmem:[%s1 + $0x2c] sm:$0xf]
  %v43 = vld [vmem:[%s1 + $0x30] sm:$0xf]
  %v44 = vld [vmem:[%s1 + $0x34] sm:$0xf]
  %v45 = vld [vmem:[%s1 + $0x38] sm:$0xf]
  %v46 = vld [vmem:[%s1 + $0x3c] sm:$0xf]
  %v47 = vld [vmem:[%s1 + $0x40] sm:$0xf]
  %v48 = vld [vmem:[%s1 + $0x44] sm:$0xf]
  %v49 = vld [vmem:[%s2] sm:$0x1]
  %v51 = vlaneseq
  %v52 = vshrl.u32 %v51, 7
  %v53 = vsub.s32 0, %v52
  %v54 = vrot.slane %v49, %v53
  %v72 = vunpack.c.l.b16 %v15
  %v73 = vunpack.c.h.b16 %v15
  %v74 = vunpack.c.l.b16 %v16
  %v75 = vunpack.c.h.b16 %v16
  %v76 = vunpack.c.l.b16 %v17
  %v77 = vunpack.c.h.b16 %v17
  %v78 = vunpack.c.l.b16 %v18
  %v79 = vunpack.c.h.b16 %v18
  %v80 = vunpack.c.l.b16 %v19
  %v81 = vunpack.c.h.b16 %v19
  %v82 = vunpack.c.l.b16 %v20
  %v83 = vunpack.c.h.b16 %v20
  %v84 = vunpack.c.l.b16 %v21
  %v85 = vunpack.c.h.b16 %v21
  %v86 = vunpack.c.l.b16 %v22
  %v87 = vunpack.c.h.b16 %v22
  %v88 = vunpack.c.l.b16 %v23
  %v89 = vunpack.c.h.b16 %v23
  %v90 = vunpack.c.l.b16 %v24
  %v91 = vunpack.c.h.b16 %v24
  %v92 = vunpack.c.l.b16 %v25
  %v93 = vunpack.c.h.b16 %v25
  %v94 = vunpack.c.l.b16 %v26
  %v95 = vunpack.c.h.b16 %v26
  %v96 = vunpack.c.l.b16 %v27
  %v97 = vunpack.c.h.b16 %v27
  %v98 = vunpack.c.l.b16 %v28
  %v99 = vunpack.c.h.b16 %v28
  %v100 = vunpack.c.l.b16 %v29
  %v101 = vunpack.c.h.b16 %v29
  %v102 = vunpack.c.l.b16 %v30
  %v103 = vunpack.c.h.b16 %v30
  %v104 = vpack.c.b16 %v74, %v72
  %v105 = vpack.c.b16 %v75, %v73
  %v106 = vpack.c.b16 %v78, %v76
  %v107 = vpack.c.b16 %v79, %v77
  %v108 = vpack.c.b16 %v82, %v80
  %v109 = vpack.c.b16 %v83, %v81
  %v110 = vpack.c.b16 %v86, %v84
  %v111 = vpack.c.b16 %v87, %v85
  %v112 = vpack.c.b16 %v90, %v88
  %v113 = vpack.c.b16 %v91, %v89
  %v114 = vpack.c.b16 %v94, %v92
  %v115 = vpack.c.b16 %v95, %v93
  %v116 = vpack.c.b16 %v98, %v96
  %v117 = vpack.c.b16 %v99, %v97
  %v118 = vpack.c.b16 %v102, %v100
  %v119 = vpack.c.b16 %v103, %v101
  %v146 = vunpack.c.l.b16 %v31
  %v147 = vunpack.c.l.b16 %v32
  %v148 = vunpack.c.l.b16 %v33
  %v149 = vunpack.c.l.b16 %v34
  %v150 = vunpack.c.l.b16 %v35
  %v151 = vunpack.c.l.b16 %v36
  %v152 = vunpack.c.l.b16 %v37
  %v153 = vunpack.c.l.b16 %v38
  %v154 = vunpack.c.l.b16 %v39
  %v155 = vunpack.c.l.b16 %v40
  %v156 = vunpack.c.l.b16 %v41
  %v157 = vunpack.c.l.b16 %v42
  %v158 = vunpack.c.l.b16 %v43
  %v159 = vunpack.c.l.b16 %v44
  %v160 = vunpack.c.l.b16 %v45
  %v161 = vunpack.c.l.b16 %v46
  %v162 = vunpack.c.l.b16 %v47
  %v163 = vunpack.c.l.b16 %v48
  %v164 = vpack.c.b16 %v147, %v146
  %v165 = vpack.c.b16 %v149, %v148
  %v166 = vpack.c.b16 %v151, %v150
  %v167 = vpack.c.b16 %v153, %v152
  %v168 = vpack.c.b16 %v155, %v154
  %v169 = vpack.c.b16 %v157, %v156
  %v170 = vpack.c.b16 %v159, %v158
  %v171 = vpack.c.b16 %v161, %v160
  %v172 = vpack.c.b16 %v163, %v162
  %vm182 = vcmask 130048
  %v184 = vsel %vm182, %v105, 0
  %v187 = vsel %vm182, %v107, 0
  %v190 = vsel %vm182, %v109, 0
  %v193 = vsel %vm182, %v111, 0
  %v196 = vsel %vm182, %v113, 0
  %v199 = vsel %vm182, %v115, 0
  %v202 = vsel %vm182, %v117, 0
  %v205 = vsel %vm182, %v119, 0
  %207 = vmatprep.subr.bf16.mxu0 0
  %208 = vmatpush1.bf16.msra.mxu0 %v171
  %209 = vmatprep.subr.bf16.mxu0 0
  %210 = vmatpush1.bf16.msra.mxu0 %v170
  %211 = vmatprep.subr.bf16.mxu0 0
  %212 = vmatpush1.bf16.msra.mxu0 %v169
  %213 = vmatprep.subr.bf16.mxu0 0
  %214 = vmatpush1.bf16.msra.mxu0 %v168
  %215 = vmatprep.subr.bf16.mxu0 0
  %216 = vmatpush1.bf16.msra.mxu0 %v167
  %217 = vmatprep.subr.bf16.mxu0 0
  %218 = vmatpush1.bf16.msra.mxu0 %v166
  %219 = vmatprep.subr.bf16.mxu0 0
  %220 = vmatpush1.bf16.msra.mxu0 %v165
  %221 = vmatprep.subr.bf16.mxu0 0
  %222 = vmatpush1.bf16.msra.mxu0 %v164
  %223 = vmatprep.subr.bf16.mxu0 0
  %224 = vmatpush2.bf16.msra.mxu0 0
  %225 = vmatprep.subr.bf16.mxu0 0
  %226 = vmatpush2.bf16.msra.mxu0 0
  %227 = vmatprep.subr.bf16.mxu0 0
  %228 = vmatpush2.bf16.msra.mxu0 0
  %229 = vmatprep.subr.bf16.mxu0 0
  %230 = vmatpush2.bf16.msra.mxu0 0
  %231 = vmatprep.subr.bf16.mxu0 0
  %232 = vmatpush2.bf16.msra.mxu0 0
  %233 = vmatprep.subr.bf16.mxu0 0
  %234 = vmatpush2.bf16.msra.mxu0 0
  %235 = vmatprep.subr.bf16.mxu0 0
  %236 = vmatpush2.bf16.msra.mxu0 0
  %237 = vmatprep.subr.bf16.mxu0 0
  %238 = vmatpush2.bf16.msra.mxu0 %v172
  %239 = vmatprep.mubr.bf16.mxu0 %v184
  %240 = vmatmul.mubr.bf16.gmra.mxu0 %v104
  %v241 = vpop.f32.mrf.mxu0
  %v242 = vadd.f32 %v54, %v241
  %v243 = vpop.f32.mrf.mxu0
  %v244 = vpop.f32.mrf.mxu0
  %v245 = vadd.f32 %v54, %v244
  %v246 = vpop.f32.mrf.mxu0
  %247 = vmatprep.mubr.bf16.mxu0 %v187
  %248 = vmatmul.mubr.bf16.gmra.mxu0 %v106
  %v249 = vpop.f32.mrf.mxu0
  %v250 = vadd.f32 %v54, %v249
  %v251 = vpop.f32.mrf.mxu0
  %v252 = vpop.f32.mrf.mxu0
  %v253 = vadd.f32 %v54, %v252
  %v254 = vpop.f32.mrf.mxu0
  %255 = vmatprep.mubr.bf16.mxu0 %v190
  %256 = vmatmul.mubr.bf16.gmra.mxu0 %v108
  %v257 = vpop.f32.mrf.mxu0
  %v258 = vadd.f32 %v54, %v257
  %v259 = vpop.f32.mrf.mxu0
  %v260 = vpop.f32.mrf.mxu0
  %v261 = vadd.f32 %v54, %v260
  %v262 = vpop.f32.mrf.mxu0
  %263 = vmatprep.mubr.bf16.mxu0 %v193
  %264 = vmatmul.mubr.bf16.gmra.mxu0 %v110
  %v265 = vpop.f32.mrf.mxu0
  %v266 = vadd.f32 %v54, %v265
  %v267 = vpop.f32.mrf.mxu0
  %v268 = vpop.f32.mrf.mxu0
  %v269 = vadd.f32 %v54, %v268
  %v270 = vpop.f32.mrf.mxu0
  %271 = vmatprep.mubr.bf16.mxu0 %v196
  %272 = vmatmul.mubr.bf16.gmra.mxu0 %v112
  %v273 = vpop.f32.mrf.mxu0
  %v274 = vadd.f32 %v54, %v273
  %v275 = vpop.f32.mrf.mxu0
  %v276 = vpop.f32.mrf.mxu0
  %v277 = vadd.f32 %v54, %v276
  %v278 = vpop.f32.mrf.mxu0
  %279 = vmatprep.mubr.bf16.mxu0 %v199
  %280 = vmatmul.mubr.bf16.gmra.mxu0 %v114
  %v281 = vpop.f32.mrf.mxu0
  %v282 = vadd.f32 %v54, %v281
  %v283 = vpop.f32.mrf.mxu0
  %v284 = vpop.f32.mrf.mxu0
  %v285 = vadd.f32 %v54, %v284
  %v286 = vpop.f32.mrf.mxu0
  %287 = vmatprep.mubr.bf16.mxu0 %v202
  %288 = vmatmul.mubr.bf16.gmra.mxu0 %v116
  %v289 = vpop.f32.mrf.mxu0
  %v290 = vadd.f32 %v54, %v289
  %v291 = vpop.f32.mrf.mxu0
  %v292 = vpop.f32.mrf.mxu0
  %v293 = vadd.f32 %v54, %v292
  %v294 = vpop.f32.mrf.mxu0
  %295 = vmatprep.mubr.bf16.mxu0 %v205
  %296 = vmatmul.mubr.bf16.gmra.mxu0 %v118
  %v297 = vpop.f32.mrf.mxu0
  %v298 = vadd.f32 %v54, %v297
  %v299 = vpop.f32.mrf.mxu0
  %v300 = vpop.f32.mrf.mxu0
  %v301 = vadd.f32 %v54, %v300
  %v302 = vpop.f32.mrf.mxu0
  %303 = vdwg.mxu0
  %v304 = vmax.f32 %v242, 0.0
  %v305 = vmax.f32 %v245, 0.0
  %v306 = vmax.f32 %v250, 0.0
  %v307 = vmax.f32 %v253, 0.0
  %v308 = vmax.f32 %v258, 0.0
  %v309 = vmax.f32 %v261, 0.0
  %v310 = vmax.f32 %v266, 0.0
  %v311 = vmax.f32 %v269, 0.0
  %v312 = vmax.f32 %v274, 0.0
  %v313 = vmax.f32 %v277, 0.0
  %v314 = vmax.f32 %v282, 0.0
  %v315 = vmax.f32 %v285, 0.0
  %v316 = vmax.f32 %v290, 0.0
  %v317 = vmax.f32 %v293, 0.0
  %v318 = vmax.f32 %v298, 0.0
  %v319 = vmax.f32 %v301, 0.0
  %320 = vst.msk [vmem:[%s3] sm:$0xff] %vm182, %v304
  %321 = vst.msk [vmem:[%s3 + $0x8] sm:$0xff] %vm182, %v305
  %322 = vst.msk [vmem:[%s3 + $0x10] sm:$0xff] %vm182, %v306
  %323 = vst.msk [vmem:[%s3 + $0x18] sm:$0xff] %vm182, %v307
  %324 = vst.msk [vmem:[%s3 + $0x20] sm:$0xff] %vm182, %v308
  %325 = vst.msk [vmem:[%s3 + $0x28] sm:$0xff] %vm182, %v309
  %326 = vst.msk [vmem:[%s3 + $0x30] sm:$0xff] %vm182, %v310
  %327 = vst.msk [vmem:[%s3 + $0x38] sm:$0xff] %vm182, %v311
  %328 = vst.msk [vmem:[%s3 + $0x40] sm:$0xff] %vm182, %v312
  %329 = vst.msk [vmem:[%s3 + $0x48] sm:$0xff] %vm182, %v313
  %330 = vst.msk [vmem:[%s3 + $0x50] sm:$0xff] %vm182, %v314
  %331 = vst.msk [vmem:[%s3 + $0x58] sm:$0xff] %vm182, %v315
  %332 = vst.msk [vmem:[%s3 + $0x60] sm:$0xff] %vm182, %v316
  %333 = vst.msk [vmem:[%s3 + $0x68] sm:$0xff] %vm182, %v317
  %334 = vst.msk [vmem:[%s3 + $0x70] sm:$0xff] %vm182, %v318
  %335 = vst.msk [vmem:[%s3 + $0x78] sm:$0xff] %vm182, %v319
  // Predicated region
  $region14: #{impala_cnn_base_forward.21} parent=0 // pred_check
    _
  $region15: #{impala_cnn_base_forward.21} parent=0 // pred_check_branch
    %337 = sbr.rel (0) target = $region17
  $region16: #{impala_cnn_base_forward.21} parent=0 // pred_region
    _
  $region17: #{impala_cnn_base_forward.21} parent=0 // pred_fallthru
    _
  // Predicated region
  $region18: #{impala_cnn_base_forward.21} parent=0 // pred_check
    _
  $region19: #{impala_cnn_base_forward.21} parent=0 // pred_check_branch
    %339 = sbr.rel (0) target = $region21
  $region20: #{impala_cnn_base_forward.21} parent=0 // pred_region
    _
  $region21: #{impala_cnn_base_forward.21} parent=0 // pred_fallthru
    _

// kernel: impala_cnn_base_forward.22
$region0: #{impala_cnn_base_forward.22}
  #allocation0 [shape = 'u32[]', space=smem, size = 0x4, offset = 0x4, fixed_abs, tag = 'smem constant byte address 0x4 - core index']
  #allocation1 [shape = 'u32[144,128]{1,0:T(1,128)}', space=vmem, size = 0x12000, scoped, tag = 'internal scratch']
  %s0 = inlined_call_operand.vmem [shape: bf16[128,144], index: 0, kind: input, shape index: {}]
  %s1 = inlined_call_operand.vmem [shape: bf16[144,16], index: 1, kind: input, shape index: {}]
  %s2 = inlined_call_operand.vmem [shape: f32[1,16], index: 2, kind: input, shape index: {}]
  %s3 = inlined_call_operand.vmem [shape: f32[128,16], index: 3, kind: input, shape index: {}]
  %s4 = inlined_call_operand.vmem [shape: f32[128,16], index: 4, kind: output, shape index: {}]
  %s5 = sld [smem:[#allocation0]]
  $region26: #{impala_cnn_base_forward.22} parent=0
    _
  %s7 = ssub.s32 1, %s5
  %s8 = scalar_select 0, %s7, %s5
  // Predicated region
  $region2: #{impala_cnn_base_forward.22} parent=0 // pred_check
    _
  $region3: #{impala_cnn_base_forward.22} parent=0 // pred_check_branch
    %10 = sbr.rel (0) target = $region5
  $region4: #{impala_cnn_base_forward.22} parent=0 // pred_region
    _
  $region5: #{impala_cnn_base_forward.22} parent=0 // pred_fallthru
    _
  // Predicated region
  $region6: #{impala_cnn_base_forward.22} parent=0 // pred_check
    _
  $region7: #{impala_cnn_base_forward.22} parent=0 // pred_check_branch
    %12 = sbr.rel (0) target = $region9
  $region8: #{impala_cnn_base_forward.22} parent=0 // pred_region
    _
  $region9: #{impala_cnn_base_forward.22} parent=0 // pred_fallthru
    _
  // Predicated region
  $region10: #{impala_cnn_base_forward.22} parent=0 // pred_check
    _
  $region11: #{impala_cnn_base_forward.22} parent=0 // pred_check_branch
    %14 = sbr.rel (0) target = $region13
  $region12: #{impala_cnn_base_forward.22} parent=0 // pred_region
    _
  $region13: #{impala_cnn_base_forward.22} parent=0 // pred_fallthru
    _
  // Predicated region
  $region14: #{impala_cnn_base_forward.22} parent=0 // pred_check
    _
  $region15: #{impala_cnn_base_forward.22} parent=0 // pred_check_branch
    %16 = sbr.rel (0) target = $region17
  $region16: #{impala_cnn_base_forward.22} parent=0 // pred_region
    _
  $region17: #{impala_cnn_base_forward.22} parent=0 // pred_fallthru
    _
  %v18 = vld [vmem:[%s0] sm:$0xff]
  %v19 = vld [vmem:[%s0 + $0x8] sm:$0xff]
  %v20 = vld [vmem:[%s0 + $0x10] sm:$0xff]
  %v21 = vld [vmem:[%s0 + $0x18] sm:$0xff]
  %v22 = vld [vmem:[%s0 + $0x20] sm:$0xff]
  %v23 = vld [vmem:[%s0 + $0x28] sm:$0xff]
  %v24 = vld [vmem:[%s0 + $0x30] sm:$0xff]
  %v25 = vld [vmem:[%s0 + $0x38] sm:$0xff]
  %v26 = vld [vmem:[%s0 + $0x40] sm:$0xff]
  %v27 = vld [vmem:[%s0 + $0x48] sm:$0xff]
  %v28 = vld [vmem:[%s0 + $0x50] sm:$0xff]
  %v29 = vld [vmem:[%s0 + $0x58] sm:$0xff]
  %v30 = vld [vmem:[%s0 + $0x60] sm:$0xff]
  %v31 = vld [vmem:[%s0 + $0x68] sm:$0xff]
  %v32 = vld [vmem:[%s0 + $0x70] sm:$0xff]
  %v33 = vld [vmem:[%s0 + $0x78] sm:$0xff]
  %v34 = vld [vmem:[%s1] sm:$0xf]
  %v35 = vld [vmem:[%s1 + $0x4] sm:$0xf]
  %v36 = vld [vmem:[%s1 + $0x8] sm:$0xf]
  %v37 = vld [vmem:[%s1 + $0xc] sm:$0xf]
  %v38 = vld [vmem:[%s1 + $0x10] sm:$0xf]
  %v39 = vld [vmem:[%s1 + $0x14] sm:$0xf]
  %v40 = vld [vmem:[%s1 + $0x18] sm:$0xf]
  %v41 = vld [vmem:[%s1 + $0x1c] sm:$0xf]
  %v42 = vld [vmem:[%s1 + $0x20] sm:$0xf]
  %v43 = vld [vmem:[%s1 + $0x24] sm:$0xf]
  %v44 = vld [vmem:[%s1 + $0x28] sm:$0xf]
  %v45 = vld [vmem:[%s1 + $0x2c] sm:$0xf]
  %v46 = vld [vmem:[%s1 + $0x30] sm:$0xf]
  %v47 = vld [vmem:[%s1 + $0x34] sm:$0xf]
  %v48 = vld [vmem:[%s1 + $0x38] sm:$0xf]
  %v49 = vld [vmem:[%s1 + $0x3c] sm:$0xf]
  %v50 = vld [vmem:[%s1 + $0x40] sm:$0xf]
  %v51 = vld [vmem:[%s1 + $0x44] sm:$0xf]
  %v52 = vld [vmem:[%s2] sm:$0x1]
  %v54 = vlaneseq
  %v55 = vshrl.u32 %v54, 7
  %v56 = vsub.s32 0, %v55
  %v57 = vrot.slane %v52, %v56
  %v75 = vunpack.c.l.b16 %v18
  %v76 = vunpack.c.h.b16 %v18
  %v77 = vunpack.c.l.b16 %v19
  %v78 = vunpack.c.h.b16 %v19
  %v79 = vunpack.c.l.b16 %v20
  %v80 = vunpack.c.h.b16 %v20
  %v81 = vunpack.c.l.b16 %v21
  %v82 = vunpack.c.h.b16 %v21
  %v83 = vunpack.c.l.b16 %v22
  %v84 = vunpack.c.h.b16 %v22
  %v85 = vunpack.c.l.b16 %v23
  %v86 = vunpack.c.h.b16 %v23
  %v87 = vunpack.c.l.b16 %v24
  %v88 = vunpack.c.h.b16 %v24
  %v89 = vunpack.c.l.b16 %v25
  %v90 = vunpack.c.h.b16 %v25
  %v91 = vunpack.c.l.b16 %v26
  %v92 = vunpack.c.h.b16 %v26
  %v93 = vunpack.c.l.b16 %v27
  %v94 = vunpack.c.h.b16 %v27
  %v95 = vunpack.c.l.b16 %v28
  %v96 = vunpack.c.h.b16 %v28
  %v97 = vunpack.c.l.b16 %v29
  %v98 = vunpack.c.h.b16 %v29
  %v99 = vunpack.c.l.b16 %v30
  %v100 = vunpack.c.h.b16 %v30
  %v101 = vunpack.c.l.b16 %v31
  %v102 = vunpack.c.h.b16 %v31
  %v103 = vunpack.c.l.b16 %v32
  %v104 = vunpack.c.h.b16 %v32
  %v105 = vunpack.c.l.b16 %v33
  %v106 = vunpack.c.h.b16 %v33
  %v107 = vpack.c.b16 %v77, %v75
  %v108 = vpack.c.b16 %v78, %v76
  %v109 = vpack.c.b16 %v81, %v79
  %v110 = vpack.c.b16 %v82, %v80
  %v111 = vpack.c.b16 %v85, %v83
  %v112 = vpack.c.b16 %v86, %v84
  %v113 = vpack.c.b16 %v89, %v87
  %v114 = vpack.c.b16 %v90, %v88
  %v115 = vpack.c.b16 %v93, %v91
  %v116 = vpack.c.b16 %v94, %v92
  %v117 = vpack.c.b16 %v97, %v95
  %v118 = vpack.c.b16 %v98, %v96
  %v119 = vpack.c.b16 %v101, %v99
  %v120 = vpack.c.b16 %v102, %v100
  %v121 = vpack.c.b16 %v105, %v103
  %v122 = vpack.c.b16 %v106, %v104
  %v149 = vunpack.c.l.b16 %v34
  %v150 = vunpack.c.l.b16 %v35
  %v151 = vunpack.c.l.b16 %v36
  %v152 = vunpack.c.l.b16 %v37
  %v153 = vunpack.c.l.b16 %v38
  %v154 = vunpack.c.l.b16 %v39
  %v155 = vunpack.c.l.b16 %v40
  %v156 = vunpack.c.l.b16 %v41
  %v157 = vunpack.c.l.b16 %v42
  %v158 = vunpack.c.l.b16 %v43
  %v159 = vunpack.c.l.b16 %v44
  %v160 = vunpack.c.l.b16 %v45
  %v161 = vunpack.c.l.b16 %v46
  %v162 = vunpack.c.l.b16 %v47
  %v163 = vunpack.c.l.b16 %v48
  %v164 = vunpack.c.l.b16 %v49
  %v165 = vunpack.c.l.b16 %v50
  %v166 = vunpack.c.l.b16 %v51
  %v167 = vpack.c.b16 %v150, %v149
  %v168 = vpack.c.b16 %v152, %v151
  %v169 = vpack.c.b16 %v154, %v153
  %v170 = vpack.c.b16 %v156, %v155
  %v171 = vpack.c.b16 %v158, %v157
  %v172 = vpack.c.b16 %v160, %v159
  %v173 = vpack.c.b16 %v162, %v161
  %v174 = vpack.c.b16 %v164, %v163
  %v175 = vpack.c.b16 %v166, %v165
  %vm185 = vcmask 130048
  %v187 = vsel %vm185, %v108, 0
  %v190 = vsel %vm185, %v110, 0
  %v193 = vsel %vm185, %v112, 0
  %v196 = vsel %vm185, %v114, 0
  %v199 = vsel %vm185, %v116, 0
  %v202 = vsel %vm185, %v118, 0
  %v205 = vsel %vm185, %v120, 0
  %v208 = vsel %vm185, %v122, 0
  %210 = vmatprep.subr.bf16.mxu0 0
  %211 = vmatpush1.bf16.msra.mxu0 %v174
  %212 = vmatprep.subr.bf16.mxu0 0
  %213 = vmatpush1.bf16.msra.mxu0 %v173
  %214 = vmatprep.subr.bf16.mxu0 0
  %215 = vmatpush1.bf16.msra.mxu0 %v172
  %216 = vmatprep.subr.bf16.mxu0 0
  %217 = vmatpush1.bf16.msra.mxu0 %v171
  %218 = vmatprep.subr.bf16.mxu0 0
  %219 = vmatpush1.bf16.msra.mxu0 %v170
  %220 = vmatprep.subr.bf16.mxu0 0
  %221 = vmatpush1.bf16.msra.mxu0 %v169
  %222 = vmatprep.subr.bf16.mxu0 0
  %223 = vmatpush1.bf16.msra.mxu0 %v168
  %224 = vmatprep.subr.bf16.mxu0 0
  %225 = vmatpush1.bf16.msra.mxu0 %v167
  %226 = vmatprep.subr.bf16.mxu0 0
  %227 = vmatpush2.bf16.msra.mxu0 0
  %228 = vmatprep.subr.bf16.mxu0 0
  %229 = vmatpush2.bf16.msra.mxu0 0
  %230 = vmatprep.subr.bf16.mxu0 0
  %231 = vmatpush2.bf16.msra.mxu0 0
  %232 = vmatprep.subr.bf16.mxu0 0
  %233 = vmatpush2.bf16.msra.mxu0 0
  %234 = vmatprep.subr.bf16.mxu0 0
  %235 = vmatpush2.bf16.msra.mxu0 0
  %236 = vmatprep.subr.bf16.mxu0 0
  %237 = vmatpush2.bf16.msra.mxu0 0
  %238 = vmatprep.subr.bf16.mxu0 0
  %239 = vmatpush2.bf16.msra.mxu0 0
  %240 = vmatprep.subr.bf16.mxu0 0
  %241 = vmatpush2.bf16.msra.mxu0 %v175
  %242 = vmatprep.mubr.bf16.mxu0 %v187
  %243 = vmatmul.mubr.bf16.gmra.mxu0 %v107
  %v244 = vpop.f32.mrf.mxu0
  %v245 = vadd.f32 %v57, %v244
  %v246 = vpop.f32.mrf.mxu0
  %v247 = vpop.f32.mrf.mxu0
  %v248 = vadd.f32 %v57, %v247
  %v249 = vpop.f32.mrf.mxu0
  %250 = vmatprep.mubr.bf16.mxu0 %v190
  %251 = vmatmul.mubr.bf16.gmra.mxu0 %v109
  %v252 = vpop.f32.mrf.mxu0
  %v253 = vadd.f32 %v57, %v252
  %v254 = vpop.f32.mrf.mxu0
  %v255 = vpop.f32.mrf.mxu0
  %v256 = vadd.f32 %v57, %v255
  %v257 = vpop.f32.mrf.mxu0
  %258 = vmatprep.mubr.bf16.mxu0 %v193
  %259 = vmatmul.mubr.bf16.gmra.mxu0 %v111
  %v260 = vpop.f32.mrf.mxu0
  %v261 = vadd.f32 %v57, %v260
  %v262 = vpop.f32.mrf.mxu0
  %v263 = vpop.f32.mrf.mxu0
  %v264 = vadd.f32 %v57, %v263
  %v265 = vpop.f32.mrf.mxu0
  %266 = vmatprep.mubr.bf16.mxu0 %v196
  %267 = vmatmul.mubr.bf16.gmra.mxu0 %v113
  %v268 = vpop.f32.mrf.mxu0
  %v269 = vadd.f32 %v57, %v268
  %v270 = vpop.f32.mrf.mxu0
  %v271 = vpop.f32.mrf.mxu0
  %v272 = vadd.f32 %v57, %v271
  %v273 = vpop.f32.mrf.mxu0
  %274 = vmatprep.mubr.bf16.mxu0 %v199
  %275 = vmatmul.mubr.bf16.gmra.mxu0 %v115
  %v276 = vpop.f32.mrf.mxu0
  %v277 = vadd.f32 %v57, %v276
  %v278 = vpop.f32.mrf.mxu0
  %v279 = vpop.f32.mrf.mxu0
  %v280 = vadd.f32 %v57, %v279
  %v281 = vpop.f32.mrf.mxu0
  %282 = vmatprep.mubr.bf16.mxu0 %v202
  %283 = vmatmul.mubr.bf16.gmra.mxu0 %v117
  %v284 = vpop.f32.mrf.mxu0
  %v285 = vadd.f32 %v57, %v284
  %v286 = vpop.f32.mrf.mxu0
  %v287 = vpop.f32.mrf.mxu0
  %v288 = vadd.f32 %v57, %v287
  %v289 = vpop.f32.mrf.mxu0
  %290 = vmatprep.mubr.bf16.mxu0 %v205
  %291 = vmatmul.mubr.bf16.gmra.mxu0 %v119
  %v292 = vpop.f32.mrf.mxu0
  %v293 = vadd.f32 %v57, %v292
  %v294 = vpop.f32.mrf.mxu0
  %v295 = vpop.f32.mrf.mxu0
  %v296 = vadd.f32 %v57, %v295
  %v297 = vpop.f32.mrf.mxu0
  %298 = vmatprep.mubr.bf16.mxu0 %v208
  %299 = vmatmul.mubr.bf16.gmra.mxu0 %v121
  %v300 = vpop.f32.mrf.mxu0
  %v301 = vadd.f32 %v57, %v300
  %v302 = vpop.f32.mrf.mxu0
  %v303 = vpop.f32.mrf.mxu0
  %v304 = vadd.f32 %v57, %v303
  %v305 = vpop.f32.mrf.mxu0
  %306 = vdwg.mxu0
  %v307 = vld [vmem:[%s3] sm:$0xff]
  %v308 = vld [vmem:[%s3 + $0x8] sm:$0xff]
  %v309 = vld [vmem:[%s3 + $0x10] sm:$0xff]
  %v310 = vld [vmem:[%s3 + $0x18] sm:$0xff]
  %v311 = vld [vmem:[%s3 + $0x20] sm:$0xff]
  %v312 = vld [vmem:[%s3 + $0x28] sm:$0xff]
  %v313 = vld [vmem:[%s3 + $0x30] sm:$0xff]
  %v314 = vld [vmem:[%s3 + $0x38] sm:$0xff]
  %v315 = vld [vmem:[%s3 + $0x40] sm:$0xff]
  %v316 = vld [vmem:[%s3 + $0x48] sm:$0xff]
  %v317 = vld [vmem:[%s3 + $0x50] sm:$0xff]
  %v318 = vld [vmem:[%s3 + $0x58] sm:$0xff]
  %v319 = vld [vmem:[%s3 + $0x60] sm:$0xff]
  %v320 = vld [vmem:[%s3 + $0x68] sm:$0xff]
  %v321 = vld [vmem:[%s3 + $0x70] sm:$0xff]
  %v322 = vld [vmem:[%s3 + $0x78] sm:$0xff]
  %v323 = vadd.f32 %v245, %v307
  %v324 = vadd.f32 %v248, %v308
  %v325 = vadd.f32 %v253, %v309
  %v326 = vadd.f32 %v256, %v310
  %v327 = vadd.f32 %v261, %v311
  %v328 = vadd.f32 %v264, %v312
  %v329 = vadd.f32 %v269, %v313
  %v330 = vadd.f32 %v272, %v314
  %v331 = vadd.f32 %v277, %v315
  %v332 = vadd.f32 %v280, %v316
  %v333 = vadd.f32 %v285, %v317
  %v334 = vadd.f32 %v288, %v318
  %v335 = vadd.f32 %v293, %v319
  %v336 = vadd.f32 %v296, %v320
  %v337 = vadd.f32 %v301, %v321
  %v338 = vadd.f32 %v304, %v322
  %339 = vst.msk [vmem:[%s4] sm:$0xff] %vm185, %v323
  %340 = vst.msk [vmem:[%s4 + $0x8] sm:$0xff] %vm185, %v324
  %341 = vst.msk [vmem:[%s4 + $0x10] sm:$0xff] %vm185, %v325
  %342 = vst.msk [vmem:[%s4 + $0x18] sm:$0xff] %vm185, %v326
  %343 = vst.msk [vmem:[%s4 + $0x20] sm:$0xff] %vm185, %v327
  %344 = vst.msk [vmem:[%s4 + $0x28] sm:$0xff] %vm185, %v328
  %345 = vst.msk [vmem:[%s4 + $0x30] sm:$0xff] %vm185, %v329
  %346 = vst.msk [vmem:[%s4 + $0x38] sm:$0xff] %vm185, %v330
  %347 = vst.msk [vmem:[%s4 + $0x40] sm:$0xff] %vm185, %v331
  %348 = vst.msk [vmem:[%s4 + $0x48] sm:$0xff] %vm185, %v332
  %349 = vst.msk [vmem:[%s4 + $0x50] sm:$0xff] %vm185, %v333
  %350 = vst.msk [vmem:[%s4 + $0x58] sm:$0xff] %vm185, %v334
  %351 = vst.msk [vmem:[%s4 + $0x60] sm:$0xff] %vm185, %v335
  %352 = vst.msk [vmem:[%s4 + $0x68] sm:$0xff] %vm185, %v336
  %353 = vst.msk [vmem:[%s4 + $0x70] sm:$0xff] %vm185, %v337
  %354 = vst.msk [vmem:[%s4 + $0x78] sm:$0xff] %vm185, %v338
  // Predicated region
  $region18: #{impala_cnn_base_forward.22} parent=0 // pred_check
    _
  $region19: #{impala_cnn_base_forward.22} parent=0 // pred_check_branch
    %356 = sbr.rel (0) target = $region21
  $region20: #{impala_cnn_base_forward.22} parent=0 // pred_region
    _
  $region21: #{impala_cnn_base_forward.22} parent=0 // pred_fallthru
    _
  // Predicated region
  $region22: #{impala_cnn_base_forward.22} parent=0 // pred_check
    _
  $region23: #{impala_cnn_base_forward.22} parent=0 // pred_check_branch
    %358 = sbr.rel (0) target = $region25
  $region24: #{impala_cnn_base_forward.22} parent=0 // pred_region
    _
  $region25: #{impala_cnn_base_forward.22} parent=0 // pred_fallthru
    _

// kernel: impala_cnn_base_forward.25
$region0: #{impala_cnn_base_forward.25}
  #allocation0 [shape = 'u32[]', space=smem, size = 0x4, offset = 0x4, fixed_abs, tag = 'smem constant byte address 0x4 - core index']
  #allocation1 [shape = 'u32[144,128]{1,0:T(1,128)}', space=vmem, size = 0x12000, scoped, tag = 'internal scratch']
  %s0 = inlined_call_operand.vmem [shape: bf16[128,144], index: 0, kind: input, shape index: {}]
  %s1 = inlined_call_operand.vmem [shape: bf16[144,32], index: 1, kind: input, shape index: {}]
  %s2 = inlined_call_operand.vmem [shape: f32[1,32], index: 2, kind: input, shape index: {}]
  %s3 = inlined_call_operand.vmem [shape: f32[128,32], index: 3, kind: output, shape index: {}]
  %s4 = sld [smem:[#allocation0]]
  $region22: #{impala_cnn_base_forward.25} parent=0
    _
  %s6 = ssub.s32 1, %s4
  %s7 = scalar_select 0, %s6, %s4
  // Predicated region
  $region2: #{impala_cnn_base_forward.25} parent=0 // pred_check
    _
  $region3: #{impala_cnn_base_forward.25} parent=0 // pred_check_branch
    %9 = sbr.rel (0) target = $region5
  $region4: #{impala_cnn_base_forward.25} parent=0 // pred_region
    _
  $region5: #{impala_cnn_base_forward.25} parent=0 // pred_fallthru
    _
  // Predicated region
  $region6: #{impala_cnn_base_forward.25} parent=0 // pred_check
    _
  $region7: #{impala_cnn_base_forward.25} parent=0 // pred_check_branch
    %11 = sbr.rel (0) target = $region9
  $region8: #{impala_cnn_base_forward.25} parent=0 // pred_region
    _
  $region9: #{impala_cnn_base_forward.25} parent=0 // pred_fallthru
    _
  // Predicated region
  $region10: #{impala_cnn_base_forward.25} parent=0 // pred_check
    _
  $region11: #{impala_cnn_base_forward.25} parent=0 // pred_check_branch
    %13 = sbr.rel (0) target = $region13
  $region12: #{impala_cnn_base_forward.25} parent=0 // pred_region
    _
  $region13: #{impala_cnn_base_forward.25} parent=0 // pred_fallthru
    _
  %v15 = vld [vmem:[%s0] sm:$0xff]
  %v16 = vld [vmem:[%s0 + $0x8] sm:$0xff]
  %v17 = vld [vmem:[%s0 + $0x10] sm:$0xff]
  %v18 = vld [vmem:[%s0 + $0x18] sm:$0xff]
  %v19 = vld [vmem:[%s0 + $0x20] sm:$0xff]
  %v20 = vld [vmem:[%s0 + $0x28] sm:$0xff]
  %v21 = vld [vmem:[%s0 + $0x30] sm:$0xff]
  %v22 = vld [vmem:[%s0 + $0x38] sm:$0xff]
  %v23 = vld [vmem:[%s0 + $0x40] sm:$0xff]
  %v24 = vld [vmem:[%s0 + $0x48] sm:$0xff]
  %v25 = vld [vmem:[%s0 + $0x50] sm:$0xff]
  %v26 = vld [vmem:[%s0 + $0x58] sm:$0xff]
  %v27 = vld [vmem:[%s0 + $0x60] sm:$0xff]
  %v28 = vld [vmem:[%s0 + $0x68] sm:$0xff]
  %v29 = vld [vmem:[%s0 + $0x70] sm:$0xff]
  %v30 = vld [vmem:[%s0 + $0x78] sm:$0xff]
  %v31 = vld [vmem:[%s1] sm:$0xf]
  %v32 = vld [vmem:[%s1 + $0x4] sm:$0xf]
  %v33 = vld [vmem:[%s1 + $0x8] sm:$0xf]
  %v34 = vld [vmem:[%s1 + $0xc] sm:$0xf]
  %v35 = vld [vmem:[%s1 + $0x10] sm:$0xf]
  %v36 = vld [vmem:[%s1 + $0x14] sm:$0xf]
  %v37 = vld [vmem:[%s1 + $0x18] sm:$0xf]
  %v38 = vld [vmem:[%s1 + $0x1c] sm:$0xf]
  %v39 = vld [vmem:[%s1 + $0x20] sm:$0xf]
  %v40 = vld [vmem:[%s1 + $0x24] sm:$0xf]
  %v41 = vld [vmem:[%s1 + $0x28] sm:$0xf]
  %v42 = vld [vmem:[%s1 + $0x2c] sm:$0xf]
  %v43 = vld [vmem:[%s1 + $0x30] sm:$0xf]
  %v44 = vld [vmem:[%s1 + $0x34] sm:$0xf]
  %v45 = vld [vmem:[%s1 + $0x38] sm:$0xf]
  %v46 = vld [vmem:[%s1 + $0x3c] sm:$0xf]
  %v47 = vld [vmem:[%s1 + $0x40] sm:$0xf]
  %v48 = vld [vmem:[%s1 + $0x44] sm:$0xf]
  %v49 = vld [vmem:[%s2] sm:$0x1]
  %v51 = vlaneseq
  %v52 = vshrl.u32 %v51, 7
  %v53 = vsub.s32 0, %v52
  %v54 = vrot.slane %v49, %v53
  %v72 = vunpack.c.l.b16 %v15
  %v73 = vunpack.c.h.b16 %v15
  %v74 = vunpack.c.l.b16 %v16
  %v75 = vunpack.c.h.b16 %v16
  %v76 = vunpack.c.l.b16 %v17
  %v77 = vunpack.c.h.b16 %v17
  %v78 = vunpack.c.l.b16 %v18
  %v79 = vunpack.c.h.b16 %v18
  %v80 = vunpack.c.l.b16 %v19
  %v81 = vunpack.c.h.b16 %v19
  %v82 = vunpack.c.l.b16 %v20
  %v83 = vunpack.c.h.b16 %v20
  %v84 = vunpack.c.l.b16 %v21
  %v85 = vunpack.c.h.b16 %v21
  %v86 = vunpack.c.l.b16 %v22
  %v87 = vunpack.c.h.b16 %v22
  %v88 = vunpack.c.l.b16 %v23
  %v89 = vunpack.c.h.b16 %v23
  %v90 = vunpack.c.l.b16 %v24
  %v91 = vunpack.c.h.b16 %v24
  %v92 = vunpack.c.l.b16 %v25
  %v93 = vunpack.c.h.b16 %v25
  %v94 = vunpack.c.l.b16 %v26
  %v95 = vunpack.c.h.b16 %v26
  %v96 = vunpack.c.l.b16 %v27
  %v97 = vunpack.c.h.b16 %v27
  %v98 = vunpack.c.l.b16 %v28
  %v99 = vunpack.c.h.b16 %v28
  %v100 = vunpack.c.l.b16 %v29
  %v101 = vunpack.c.h.b16 %v29
  %v102 = vunpack.c.l.b16 %v30
  %v103 = vunpack.c.h.b16 %v30
  %v104 = vpack.c.b16 %v74, %v72
  %v105 = vpack.c.b16 %v75, %v73
  %v106 = vpack.c.b16 %v78, %v76
  %v107 = vpack.c.b16 %v79, %v77
  %v108 = vpack.c.b16 %v82, %v80
  %v109 = vpack.c.b16 %v83, %v81
  %v110 = vpack.c.b16 %v86, %v84
  %v111 = vpack.c.b16 %v87, %v85
  %v112 = vpack.c.b16 %v90, %v88
  %v113 = vpack.c.b16 %v91, %v89
  %v114 = vpack.c.b16 %v94, %v92
  %v115 = vpack.c.b16 %v95, %v93
  %v116 = vpack.c.b16 %v98, %v96
  %v117 = vpack.c.b16 %v99, %v97
  %v118 = vpack.c.b16 %v102, %v100
  %v119 = vpack.c.b16 %v103, %v101
  %v146 = vunpack.c.l.b16 %v31
  %v147 = vunpack.c.l.b16 %v32
  %v148 = vunpack.c.l.b16 %v33
  %v149 = vunpack.c.l.b16 %v34
  %v150 = vunpack.c.l.b16 %v35
  %v151 = vunpack.c.l.b16 %v36
  %v152 = vunpack.c.l.b16 %v37
  %v153 = vunpack.c.l.b16 %v38
  %v154 = vunpack.c.l.b16 %v39
  %v155 = vunpack.c.l.b16 %v40
  %v156 = vunpack.c.l.b16 %v41
  %v157 = vunpack.c.l.b16 %v42
  %v158 = vunpack.c.l.b16 %v43
  %v159 = vunpack.c.l.b16 %v44
  %v160 = vunpack.c.l.b16 %v45
  %v161 = vunpack.c.l.b16 %v46
  %v162 = vunpack.c.l.b16 %v47
  %v163 = vunpack.c.l.b16 %v48
  %v164 = vpack.c.b16 %v147, %v146
  %v165 = vpack.c.b16 %v149, %v148
  %v166 = vpack.c.b16 %v151, %v150
  %v167 = vpack.c.b16 %v153, %v152
  %v168 = vpack.c.b16 %v155, %v154
  %v169 = vpack.c.b16 %v157, %v156
  %v170 = vpack.c.b16 %v159, %v158
  %v171 = vpack.c.b16 %v161, %v160
  %v172 = vpack.c.b16 %v163, %v162
  %vm182 = vcmask 130048
  %v184 = vsel %vm182, %v105, 0
  %v187 = vsel %vm182, %v107, 0
  %v190 = vsel %vm182, %v109, 0
  %v193 = vsel %vm182, %v111, 0
  %v196 = vsel %vm182, %v113, 0
  %v199 = vsel %vm182, %v115, 0
  %v202 = vsel %vm182, %v117, 0
  %v205 = vsel %vm182, %v119, 0
  %207 = vmatprep.subr.bf16.mxu0 0
  %208 = vmatpush1.bf16.msra.mxu0 %v171
  %209 = vmatprep.subr.bf16.mxu0 0
  %210 = vmatpush1.bf16.msra.mxu0 %v170
  %211 = vmatprep.subr.bf16.mxu0 0
  %212 = vmatpush1.bf16.msra.mxu0 %v169
  %213 = vmatprep.subr.bf16.mxu0 0
  %214 = vmatpush1.bf16.msra.mxu0 %v168
  %215 = vmatprep.subr.bf16.mxu0 0
  %216 = vmatpush1.bf16.msra.mxu0 %v167
  %217 = vmatprep.subr.bf16.mxu0 0
  %218 = vmatpush1.bf16.msra.mxu0 %v166
  %219 = vmatprep.subr.bf16.mxu0 0
  %220 = vmatpush1.bf16.msra.mxu0 %v165
  %221 = vmatprep.subr.bf16.mxu0 0
  %222 = vmatpush1.bf16.msra.mxu0 %v164
  %223 = vmatprep.subr.bf16.mxu0 0
  %224 = vmatpush2.bf16.msra.mxu0 0
  %225 = vmatprep.subr.bf16.mxu0 0
  %226 = vmatpush2.bf16.msra.mxu0 0
  %227 = vmatprep.subr.bf16.mxu0 0
  %228 = vmatpush2.bf16.msra.mxu0 0
  %229 = vmatprep.subr.bf16.mxu0 0
  %230 = vmatpush2.bf16.msra.mxu0 0
  %231 = vmatprep.subr.bf16.mxu0 0
  %232 = vmatpush2.bf16.msra.mxu0 0
  %233 = vmatprep.subr.bf16.mxu0 0
  %234 = vmatpush2.bf16.msra.mxu0 0
  %235 = vmatprep.subr.bf16.mxu0 0
  %236 = vmatpush2.bf16.msra.mxu0 0
  %237 = vmatprep.subr.bf16.mxu0 0
  %238 = vmatpush2.bf16.msra.mxu0 %v172
  %239 = vmatprep.mubr.bf16.mxu0 %v184
  %240 = vmatmul.mubr.bf16.gmra.mxu0 %v104
  %v241 = vpop.f32.mrf.mxu0
  %v242 = vadd.f32 %v54, %v241
  %v243 = vpop.f32.mrf.mxu0
  %v244 = vpop.f32.mrf.mxu0
  %v245 = vadd.f32 %v54, %v244
  %v246 = vpop.f32.mrf.mxu0
  %247 = vmatprep.mubr.bf16.mxu0 %v187
  %248 = vmatmul.mubr.bf16.gmra.mxu0 %v106
  %v249 = vpop.f32.mrf.mxu0
  %v250 = vadd.f32 %v54, %v249
  %v251 = vpop.f32.mrf.mxu0
  %v252 = vpop.f32.mrf.mxu0
  %v253 = vadd.f32 %v54, %v252
  %v254 = vpop.f32.mrf.mxu0
  %255 = vmatprep.mubr.bf16.mxu0 %v190
  %256 = vmatmul.mubr.bf16.gmra.mxu0 %v108
  %v257 = vpop.f32.mrf.mxu0
  %v258 = vadd.f32 %v54, %v257
  %v259 = vpop.f32.mrf.mxu0
  %v260 = vpop.f32.mrf.mxu0
  %v261 = vadd.f32 %v54, %v260
  %v262 = vpop.f32.mrf.mxu0
  %263 = vmatprep.mubr.bf16.mxu0 %v193
  %264 = vmatmul.mubr.bf16.gmra.mxu0 %v110
  %v265 = vpop.f32.mrf.mxu0
  %v266 = vadd.f32 %v54, %v265
  %v267 = vpop.f32.mrf.mxu0
  %v268 = vpop.f32.mrf.mxu0
  %v269 = vadd.f32 %v54, %v268
  %v270 = vpop.f32.mrf.mxu0
  %271 = vmatprep.mubr.bf16.mxu0 %v196
  %272 = vmatmul.mubr.bf16.gmra.mxu0 %v112
  %v273 = vpop.f32.mrf.mxu0
  %v274 = vadd.f32 %v54, %v273
  %v275 = vpop.f32.mrf.mxu0
  %v276 = vpop.f32.mrf.mxu0
  %v277 = vadd.f32 %v54, %v276
  %v278 = vpop.f32.mrf.mxu0
  %279 = vmatprep.mubr.bf16.mxu0 %v199
  %280 = vmatmul.mubr.bf16.gmra.mxu0 %v114
  %v281 = vpop.f32.mrf.mxu0
  %v282 = vadd.f32 %v54, %v281
  %v283 = vpop.f32.mrf.mxu0
  %v284 = vpop.f32.mrf.mxu0
  %v285 = vadd.f32 %v54, %v284
  %v286 = vpop.f32.mrf.mxu0
  %287 = vmatprep.mubr.bf16.mxu0 %v202
  %288 = vmatmul.mubr.bf16.gmra.mxu0 %v116
  %v289 = vpop.f32.mrf.mxu0
  %v290 = vadd.f32 %v54, %v289
  %v291 = vpop.f32.mrf.mxu0
  %v292 = vpop.f32.mrf.mxu0
  %v293 = vadd.f32 %v54, %v292
  %v294 = vpop.f32.mrf.mxu0
  %295 = vmatprep.mubr.bf16.mxu0 %v205
  %296 = vmatmul.mubr.bf16.gmra.mxu0 %v118
  %v297 = vpop.f32.mrf.mxu0
  %v298 = vadd.f32 %v54, %v297
  %v299 = vpop.f32.mrf.mxu0
  %v300 = vpop.f32.mrf.mxu0
  %v301 = vadd.f32 %v54, %v300
  %v302 = vpop.f32.mrf.mxu0
  %303 = vdwg.mxu0
  %vm304 = vcmask 261120
  %305 = vst.msk [vmem:[%s3] sm:$0xff] %vm304, %v242
  %306 = vst.msk [vmem:[%s3 + $0x8] sm:$0xff] %vm304, %v245
  %307 = vst.msk [vmem:[%s3 + $0x10] sm:$0xff] %vm304, %v250
  %308 = vst.msk [vmem:[%s3 + $0x18] sm:$0xff] %vm304, %v253
  %309 = vst.msk [vmem:[%s3 + $0x20] sm:$0xff] %vm304, %v258
  %310 = vst.msk [vmem:[%s3 + $0x28] sm:$0xff] %vm304, %v261
  %311 = vst.msk [vmem:[%s3 + $0x30] sm:$0xff] %vm304, %v266
  %312 = vst.msk [vmem:[%s3 + $0x38] sm:$0xff] %vm304, %v269
  %313 = vst.msk [vmem:[%s3 + $0x40] sm:$0xff] %vm304, %v274
  %314 = vst.msk [vmem:[%s3 + $0x48] sm:$0xff] %vm304, %v277
  %315 = vst.msk [vmem:[%s3 + $0x50] sm:$0xff] %vm304, %v282
  %316 = vst.msk [vmem:[%s3 + $0x58] sm:$0xff] %vm304, %v285
  %317 = vst.msk [vmem:[%s3 + $0x60] sm:$0xff] %vm304, %v290
  %318 = vst.msk [vmem:[%s3 + $0x68] sm:$0xff] %vm304, %v293
  %319 = vst.msk [vmem:[%s3 + $0x70] sm:$0xff] %vm304, %v298
  %320 = vst.msk [vmem:[%s3 + $0x78] sm:$0xff] %vm304, %v301
  // Predicated region
  $region14: #{impala_cnn_base_forward.25} parent=0 // pred_check
    _
  $region15: #{impala_cnn_base_forward.25} parent=0 // pred_check_branch
    %322 = sbr.rel (0) target = $region17
  $region16: #{impala_cnn_base_forward.25} parent=0 // pred_region
    _
  $region17: #{impala_cnn_base_forward.25} parent=0 // pred_fallthru
    _
  // Predicated region
  $region18: #{impala_cnn_base_forward.25} parent=0 // pred_check
    _
  $region19: #{impala_cnn_base_forward.25} parent=0 // pred_check_branch
    %324 = sbr.rel (0) target = $region21
  $region20: #{impala_cnn_base_forward.25} parent=0 // pred_region
    _
  $region21: #{impala_cnn_base_forward.25} parent=0 // pred_fallthru
    _

// kernel: impala_cnn_base_forward.26
$region0: #{impala_cnn_base_forward.26}
  #allocation0 [shape = 'u32[]', space=smem, size = 0x4, offset = 0x4, fixed_abs, tag = 'smem constant byte address 0x4 - core index']
  #allocation1 [shape = 'u32[144,128]{1,0:T(1,128)}', space=vmem, size = 0x12000, scoped, tag = 'internal scratch']
  %s0 = inlined_call_operand.vmem [shape: f32[9,32,32], index: 0, kind: input, shape index: {}]
  %s1 = inlined_call_operand.vmem [shape: f32[32,32], index: 1, kind: output, shape index: {}]
  %s2 = sld [smem:[#allocation0]]
  $region14: #{impala_cnn_base_forward.26} parent=0
    _
  %s4 = ssub.s32 1, %s2
  %s5 = scalar_select 0, %s4, %s2
  // Predicated region
  $region2: #{impala_cnn_base_forward.26} parent=0 // pred_check
    _
  $region3: #{impala_cnn_base_forward.26} parent=0 // pred_check_branch
    %7 = sbr.rel (0) target = $region5
  $region4: #{impala_cnn_base_forward.26} parent=0 // pred_region
    _
  $region5: #{impala_cnn_base_forward.26} parent=0 // pred_fallthru
    _
  %v8 = vld [vmem:[%s0] sm:$0xff]
  %v9 = vld [vmem:[%s0 + $0x8] sm:$0xff]
  %v10 = vld [vmem:[%s0 + $0x10] sm:$0xff]
  %v11 = vld [vmem:[%s0 + $0x18] sm:$0xff]
  %s12 = scalar_lea.vmem %s0, 32
  %v13 = vld [vmem:[%s12] sm:$0xff]
  %v14 = vld [vmem:[%s12 + $0x8] sm:$0xff]
  %v15 = vld [vmem:[%s12 + $0x10] sm:$0xff]
  %v16 = vld [vmem:[%s12 + $0x18] sm:$0xff]
  %v17 = vmax.f32 %v8, %v13
  %v18 = vmax.f32 %v9, %v14
  %v19 = vmax.f32 %v10, %v15
  %v20 = vmax.f32 %v11, %v16
  %s21 = scalar_lea.vmem %s0, 64
  %v22 = vld [vmem:[%s21] sm:$0xff]
  %v23 = vld [vmem:[%s21 + $0x8] sm:$0xff]
  %v24 = vld [vmem:[%s21 + $0x10] sm:$0xff]
  %v25 = vld [vmem:[%s21 + $0x18] sm:$0xff]
  %v26 = vmax.f32 %v17, %v22
  %v27 = vmax.f32 %v18, %v23
  %v28 = vmax.f32 %v19, %v24
  %v29 = vmax.f32 %v20, %v25
  %s30 = scalar_lea.vmem %s0, 96
  %v31 = vld [vmem:[%s30] sm:$0xff]
  %v32 = vld [vmem:[%s30 + $0x8] sm:$0xff]
  %v33 = vld [vmem:[%s30 + $0x10] sm:$0xff]
  %v34 = vld [vmem:[%s30 + $0x18] sm:$0xff]
  %v35 = vmax.f32 %v26, %v31
  %v36 = vmax.f32 %v27, %v32
  %v37 = vmax.f32 %v28, %v33
  %v38 = vmax.f32 %v29, %v34
  %s39 = scalar_lea.vmem %s0, 128
  %v40 = vld [vmem:[%s39] sm:$0xff]
  %v41 = vld [vmem:[%s39 + $0x8] sm:$0xff]
  %v42 = vld [vmem:[%s39 + $0x10] sm:$0xff]
  %v43 = vld [vmem:[%s39 + $0x18] sm:$0xff]
  %v44 = vmax.f32 %v35, %v40
  %v45 = vmax.f32 %v36, %v41
  %v46 = vmax.f32 %v37, %v42
  %v47 = vmax.f32 %v38, %v43
  %s48 = scalar_lea.vmem %s0, 160
  %v49 = vld [vmem:[%s48] sm:$0xff]
  %v50 = vld [vmem:[%s48 + $0x8] sm:$0xff]
  %v51 = vld [vmem:[%s48 + $0x10] sm:$0xff]
  %v52 = vld [vmem:[%s48 + $0x18] sm:$0xff]
  %v53 = vmax.f32 %v44, %v49
  %v54 = vmax.f32 %v45, %v50
  %v55 = vmax.f32 %v46, %v51
  %v56 = vmax.f32 %v47, %v52
  %s57 = scalar_lea.vmem %s0, 192
  %v58 = vld [vmem:[%s57] sm:$0xff]
  %v59 = vld [vmem:[%s57 + $0x8] sm:$0xff]
  %v60 = vld [vmem:[%s57 + $0x10] sm:$0xff]
  %v61 = vld [vmem:[%s57 + $0x18] sm:$0xff]
  %v62 = vmax.f32 %v53, %v58
  %v63 = vmax.f32 %v54, %v59
  %v64 = vmax.f32 %v55, %v60
  %v65 = vmax.f32 %v56, %v61
  %s66 = scalar_lea.vmem %s0, 224
  %v67 = vld [vmem:[%s66] sm:$0xff]
  %v68 = vld [vmem:[%s66 + $0x8] sm:$0xff]
  %v69 = vld [vmem:[%s66 + $0x10] sm:$0xff]
  %v70 = vld [vmem:[%s66 + $0x18] sm:$0xff]
  %v71 = vmax.f32 %v62, %v67
  %v72 = vmax.f32 %v63, %v68
  %v73 = vmax.f32 %v64, %v69
  %v74 = vmax.f32 %v65, %v70
  %s75 = scalar_lea.vmem %s0, 256
  %v76 = vld [vmem:[%s75] sm:$0xff]
  %v77 = vld [vmem:[%s75 + $0x8] sm:$0xff]
  %v78 = vld [vmem:[%s75 + $0x10] sm:$0xff]
  %v79 = vld [vmem:[%s75 + $0x18] sm:$0xff]
  %v80 = vmax.f32 %v71, %v76
  %v81 = vmax.f32 %v72, %v77
  %v82 = vmax.f32 %v73, %v78
  %v83 = vmax.f32 %v74, %v79
  %vm84 = vcmask 261120
  %85 = vst.msk [vmem:[%s1] sm:$0xff] %vm84, %v80
  %86 = vst.msk [vmem:[%s1 + $0x8] sm:$0xff] %vm84, %v81
  %87 = vst.msk [vmem:[%s1 + $0x10] sm:$0xff] %vm84, %v82
  %88 = vst.msk [vmem:[%s1 + $0x18] sm:$0xff] %vm84, %v83
  // Predicated region
  $region6: #{impala_cnn_base_forward.26} parent=0 // pred_check
    _
  $region7: #{impala_cnn_base_forward.26} parent=0 // pred_check_branch
    %90 = sbr.rel (0) target = $region9
  $region8: #{impala_cnn_base_forward.26} parent=0 // pred_region
    _
  $region9: #{impala_cnn_base_forward.26} parent=0 // pred_fallthru
    _
  // Predicated region
  $region10: #{impala_cnn_base_forward.26} parent=0 // pred_check
    _
  $region11: #{impala_cnn_base_forward.26} parent=0 // pred_check_branch
    %92 = sbr.rel (0) target = $region13
  $region12: #{impala_cnn_base_forward.26} parent=0 // pred_region
    _
  $region13: #{impala_cnn_base_forward.26} parent=0 // pred_fallthru
    _

// kernel: impala_cnn_base_forward.27
$region0: #{impala_cnn_base_forward.27}
  #allocation0 [shape = 'u32[]', space=smem, size = 0x4, offset = 0x4, fixed_abs, tag = 'smem constant byte address 0x4 - core index']
  #allocation1 [shape = 'u32[144,128]{1,0:T(1,128)}', space=vmem, size = 0x12000, scoped, tag = 'internal scratch']
  %s0 = inlined_call_operand.vmem [shape: bf16[32,288], index: 0, kind: input, shape index: {}]
  %s1 = inlined_call_operand.vmem [shape: bf16[288,32], index: 1, kind: input, shape index: {}]
  %s2 = inlined_call_operand.vmem [shape: f32[1,32], index: 2, kind: input, shape index: {}]
  %s3 = inlined_call_operand.vmem [shape: f32[32,32], index: 3, kind: output, shape index: {}]
  %s4 = sld [smem:[#allocation0]]
  $region22: #{impala_cnn_base_forward.27} parent=0
    _
  %s6 = ssub.s32 1, %s4
  %s7 = scalar_select 0, %s6, %s4
  // Predicated region
  $region2: #{impala_cnn_base_forward.27} parent=0 // pred_check
    _
  $region3: #{impala_cnn_base_forward.27} parent=0 // pred_check_branch
    %9 = sbr.rel (0) target = $region5
  $region4: #{impala_cnn_base_forward.27} parent=0 // pred_region
    _
  $region5: #{impala_cnn_base_forward.27} parent=0 // pred_fallthru
    _
  // Predicated region
  $region6: #{impala_cnn_base_forward.27} parent=0 // pred_check
    _
  $region7: #{impala_cnn_base_forward.27} parent=0 // pred_check_branch
    %11 = sbr.rel (0) target = $region9
  $region8: #{impala_cnn_base_forward.27} parent=0 // pred_region
    _
  $region9: #{impala_cnn_base_forward.27} parent=0 // pred_fallthru
    _
  // Predicated region
  $region10: #{impala_cnn_base_forward.27} parent=0 // pred_check
    _
  $region11: #{impala_cnn_base_forward.27} parent=0 // pred_check_branch
    %13 = sbr.rel (0) target = $region13
  $region12: #{impala_cnn_base_forward.27} parent=0 // pred_region
    _
  $region13: #{impala_cnn_base_forward.27} parent=0 // pred_fallthru
    _
  %v15 = vld [vmem:[%s0] sm:$0xff]
  %v16 = vld [vmem:[%s0 + $0x8] sm:$0xf]
  %v17 = vld [vmem:[%s0 + $0xc] sm:$0xff]
  %v18 = vld [vmem:[%s0 + $0x14] sm:$0xf]
  %v19 = vld [vmem:[%s0 + $0x18] sm:$0xff]
  %v20 = vld [vmem:[%s0 + $0x20] sm:$0xf]
  %v21 = vld [vmem:[%s0 + $0x24] sm:$0xff]
  %v22 = vld [vmem:[%s0 + $0x2c] sm:$0xf]
  %v23 = vld [vmem:[%s1] sm:$0xf]
  %v24 = vld [vmem:[%s1 + $0x4] sm:$0xf]
  %v25 = vld [vmem:[%s1 + $0x8] sm:$0xf]
  %v26 = vld [vmem:[%s1 + $0xc] sm:$0xf]
  %v27 = vld [vmem:[%s1 + $0x10] sm:$0xf]
  %v28 = vld [vmem:[%s1 + $0x14] sm:$0xf]
  %v29 = vld [vmem:[%s1 + $0x18] sm:$0xf]
  %v30 = vld [vmem:[%s1 + $0x1c] sm:$0xf]
  %v31 = vld [vmem:[%s1 + $0x20] sm:$0xf]
  %v32 = vld [vmem:[%s1 + $0x24] sm:$0xf]
  %v33 = vld [vmem:[%s1 + $0x28] sm:$0xf]
  %v34 = vld [vmem:[%s1 + $0x2c] sm:$0xf]
  %v35 = vld [vmem:[%s1 + $0x30] sm:$0xf]
  %v36 = vld [vmem:[%s1 + $0x34] sm:$0xf]
  %v37 = vld [vmem:[%s1 + $0x38] sm:$0xf]
  %v38 = vld [vmem:[%s1 + $0x3c] sm:$0xf]
  %v39 = vld [vmem:[%s1 + $0x40] sm:$0xf]
  %v40 = vld [vmem:[%s1 + $0x44] sm:$0xf]
  %v41 = vld [vmem:[%s1 + $0x48] sm:$0xf]
  %v42 = vld [vmem:[%s1 + $0x4c] sm:$0xf]
  %v43 = vld [vmem:[%s1 + $0x50] sm:$0xf]
  %v44 = vld [vmem:[%s1 + $0x54] sm:$0xf]
  %v45 = vld [vmem:[%s1 + $0x58] sm:$0xf]
  %v46 = vld [vmem:[%s1 + $0x5c] sm:$0xf]
  %v47 = vld [vmem:[%s1 + $0x60] sm:$0xf]
  %v48 = vld [vmem:[%s1 + $0x64] sm:$0xf]
  %v49 = vld [vmem:[%s1 + $0x68] sm:$0xf]
  %v50 = vld [vmem:[%s1 + $0x6c] sm:$0xf]
  %v51 = vld [vmem:[%s1 + $0x70] sm:$0xf]
  %v52 = vld [vmem:[%s1 + $0x74] sm:$0xf]
  %v53 = vld [vmem:[%s1 + $0x78] sm:$0xf]
  %v54 = vld [vmem:[%s1 + $0x7c] sm:$0xf]
  %v55 = vld [vmem:[%s1 + $0x80] sm:$0xf]
  %v56 = vld [vmem:[%s1 + $0x84] sm:$0xf]
  %v57 = vld [vmem:[%s1 + $0x88] sm:$0xf]
  %v58 = vld [vmem:[%s1 + $0x8c] sm:$0xf]
  %v59 = vld [vmem:[%s2] sm:$0x1]
  %v61 = vlaneseq
  %v62 = vshrl.u32 %v61, 7
  %v63 = vsub.s32 0, %v62
  %v64 = vrot.slane %v59, %v63
  %v74 = vunpack.c.l.b16 %v15
  %v75 = vunpack.c.h.b16 %v15
  %v76 = vunpack.c.l.b16 %v16
  %v77 = vunpack.c.l.b16 %v17
  %v78 = vunpack.c.h.b16 %v17
  %v79 = vunpack.c.l.b16 %v18
  %v80 = vunpack.c.l.b16 %v19
  %v81 = vunpack.c.h.b16 %v19
  %v82 = vunpack.c.l.b16 %v20
  %v83 = vunpack.c.l.b16 %v21
  %v84 = vunpack.c.h.b16 %v21
  %v85 = vunpack.c.l.b16 %v22
  %v86 = vpack.c.b16 %v77, %v74
  %v87 = vpack.c.b16 %v78, %v75
  %v88 = vpack.c.b16 %v79, %v76
  %v89 = vpack.c.b16 %v83, %v80
  %v90 = vpack.c.b16 %v84, %v81
  %v91 = vpack.c.b16 %v85, %v82
  %v132 = vunpack.c.l.b16 %v23
  %v133 = vunpack.c.l.b16 %v24
  %v134 = vunpack.c.l.b16 %v25
  %v135 = vunpack.c.l.b16 %v26
  %v136 = vunpack.c.l.b16 %v27
  %v137 = vunpack.c.l.b16 %v28
  %v138 = vunpack.c.l.b16 %v29
  %v139 = vunpack.c.l.b16 %v30
  %v140 = vunpack.c.l.b16 %v31
  %v141 = vunpack.c.l.b16 %v32
  %v142 = vunpack.c.l.b16 %v33
  %v143 = vunpack.c.l.b16 %v34
  %v144 = vunpack.c.l.b16 %v35
  %v145 = vunpack.c.l.b16 %v36
  %v146 = vunpack.c.l.b16 %v37
  %v147 = vunpack.c.l.b16 %v38
  %v148 = vunpack.c.l.b16 %v39
  %v149 = vunpack.c.l.b16 %v40
  %v150 = vunpack.c.l.b16 %v41
  %v151 = vunpack.c.l.b16 %v42
  %v152 = vunpack.c.l.b16 %v43
  %v153 = vunpack.c.l.b16 %v44
  %v154 = vunpack.c.l.b16 %v45
  %v155 = vunpack.c.l.b16 %v46
  %v156 = vunpack.c.l.b16 %v47
  %v157 = vunpack.c.l.b16 %v48
  %v158 = vunpack.c.l.b16 %v49
  %v159 = vunpack.c.l.b16 %v50
  %v160 = vunpack.c.l.b16 %v51
  %v161 = vunpack.c.l.b16 %v52
  %v162 = vunpack.c.l.b16 %v53
  %v163 = vunpack.c.l.b16 %v54
  %v164 = vunpack.c.l.b16 %v55
  %v165 = vunpack.c.l.b16 %v56
  %v166 = vunpack.c.l.b16 %v57
  %v167 = vunpack.c.l.b16 %v58
  %v168 = vpack.c.b16 %v133, %v132
  %v169 = vpack.c.b16 %v135, %v134
  %v170 = vpack.c.b16 %v137, %v136
  %v171 = vpack.c.b16 %v139, %v138
  %v172 = vpack.c.b16 %v141, %v140
  %v173 = vpack.c.b16 %v143, %v142
  %v174 = vpack.c.b16 %v145, %v144
  %v175 = vpack.c.b16 %v147, %v146
  %v176 = vpack.c.b16 %v149, %v148
  %v177 = vpack.c.b16 %v151, %v150
  %v178 = vpack.c.b16 %v153, %v152
  %v179 = vpack.c.b16 %v155, %v154
  %v180 = vpack.c.b16 %v157, %v156
  %v181 = vpack.c.b16 %v159, %v158
  %v182 = vpack.c.b16 %v161, %v160
  %v183 = vpack.c.b16 %v163, %v162
  %v184 = vpack.c.b16 %v165, %v164
  %v185 = vpack.c.b16 %v167, %v166
  %vm204 = vcmask 261120
  %v206 = vsel %vm204, %v88, 0
  %v209 = vsel %vm204, %v91, 0
  %211 = vmatprep.subr.bf16.mxu0 0
  %212 = vmatpush1.bf16.msra.mxu0 %v175
  %213 = vmatprep.subr.bf16.mxu0 0
  %214 = vmatpush1.bf16.msra.mxu0 %v174
  %215 = vmatprep.subr.bf16.mxu0 0
  %216 = vmatpush1.bf16.msra.mxu0 %v173
  %217 = vmatprep.subr.bf16.mxu0 0
  %218 = vmatpush1.bf16.msra.mxu0 %v172
  %219 = vmatprep.subr.bf16.mxu0 0
  %220 = vmatpush1.bf16.msra.mxu0 %v171
  %221 = vmatprep.subr.bf16.mxu0 0
  %222 = vmatpush1.bf16.msra.mxu0 %v170
  %223 = vmatprep.subr.bf16.mxu0 0
  %224 = vmatpush1.bf16.msra.mxu0 %v169
  %225 = vmatprep.subr.bf16.mxu0 0
  %226 = vmatpush1.bf16.msra.mxu0 %v168
  %227 = vmatprep.subr.bf16.mxu0 0
  %228 = vmatpush2.bf16.msra.mxu0 %v183
  %229 = vmatprep.subr.bf16.mxu0 0
  %230 = vmatpush2.bf16.msra.mxu0 %v182
  %231 = vmatprep.subr.bf16.mxu0 0
  %232 = vmatpush2.bf16.msra.mxu0 %v181
  %233 = vmatprep.subr.bf16.mxu0 0
  %234 = vmatpush2.bf16.msra.mxu0 %v180
  %235 = vmatprep.subr.bf16.mxu0 0
  %236 = vmatpush2.bf16.msra.mxu0 %v179
  %237 = vmatprep.subr.bf16.mxu0 0
  %238 = vmatpush2.bf16.msra.mxu0 %v178
  %239 = vmatprep.subr.bf16.mxu0 0
  %240 = vmatpush2.bf16.msra.mxu0 %v177
  %241 = vmatprep.subr.bf16.mxu0 0
  %242 = vmatpush2.bf16.msra.mxu0 %v176
  %243 = vmatprep.mubr.bf16.mxu0 %v87
  %244 = vmatmul.mubr.bf16.gmra.mxu0 %v86
  %v245 = vpop.f32.mrf.mxu0
  %v246 = vadd.f32 %v64, %v245
  %v247 = vpop.f32.mrf.mxu0
  %v248 = vpop.f32.mrf.mxu0
  %v249 = vadd.f32 %v64, %v248
  %v250 = vpop.f32.mrf.mxu0
  %251 = vmatprep.mubr.bf16.mxu0 %v90
  %252 = vmatmul.mubr.bf16.gmra.mxu0 %v89
  %v253 = vpop.f32.mrf.mxu0
  %v254 = vadd.f32 %v64, %v253
  %v255 = vpop.f32.mrf.mxu0
  %v256 = vpop.f32.mrf.mxu0
  %v257 = vadd.f32 %v64, %v256
  %v258 = vpop.f32.mrf.mxu0
  %259 = vdwg.mxu0
  %260 = vmatprep.subr.bf16.mxu0 0
  %261 = vmatpush1.bf16.msra.mxu0 0
  %262 = vmatprep.subr.bf16.mxu0 0
  %263 = vmatpush1.bf16.msra.mxu0 0
  %264 = vmatprep.subr.bf16.mxu0 0
  %265 = vmatpush1.bf16.msra.mxu0 0
  %266 = vmatprep.subr.bf16.mxu0 0
  %267 = vmatpush1.bf16.msra.mxu0 0
  %268 = vmatprep.subr.bf16.mxu0 0
  %269 = vmatpush1.bf16.msra.mxu0 0
  %270 = vmatprep.subr.bf16.mxu0 0
  %271 = vmatpush1.bf16.msra.mxu0 0
  %272 = vmatprep.subr.bf16.mxu0 0
  %273 = vmatpush1.bf16.msra.mxu0 %v185
  %274 = vmatprep.subr.bf16.mxu0 0
  %275 = vmatpush1.bf16.msra.mxu0 %v184
  %276 = vmatprep.subr.bf16.mxu0 0
  %277 = vmatpush2.bf16.msra.mxu0 0
  %278 = vmatprep.subr.bf16.mxu0 0
  %279 = vmatpush2.bf16.msra.mxu0 0
  %280 = vmatprep.subr.bf16.mxu0 0
  %281 = vmatpush2.bf16.msra.mxu0 0
  %282 = vmatprep.subr.bf16.mxu0 0
  %283 = vmatpush2.bf16.msra.mxu0 0
  %284 = vmatprep.subr.bf16.mxu0 0
  %285 = vmatpush2.bf16.msra.mxu0 0
  %286 = vmatprep.subr.bf16.mxu0 0
  %287 = vmatpush2.bf16.msra.mxu0 0
  %288 = vmatprep.subr.bf16.mxu0 0
  %289 = vmatpush2.bf16.msra.mxu0 0
  %290 = vmatprep.subr.bf16.mxu0 0
  %291 = vmatpush2.bf16.msra.mxu0 0
  %292 = vmatprep.mubr.bf16.mxu0 0
  %293 = vmatmul.mubr.bf16.gmra.mxu0 %v206
  %v294 = vpop.f32.mrf.mxu0
  %v295 = vadd.f32 %v246, %v294
  %v296 = vpop.f32.mrf.mxu0
  %v297 = vpop.f32.mrf.mxu0
  %v298 = vadd.f32 %v249, %v297
  %v299 = vpop.f32.mrf.mxu0
  %300 = vmatprep.mubr.bf16.mxu0 0
  %301 = vmatmul.mubr.bf16.gmra.mxu0 %v209
  %v302 = vpop.f32.mrf.mxu0
  %v303 = vadd.f32 %v254, %v302
  %v304 = vpop.f32.mrf.mxu0
  %v305 = vpop.f32.mrf.mxu0
  %v306 = vadd.f32 %v257, %v305
  %v307 = vpop.f32.mrf.mxu0
  %308 = vdwg.mxu0
  %v309 = vmax.f32 %v295, 0.0
  %v310 = vmax.f32 %v298, 0.0
  %v311 = vmax.f32 %v303, 0.0
  %v312 = vmax.f32 %v306, 0.0
  %313 = vst.msk [vmem:[%s3] sm:$0xff] %vm204, %v309
  %314 = vst.msk [vmem:[%s3 + $0x8] sm:$0xff] %vm204, %v310
  %315 = vst.msk [vmem:[%s3 + $0x10] sm:$0xff] %vm204, %v311
  %316 = vst.msk [vmem:[%s3 + $0x18] sm:$0xff] %vm204, %v312
  // Predicated region
  $region14: #{impala_cnn_base_forward.27} parent=0 // pred_check
    _
  $region15: #{impala_cnn_base_forward.27} parent=0 // pred_check_branch
    %318 = sbr.rel (0) target = $region17
  $region16: #{impala_cnn_base_forward.27} parent=0 // pred_region
    _
  $region17: #{impala_cnn_base_forward.27} parent=0 // pred_fallthru
    _
  // Predicated region
  $region18: #{impala_cnn_base_forward.27} parent=0 // pred_check
    _
  $region19: #{impala_cnn_base_forward.27} parent=0 // pred_check_branch
    %320 = sbr.rel (0) target = $region21
  $region20: #{impala_cnn_base_forward.27} parent=0 // pred_region
    _
  $region21: #{impala_cnn_base_forward.27} parent=0 // pred_fallthru
    _

// kernel: impala_cnn_base_forward.31
$region0: #{impala_cnn_base_forward.31}
  #allocation0 [shape = 'u32[]', space=smem, size = 0x4, offset = 0x4, fixed_abs, tag = 'smem constant byte address 0x4 - core index']
  #allocation1 [shape = 'u32[144,128]{1,0:T(1,128)}', space=vmem, size = 0x12000, scoped, tag = 'internal scratch']
  %s0 = inlined_call_operand.vmem [shape: bf16[32,288], index: 0, kind: input, shape index: {}]
  %s1 = inlined_call_operand.vmem [shape: bf16[288,32], index: 1, kind: input, shape index: {}]
  %s2 = inlined_call_operand.vmem [shape: f32[1,32], index: 2, kind: input, shape index: {}]
  %s3 = inlined_call_operand.vmem [shape: f32[32,32], index: 3, kind: output, shape index: {}]
  %s4 = sld [smem:[#allocation0]]
  $region22: #{impala_cnn_base_forward.31} parent=0
    _
  %s6 = ssub.s32 1, %s4
  %s7 = scalar_select 0, %s6, %s4
  // Predicated region
  $region2: #{impala_cnn_base_forward.31} parent=0 // pred_check
    _
  $region3: #{impala_cnn_base_forward.31} parent=0 // pred_check_branch
    %9 = sbr.rel (0) target = $region5
  $region4: #{impala_cnn_base_forward.31} parent=0 // pred_region
    _
  $region5: #{impala_cnn_base_forward.31} parent=0 // pred_fallthru
    _
  // Predicated region
  $region6: #{impala_cnn_base_forward.31} parent=0 // pred_check
    _
  $region7: #{impala_cnn_base_forward.31} parent=0 // pred_check_branch
    %11 = sbr.rel (0) target = $region9
  $region8: #{impala_cnn_base_forward.31} parent=0 // pred_region
    _
  $region9: #{impala_cnn_base_forward.31} parent=0 // pred_fallthru
    _
  // Predicated region
  $region10: #{impala_cnn_base_forward.31} parent=0 // pred_check
    _
  $region11: #{impala_cnn_base_forward.31} parent=0 // pred_check_branch
    %13 = sbr.rel (0) target = $region13
  $region12: #{impala_cnn_base_forward.31} parent=0 // pred_region
    _
  $region13: #{impala_cnn_base_forward.31} parent=0 // pred_fallthru
    _
  %v15 = vld [vmem:[%s0] sm:$0xff]
  %v16 = vld [vmem:[%s0 + $0x8] sm:$0xf]
  %v17 = vld [vmem:[%s0 + $0xc] sm:$0xff]
  %v18 = vld [vmem:[%s0 + $0x14] sm:$0xf]
  %v19 = vld [vmem:[%s0 + $0x18] sm:$0xff]
  %v20 = vld [vmem:[%s0 + $0x20] sm:$0xf]
  %v21 = vld [vmem:[%s0 + $0x24] sm:$0xff]
  %v22 = vld [vmem:[%s0 + $0x2c] sm:$0xf]
  %v23 = vld [vmem:[%s1] sm:$0xf]
  %v24 = vld [vmem:[%s1 + $0x4] sm:$0xf]
  %v25 = vld [vmem:[%s1 + $0x8] sm:$0xf]
  %v26 = vld [vmem:[%s1 + $0xc] sm:$0xf]
  %v27 = vld [vmem:[%s1 + $0x10] sm:$0xf]
  %v28 = vld [vmem:[%s1 + $0x14] sm:$0xf]
  %v29 = vld [vmem:[%s1 + $0x18] sm:$0xf]
  %v30 = vld [vmem:[%s1 + $0x1c] sm:$0xf]
  %v31 = vld [vmem:[%s1 + $0x20] sm:$0xf]
  %v32 = vld [vmem:[%s1 + $0x24] sm:$0xf]
  %v33 = vld [vmem:[%s1 + $0x28] sm:$0xf]
  %v34 = vld [vmem:[%s1 + $0x2c] sm:$0xf]
  %v35 = vld [vmem:[%s1 + $0x30] sm:$0xf]
  %v36 = vld [vmem:[%s1 + $0x34] sm:$0xf]
  %v37 = vld [vmem:[%s1 + $0x38] sm:$0xf]
  %v38 = vld [vmem:[%s1 + $0x3c] sm:$0xf]
  %v39 = vld [vmem:[%s1 + $0x40] sm:$0xf]
  %v40 = vld [vmem:[%s1 + $0x44] sm:$0xf]
  %v41 = vld [vmem:[%s1 + $0x48] sm:$0xf]
  %v42 = vld [vmem:[%s1 + $0x4c] sm:$0xf]
  %v43 = vld [vmem:[%s1 + $0x50] sm:$0xf]
  %v44 = vld [vmem:[%s1 + $0x54] sm:$0xf]
  %v45 = vld [vmem:[%s1 + $0x58] sm:$0xf]
  %v46 = vld [vmem:[%s1 + $0x5c] sm:$0xf]
  %v47 = vld [vmem:[%s1 + $0x60] sm:$0xf]
  %v48 = vld [vmem:[%s1 + $0x64] sm:$0xf]
  %v49 = vld [vmem:[%s1 + $0x68] sm:$0xf]
  %v50 = vld [vmem:[%s1 + $0x6c] sm:$0xf]
  %v51 = vld [vmem:[%s1 + $0x70] sm:$0xf]
  %v52 = vld [vmem:[%s1 + $0x74] sm:$0xf]
  %v53 = vld [vmem:[%s1 + $0x78] sm:$0xf]
  %v54 = vld [vmem:[%s1 + $0x7c] sm:$0xf]
  %v55 = vld [vmem:[%s1 + $0x80] sm:$0xf]
  %v56 = vld [vmem:[%s1 + $0x84] sm:$0xf]
  %v57 = vld [vmem:[%s1 + $0x88] sm:$0xf]
  %v58 = vld [vmem:[%s1 + $0x8c] sm:$0xf]
  %v59 = vld [vmem:[%s2] sm:$0x1]
  %v61 = vlaneseq
  %v62 = vshrl.u32 %v61, 7
  %v63 = vsub.s32 0, %v62
  %v64 = vrot.slane %v59, %v63
  %v74 = vunpack.c.l.b16 %v15
  %v75 = vunpack.c.h.b16 %v15
  %v76 = vunpack.c.l.b16 %v16
  %v77 = vunpack.c.l.b16 %v17
  %v78 = vunpack.c.h.b16 %v17
  %v79 = vunpack.c.l.b16 %v18
  %v80 = vunpack.c.l.b16 %v19
  %v81 = vunpack.c.h.b16 %v19
  %v82 = vunpack.c.l.b16 %v20
  %v83 = vunpack.c.l.b16 %v21
  %v84 = vunpack.c.h.b16 %v21
  %v85 = vunpack.c.l.b16 %v22
  %v86 = vpack.c.b16 %v77, %v74
  %v87 = vpack.c.b16 %v78, %v75
  %v88 = vpack.c.b16 %v79, %v76
  %v89 = vpack.c.b16 %v83, %v80
  %v90 = vpack.c.b16 %v84, %v81
  %v91 = vpack.c.b16 %v85, %v82
  %v132 = vunpack.c.l.b16 %v23
  %v133 = vunpack.c.l.b16 %v24
  %v134 = vunpack.c.l.b16 %v25
  %v135 = vunpack.c.l.b16 %v26
  %v136 = vunpack.c.l.b16 %v27
  %v137 = vunpack.c.l.b16 %v28
  %v138 = vunpack.c.l.b16 %v29
  %v139 = vunpack.c.l.b16 %v30
  %v140 = vunpack.c.l.b16 %v31
  %v141 = vunpack.c.l.b16 %v32
  %v142 = vunpack.c.l.b16 %v33
  %v143 = vunpack.c.l.b16 %v34
  %v144 = vunpack.c.l.b16 %v35
  %v145 = vunpack.c.l.b16 %v36
  %v146 = vunpack.c.l.b16 %v37
  %v147 = vunpack.c.l.b16 %v38
  %v148 = vunpack.c.l.b16 %v39
  %v149 = vunpack.c.l.b16 %v40
  %v150 = vunpack.c.l.b16 %v41
  %v151 = vunpack.c.l.b16 %v42
  %v152 = vunpack.c.l.b16 %v43
  %v153 = vunpack.c.l.b16 %v44
  %v154 = vunpack.c.l.b16 %v45
  %v155 = vunpack.c.l.b16 %v46
  %v156 = vunpack.c.l.b16 %v47
  %v157 = vunpack.c.l.b16 %v48
  %v158 = vunpack.c.l.b16 %v49
  %v159 = vunpack.c.l.b16 %v50
  %v160 = vunpack.c.l.b16 %v51
  %v161 = vunpack.c.l.b16 %v52
  %v162 = vunpack.c.l.b16 %v53
  %v163 = vunpack.c.l.b16 %v54
  %v164 = vunpack.c.l.b16 %v55
  %v165 = vunpack.c.l.b16 %v56
  %v166 = vunpack.c.l.b16 %v57
  %v167 = vunpack.c.l.b16 %v58
  %v168 = vpack.c.b16 %v133, %v132
  %v169 = vpack.c.b16 %v135, %v134
  %v170 = vpack.c.b16 %v137, %v136
  %v171 = vpack.c.b16 %v139, %v138
  %v172 = vpack.c.b16 %v141, %v140
  %v173 = vpack.c.b16 %v143, %v142
  %v174 = vpack.c.b16 %v145, %v144
  %v175 = vpack.c.b16 %v147, %v146
  %v176 = vpack.c.b16 %v149, %v148
  %v177 = vpack.c.b16 %v151, %v150
  %v178 = vpack.c.b16 %v153, %v152
  %v179 = vpack.c.b16 %v155, %v154
  %v180 = vpack.c.b16 %v157, %v156
  %v181 = vpack.c.b16 %v159, %v158
  %v182 = vpack.c.b16 %v161, %v160
  %v183 = vpack.c.b16 %v163, %v162
  %v184 = vpack.c.b16 %v165, %v164
  %v185 = vpack.c.b16 %v167, %v166
  %vm204 = vcmask 261120
  %v206 = vsel %vm204, %v88, 0
  %v209 = vsel %vm204, %v91, 0
  %211 = vmatprep.subr.bf16.mxu0 0
  %212 = vmatpush1.bf16.msra.mxu0 %v175
  %213 = vmatprep.subr.bf16.mxu0 0
  %214 = vmatpush1.bf16.msra.mxu0 %v174
  %215 = vmatprep.subr.bf16.mxu0 0
  %216 = vmatpush1.bf16.msra.mxu0 %v173
  %217 = vmatprep.subr.bf16.mxu0 0
  %218 = vmatpush1.bf16.msra.mxu0 %v172
  %219 = vmatprep.subr.bf16.mxu0 0
  %220 = vmatpush1.bf16.msra.mxu0 %v171
  %221 = vmatprep.subr.bf16.mxu0 0
  %222 = vmatpush1.bf16.msra.mxu0 %v170
  %223 = vmatprep.subr.bf16.mxu0 0
  %224 = vmatpush1.bf16.msra.mxu0 %v169
  %225 = vmatprep.subr.bf16.mxu0 0
  %226 = vmatpush1.bf16.msra.mxu0 %v168
  %227 = vmatprep.subr.bf16.mxu0 0
  %228 = vmatpush2.bf16.msra.mxu0 %v183
  %229 = vmatprep.subr.bf16.mxu0 0
  %230 = vmatpush2.bf16.msra.mxu0 %v182
  %231 = vmatprep.subr.bf16.mxu0 0
  %232 = vmatpush2.bf16.msra.mxu0 %v181
  %233 = vmatprep.subr.bf16.mxu0 0
  %234 = vmatpush2.bf16.msra.mxu0 %v180
  %235 = vmatprep.subr.bf16.mxu0 0
  %236 = vmatpush2.bf16.msra.mxu0 %v179
  %237 = vmatprep.subr.bf16.mxu0 0
  %238 = vmatpush2.bf16.msra.mxu0 %v178
  %239 = vmatprep.subr.bf16.mxu0 0
  %240 = vmatpush2.bf16.msra.mxu0 %v177
  %241 = vmatprep.subr.bf16.mxu0 0
  %242 = vmatpush2.bf16.msra.mxu0 %v176
  %243 = vmatprep.mubr.bf16.mxu0 %v87
  %244 = vmatmul.mubr.bf16.gmra.mxu0 %v86
  %v245 = vpop.f32.mrf.mxu0
  %v246 = vadd.f32 %v64, %v245
  %v247 = vpop.f32.mrf.mxu0
  %v248 = vpop.f32.mrf.mxu0
  %v249 = vadd.f32 %v64, %v248
  %v250 = vpop.f32.mrf.mxu0
  %251 = vmatprep.mubr.bf16.mxu0 %v90
  %252 = vmatmul.mubr.bf16.gmra.mxu0 %v89
  %v253 = vpop.f32.mrf.mxu0
  %v254 = vadd.f32 %v64, %v253
  %v255 = vpop.f32.mrf.mxu0
  %v256 = vpop.f32.mrf.mxu0
  %v257 = vadd.f32 %v64, %v256
  %v258 = vpop.f32.mrf.mxu0
  %259 = vdwg.mxu0
  %260 = vmatprep.subr.bf16.mxu0 0
  %261 = vmatpush1.bf16.msra.mxu0 0
  %262 = vmatprep.subr.bf16.mxu0 0
  %263 = vmatpush1.bf16.msra.mxu0 0
  %264 = vmatprep.subr.bf16.mxu0 0
  %265 = vmatpush1.bf16.msra.mxu0 0
  %266 = vmatprep.subr.bf16.mxu0 0
  %267 = vmatpush1.bf16.msra.mxu0 0
  %268 = vmatprep.subr.bf16.mxu0 0
  %269 = vmatpush1.bf16.msra.mxu0 0
  %270 = vmatprep.subr.bf16.mxu0 0
  %271 = vmatpush1.bf16.msra.mxu0 0
  %272 = vmatprep.subr.bf16.mxu0 0
  %273 = vmatpush1.bf16.msra.mxu0 %v185
  %274 = vmatprep.subr.bf16.mxu0 0
  %275 = vmatpush1.bf16.msra.mxu0 %v184
  %276 = vmatprep.subr.bf16.mxu0 0
  %277 = vmatpush2.bf16.msra.mxu0 0
  %278 = vmatprep.subr.bf16.mxu0 0
  %279 = vmatpush2.bf16.msra.mxu0 0
  %280 = vmatprep.subr.bf16.mxu0 0
  %281 = vmatpush2.bf16.msra.mxu0 0
  %282 = vmatprep.subr.bf16.mxu0 0
  %283 = vmatpush2.bf16.msra.mxu0 0
  %284 = vmatprep.subr.bf16.mxu0 0
  %285 = vmatpush2.bf16.msra.mxu0 0
  %286 = vmatprep.subr.bf16.mxu0 0
  %287 = vmatpush2.bf16.msra.mxu0 0
  %288 = vmatprep.subr.bf16.mxu0 0
  %289 = vmatpush2.bf16.msra.mxu0 0
  %290 = vmatprep.subr.bf16.mxu0 0
  %291 = vmatpush2.bf16.msra.mxu0 0
  %292 = vmatprep.mubr.bf16.mxu0 0
  %293 = vmatmul.mubr.bf16.gmra.mxu0 %v206
  %v294 = vpop.f32.mrf.mxu0
  %v295 = vadd.f32 %v246, %v294
  %v296 = vpop.f32.mrf.mxu0
  %v297 = vpop.f32.mrf.mxu0
  %v298 = vadd.f32 %v249, %v297
  %v299 = vpop.f32.mrf.mxu0
  %300 = vmatprep.mubr.bf16.mxu0 0
  %301 = vmatmul.mubr.bf16.gmra.mxu0 %v209
  %v302 = vpop.f32.mrf.mxu0
  %v303 = vadd.f32 %v254, %v302
  %v304 = vpop.f32.mrf.mxu0
  %v305 = vpop.f32.mrf.mxu0
  %v306 = vadd.f32 %v257, %v305
  %v307 = vpop.f32.mrf.mxu0
  %308 = vdwg.mxu0
  %309 = vst.msk [vmem:[%s3] sm:$0xff] %vm204, %v295
  %310 = vst.msk [vmem:[%s3 + $0x8] sm:$0xff] %vm204, %v298
  %311 = vst.msk [vmem:[%s3 + $0x10] sm:$0xff] %vm204, %v303
  %312 = vst.msk [vmem:[%s3 + $0x18] sm:$0xff] %vm204, %v306
  // Predicated region
  $region14: #{impala_cnn_base_forward.31} parent=0 // pred_check
    _
  $region15: #{impala_cnn_base_forward.31} parent=0 // pred_check_branch
    %314 = sbr.rel (0) target = $region17
  $region16: #{impala_cnn_base_forward.31} parent=0 // pred_region
    _
  $region17: #{impala_cnn_base_forward.31} parent=0 // pred_fallthru
    _
  // Predicated region
  $region18: #{impala_cnn_base_forward.31} parent=0 // pred_check
    _
  $region19: #{impala_cnn_base_forward.31} parent=0 // pred_check_branch
    %316 = sbr.rel (0) target = $region21
  $region20: #{impala_cnn_base_forward.31} parent=0 // pred_region
    _
  $region21: #{impala_cnn_base_forward.31} parent=0 // pred_fallthru
    _

// kernel: impala_cnn_base_forward.28
$region0: #{impala_cnn_base_forward.28}
  #allocation0 [shape = 'u32[]', space=smem, size = 0x4, offset = 0x4, fixed_abs, tag = 'smem constant byte address 0x4 - core index']
  #allocation1 [shape = 'u32[144,128]{1,0:T(1,128)}', space=vmem, size = 0x12000, scoped, tag = 'internal scratch']
  %s0 = inlined_call_operand.vmem [shape: bf16[32,288], index: 0, kind: input, shape index: {}]
  %s1 = inlined_call_operand.vmem [shape: bf16[288,32], index: 1, kind: input, shape index: {}]
  %s2 = inlined_call_operand.vmem [shape: f32[1,32], index: 2, kind: input, shape index: {}]
  %s3 = inlined_call_operand.vmem [shape: f32[32,32], index: 3, kind: input, shape index: {}]
  %s4 = inlined_call_operand.vmem [shape: f32[32,32], index: 4, kind: output, shape index: {}]
  %s5 = sld [smem:[#allocation0]]
  $region26: #{impala_cnn_base_forward.28} parent=0
    _
  %s7 = ssub.s32 1, %s5
  %s8 = scalar_select 0, %s7, %s5
  // Predicated region
  $region2: #{impala_cnn_base_forward.28} parent=0 // pred_check
    _
  $region3: #{impala_cnn_base_forward.28} parent=0 // pred_check_branch
    %10 = sbr.rel (0) target = $region5
  $region4: #{impala_cnn_base_forward.28} parent=0 // pred_region
    _
  $region5: #{impala_cnn_base_forward.28} parent=0 // pred_fallthru
    _
  // Predicated region
  $region6: #{impala_cnn_base_forward.28} parent=0 // pred_check
    _
  $region7: #{impala_cnn_base_forward.28} parent=0 // pred_check_branch
    %12 = sbr.rel (0) target = $region9
  $region8: #{impala_cnn_base_forward.28} parent=0 // pred_region
    _
  $region9: #{impala_cnn_base_forward.28} parent=0 // pred_fallthru
    _
  // Predicated region
  $region10: #{impala_cnn_base_forward.28} parent=0 // pred_check
    _
  $region11: #{impala_cnn_base_forward.28} parent=0 // pred_check_branch
    %14 = sbr.rel (0) target = $region13
  $region12: #{impala_cnn_base_forward.28} parent=0 // pred_region
    _
  $region13: #{impala_cnn_base_forward.28} parent=0 // pred_fallthru
    _
  // Predicated region
  $region14: #{impala_cnn_base_forward.28} parent=0 // pred_check
    _
  $region15: #{impala_cnn_base_forward.28} parent=0 // pred_check_branch
    %16 = sbr.rel (0) target = $region17
  $region16: #{impala_cnn_base_forward.28} parent=0 // pred_region
    _
  $region17: #{impala_cnn_base_forward.28} parent=0 // pred_fallthru
    _
  %v18 = vld [vmem:[%s0] sm:$0xff]
  %v19 = vld [vmem:[%s0 + $0x8] sm:$0xf]
  %v20 = vld [vmem:[%s0 + $0xc] sm:$0xff]
  %v21 = vld [vmem:[%s0 + $0x14] sm:$0xf]
  %v22 = vld [vmem:[%s0 + $0x18] sm:$0xff]
  %v23 = vld [vmem:[%s0 + $0x20] sm:$0xf]
  %v24 = vld [vmem:[%s0 + $0x24] sm:$0xff]
  %v25 = vld [vmem:[%s0 + $0x2c] sm:$0xf]
  %v26 = vld [vmem:[%s1] sm:$0xf]
  %v27 = vld [vmem:[%s1 + $0x4] sm:$0xf]
  %v28 = vld [vmem:[%s1 + $0x8] sm:$0xf]
  %v29 = vld [vmem:[%s1 + $0xc] sm:$0xf]
  %v30 = vld [vmem:[%s1 + $0x10] sm:$0xf]
  %v31 = vld [vmem:[%s1 + $0x14] sm:$0xf]
  %v32 = vld [vmem:[%s1 + $0x18] sm:$0xf]
  %v33 = vld [vmem:[%s1 + $0x1c] sm:$0xf]
  %v34 = vld [vmem:[%s1 + $0x20] sm:$0xf]
  %v35 = vld [vmem:[%s1 + $0x24] sm:$0xf]
  %v36 = vld [vmem:[%s1 + $0x28] sm:$0xf]
  %v37 = vld [vmem:[%s1 + $0x2c] sm:$0xf]
  %v38 = vld [vmem:[%s1 + $0x30] sm:$0xf]
  %v39 = vld [vmem:[%s1 + $0x34] sm:$0xf]
  %v40 = vld [vmem:[%s1 + $0x38] sm:$0xf]
  %v41 = vld [vmem:[%s1 + $0x3c] sm:$0xf]
  %v42 = vld [vmem:[%s1 + $0x40] sm:$0xf]
  %v43 = vld [vmem:[%s1 + $0x44] sm:$0xf]
  %v44 = vld [vmem:[%s1 + $0x48] sm:$0xf]
  %v45 = vld [vmem:[%s1 + $0x4c] sm:$0xf]
  %v46 = vld [vmem:[%s1 + $0x50] sm:$0xf]
  %v47 = vld [vmem:[%s1 + $0x54] sm:$0xf]
  %v48 = vld [vmem:[%s1 + $0x58] sm:$0xf]
  %v49 = vld [vmem:[%s1 + $0x5c] sm:$0xf]
  %v50 = vld [vmem:[%s1 + $0x60] sm:$0xf]
  %v51 = vld [vmem:[%s1 + $0x64] sm:$0xf]
  %v52 = vld [vmem:[%s1 + $0x68] sm:$0xf]
  %v53 = vld [vmem:[%s1 + $0x6c] sm:$0xf]
  %v54 = vld [vmem:[%s1 + $0x70] sm:$0xf]
  %v55 = vld [vmem:[%s1 + $0x74] sm:$0xf]
  %v56 = vld [vmem:[%s1 + $0x78] sm:$0xf]
  %v57 = vld [vmem:[%s1 + $0x7c] sm:$0xf]
  %v58 = vld [vmem:[%s1 + $0x80] sm:$0xf]
  %v59 = vld [vmem:[%s1 + $0x84] sm:$0xf]
  %v60 = vld [vmem:[%s1 + $0x88] sm:$0xf]
  %v61 = vld [vmem:[%s1 + $0x8c] sm:$0xf]
  %v62 = vld [vmem:[%s2] sm:$0x1]
  %v64 = vlaneseq
  %v65 = vshrl.u32 %v64, 7
  %v66 = vsub.s32 0, %v65
  %v67 = vrot.slane %v62, %v66
  %v77 = vunpack.c.l.b16 %v18
  %v78 = vunpack.c.h.b16 %v18
  %v79 = vunpack.c.l.b16 %v19
  %v80 = vunpack.c.l.b16 %v20
  %v81 = vunpack.c.h.b16 %v20
  %v82 = vunpack.c.l.b16 %v21
  %v83 = vunpack.c.l.b16 %v22
  %v84 = vunpack.c.h.b16 %v22
  %v85 = vunpack.c.l.b16 %v23
  %v86 = vunpack.c.l.b16 %v24
  %v87 = vunpack.c.h.b16 %v24
  %v88 = vunpack.c.l.b16 %v25
  %v89 = vpack.c.b16 %v80, %v77
  %v90 = vpack.c.b16 %v81, %v78
  %v91 = vpack.c.b16 %v82, %v79
  %v92 = vpack.c.b16 %v86, %v83
  %v93 = vpack.c.b16 %v87, %v84
  %v94 = vpack.c.b16 %v88, %v85
  %v135 = vunpack.c.l.b16 %v26
  %v136 = vunpack.c.l.b16 %v27
  %v137 = vunpack.c.l.b16 %v28
  %v138 = vunpack.c.l.b16 %v29
  %v139 = vunpack.c.l.b16 %v30
  %v140 = vunpack.c.l.b16 %v31
  %v141 = vunpack.c.l.b16 %v32
  %v142 = vunpack.c.l.b16 %v33
  %v143 = vunpack.c.l.b16 %v34
  %v144 = vunpack.c.l.b16 %v35
  %v145 = vunpack.c.l.b16 %v36
  %v146 = vunpack.c.l.b16 %v37
  %v147 = vunpack.c.l.b16 %v38
  %v148 = vunpack.c.l.b16 %v39
  %v149 = vunpack.c.l.b16 %v40
  %v150 = vunpack.c.l.b16 %v41
  %v151 = vunpack.c.l.b16 %v42
  %v152 = vunpack.c.l.b16 %v43
  %v153 = vunpack.c.l.b16 %v44
  %v154 = vunpack.c.l.b16 %v45
  %v155 = vunpack.c.l.b16 %v46
  %v156 = vunpack.c.l.b16 %v47
  %v157 = vunpack.c.l.b16 %v48
  %v158 = vunpack.c.l.b16 %v49
  %v159 = vunpack.c.l.b16 %v50
  %v160 = vunpack.c.l.b16 %v51
  %v161 = vunpack.c.l.b16 %v52
  %v162 = vunpack.c.l.b16 %v53
  %v163 = vunpack.c.l.b16 %v54
  %v164 = vunpack.c.l.b16 %v55
  %v165 = vunpack.c.l.b16 %v56
  %v166 = vunpack.c.l.b16 %v57
  %v167 = vunpack.c.l.b16 %v58
  %v168 = vunpack.c.l.b16 %v59
  %v169 = vunpack.c.l.b16 %v60
  %v170 = vunpack.c.l.b16 %v61
  %v171 = vpack.c.b16 %v136, %v135
  %v172 = vpack.c.b16 %v138, %v137
  %v173 = vpack.c.b16 %v140, %v139
  %v174 = vpack.c.b16 %v142, %v141
  %v175 = vpack.c.b16 %v144, %v143
  %v176 = vpack.c.b16 %v146, %v145
  %v177 = vpack.c.b16 %v148, %v147
  %v178 = vpack.c.b16 %v150, %v149
  %v179 = vpack.c.b16 %v152, %v151
  %v180 = vpack.c.b16 %v154, %v153
  %v181 = vpack.c.b16 %v156, %v155
  %v182 = vpack.c.b16 %v158, %v157
  %v183 = vpack.c.b16 %v160, %v159
  %v184 = vpack.c.b16 %v162, %v161
  %v185 = vpack.c.b16 %v164, %v163
  %v186 = vpack.c.b16 %v166, %v165
  %v187 = vpack.c.b16 %v168, %v167
  %v188 = vpack.c.b16 %v170, %v169
  %vm207 = vcmask 261120
  %v209 = vsel %vm207, %v91, 0
  %v212 = vsel %vm207, %v94, 0
  %214 = vmatprep.subr.bf16.mxu0 0
  %215 = vmatpush1.bf16.msra.mxu0 %v178
  %216 = vmatprep.subr.bf16.mxu0 0
  %217 = vmatpush1.bf16.msra.mxu0 %v177
  %218 = vmatprep.subr.bf16.mxu0 0
  %219 = vmatpush1.bf16.msra.mxu0 %v176
  %220 = vmatprep.subr.bf16.mxu0 0
  %221 = vmatpush1.bf16.msra.mxu0 %v175
  %222 = vmatprep.subr.bf16.mxu0 0
  %223 = vmatpush1.bf16.msra.mxu0 %v174
  %224 = vmatprep.subr.bf16.mxu0 0
  %225 = vmatpush1.bf16.msra.mxu0 %v173
  %226 = vmatprep.subr.bf16.mxu0 0
  %227 = vmatpush1.bf16.msra.mxu0 %v172
  %228 = vmatprep.subr.bf16.mxu0 0
  %229 = vmatpush1.bf16.msra.mxu0 %v171
  %230 = vmatprep.subr.bf16.mxu0 0
  %231 = vmatpush2.bf16.msra.mxu0 %v186
  %232 = vmatprep.subr.bf16.mxu0 0
  %233 = vmatpush2.bf16.msra.mxu0 %v185
  %234 = vmatprep.subr.bf16.mxu0 0
  %235 = vmatpush2.bf16.msra.mxu0 %v184
  %236 = vmatprep.subr.bf16.mxu0 0
  %237 = vmatpush2.bf16.msra.mxu0 %v183
  %238 = vmatprep.subr.bf16.mxu0 0
  %239 = vmatpush2.bf16.msra.mxu0 %v182
  %240 = vmatprep.subr.bf16.mxu0 0
  %241 = vmatpush2.bf16.msra.mxu0 %v181
  %242 = vmatprep.subr.bf16.mxu0 0
  %243 = vmatpush2.bf16.msra.mxu0 %v180
  %244 = vmatprep.subr.bf16.mxu0 0
  %245 = vmatpush2.bf16.msra.mxu0 %v179
  %246 = vmatprep.mubr.bf16.mxu0 %v90
  %247 = vmatmul.mubr.bf16.gmra.mxu0 %v89
  %v248 = vpop.f32.mrf.mxu0
  %v249 = vadd.f32 %v67, %v248
  %v250 = vpop.f32.mrf.mxu0
  %v251 = vpop.f32.mrf.mxu0
  %v252 = vadd.f32 %v67, %v251
  %v253 = vpop.f32.mrf.mxu0
  %254 = vmatprep.mubr.bf16.mxu0 %v93
  %255 = vmatmul.mubr.bf16.gmra.mxu0 %v92
  %v256 = vpop.f32.mrf.mxu0
  %v257 = vadd.f32 %v67, %v256
  %v258 = vpop.f32.mrf.mxu0
  %v259 = vpop.f32.mrf.mxu0
  %v260 = vadd.f32 %v67, %v259
  %v261 = vpop.f32.mrf.mxu0
  %262 = vdwg.mxu0
  %263 = vmatprep.subr.bf16.mxu0 0
  %264 = vmatpush1.bf16.msra.mxu0 0
  %265 = vmatprep.subr.bf16.mxu0 0
  %266 = vmatpush1.bf16.msra.mxu0 0
  %267 = vmatprep.subr.bf16.mxu0 0
  %268 = vmatpush1.bf16.msra.mxu0 0
  %269 = vmatprep.subr.bf16.mxu0 0
  %270 = vmatpush1.bf16.msra.mxu0 0
  %271 = vmatprep.subr.bf16.mxu0 0
  %272 = vmatpush1.bf16.msra.mxu0 0
  %273 = vmatprep.subr.bf16.mxu0 0
  %274 = vmatpush1.bf16.msra.mxu0 0
  %275 = vmatprep.subr.bf16.mxu0 0
  %276 = vmatpush1.bf16.msra.mxu0 %v188
  %277 = vmatprep.subr.bf16.mxu0 0
  %278 = vmatpush1.bf16.msra.mxu0 %v187
  %279 = vmatprep.subr.bf16.mxu0 0
  %280 = vmatpush2.bf16.msra.mxu0 0
  %281 = vmatprep.subr.bf16.mxu0 0
  %282 = vmatpush2.bf16.msra.mxu0 0
  %283 = vmatprep.subr.bf16.mxu0 0
  %284 = vmatpush2.bf16.msra.mxu0 0
  %285 = vmatprep.subr.bf16.mxu0 0
  %286 = vmatpush2.bf16.msra.mxu0 0
  %287 = vmatprep.subr.bf16.mxu0 0
  %288 = vmatpush2.bf16.msra.mxu0 0
  %289 = vmatprep.subr.bf16.mxu0 0
  %290 = vmatpush2.bf16.msra.mxu0 0
  %291 = vmatprep.subr.bf16.mxu0 0
  %292 = vmatpush2.bf16.msra.mxu0 0
  %293 = vmatprep.subr.bf16.mxu0 0
  %294 = vmatpush2.bf16.msra.mxu0 0
  %295 = vmatprep.mubr.bf16.mxu0 0
  %296 = vmatmul.mubr.bf16.gmra.mxu0 %v209
  %v297 = vpop.f32.mrf.mxu0
  %v298 = vadd.f32 %v249, %v297
  %v299 = vpop.f32.mrf.mxu0
  %v300 = vpop.f32.mrf.mxu0
  %v301 = vadd.f32 %v252, %v300
  %v302 = vpop.f32.mrf.mxu0
  %303 = vmatprep.mubr.bf16.mxu0 0
  %304 = vmatmul.mubr.bf16.gmra.mxu0 %v212
  %v305 = vpop.f32.mrf.mxu0
  %v306 = vadd.f32 %v257, %v305
  %v307 = vpop.f32.mrf.mxu0
  %v308 = vpop.f32.mrf.mxu0
  %v309 = vadd.f32 %v260, %v308
  %v310 = vpop.f32.mrf.mxu0
  %311 = vdwg.mxu0
  %v312 = vld [vmem:[%s3] sm:$0xff]
  %v313 = vld [vmem:[%s3 + $0x8] sm:$0xff]
  %v314 = vld [vmem:[%s3 + $0x10] sm:$0xff]
  %v315 = vld [vmem:[%s3 + $0x18] sm:$0xff]
  %v316 = vadd.f32 %v298, %v312
  %v317 = vadd.f32 %v301, %v313
  %v318 = vadd.f32 %v306, %v314
  %v319 = vadd.f32 %v309, %v315
  %320 = vst.msk [vmem:[%s4] sm:$0xff] %vm207, %v316
  %321 = vst.msk [vmem:[%s4 + $0x8] sm:$0xff] %vm207, %v317
  %322 = vst.msk [vmem:[%s4 + $0x10] sm:$0xff] %vm207, %v318
  %323 = vst.msk [vmem:[%s4 + $0x18] sm:$0xff] %vm207, %v319
  // Predicated region
  $region18: #{impala_cnn_base_forward.28} parent=0 // pred_check
    _
  $region19: #{impala_cnn_base_forward.28} parent=0 // pred_check_branch
    %325 = sbr.rel (0) target = $region21
  $region20: #{impala_cnn_base_forward.28} parent=0 // pred_region
    _
  $region21: #{impala_cnn_base_forward.28} parent=0 // pred_fallthru
    _
  // Predicated region
  $region22: #{impala_cnn_base_forward.28} parent=0 // pred_check
    _
  $region23: #{impala_cnn_base_forward.28} parent=0 // pred_check_branch
    %327 = sbr.rel (0) target = $region25
  $region24: #{impala_cnn_base_forward.28} parent=0 // pred_region
    _
  $region25: #{impala_cnn_base_forward.28} parent=0 // pred_fallthru
    _

// kernel: impala_cnn_base_forward.32
$region0: #{impala_cnn_base_forward.32}
  #allocation0 [shape = 'u32[]', space=smem, size = 0x4, offset = 0x4, fixed_abs, tag = 'smem constant byte address 0x4 - core index']
  #allocation1 [shape = 'u32[144,128]{1,0:T(1,128)}', space=vmem, size = 0x12000, scoped, tag = 'internal scratch']
  %s0 = inlined_call_operand.vmem [shape: f32[9,8,32], index: 0, kind: input, shape index: {}]
  %s1 = inlined_call_operand.vmem [shape: f32[8,32], index: 1, kind: output, shape index: {}]
  %s2 = sld [smem:[#allocation0]]
  $region14: #{impala_cnn_base_forward.32} parent=0
    _
  %s4 = ssub.s32 1, %s2
  %s5 = scalar_select 0, %s4, %s2
  // Predicated region
  $region2: #{impala_cnn_base_forward.32} parent=0 // pred_check
    _
  $region3: #{impala_cnn_base_forward.32} parent=0 // pred_check_branch
    %7 = sbr.rel (0) target = $region5
  $region4: #{impala_cnn_base_forward.32} parent=0 // pred_region
    _
  $region5: #{impala_cnn_base_forward.32} parent=0 // pred_fallthru
    _
  %v8 = vld [vmem:[%s0] sm:$0xff]
  %s9 = scalar_lea.vmem %s0, 8
  %v10 = vld [vmem:[%s9] sm:$0xff]
  %v11 = vmax.f32 %v8, %v10
  %s12 = scalar_lea.vmem %s0, 16
  %v13 = vld [vmem:[%s12] sm:$0xff]
  %v14 = vmax.f32 %v11, %v13
  %s15 = scalar_lea.vmem %s0, 24
  %v16 = vld [vmem:[%s15] sm:$0xff]
  %v17 = vmax.f32 %v14, %v16
  %s18 = scalar_lea.vmem %s0, 32
  %v19 = vld [vmem:[%s18] sm:$0xff]
  %v20 = vmax.f32 %v17, %v19
  %s21 = scalar_lea.vmem %s0, 40
  %v22 = vld [vmem:[%s21] sm:$0xff]
  %v23 = vmax.f32 %v20, %v22
  %s24 = scalar_lea.vmem %s0, 48
  %v25 = vld [vmem:[%s24] sm:$0xff]
  %v26 = vmax.f32 %v23, %v25
  %s27 = scalar_lea.vmem %s0, 56
  %v28 = vld [vmem:[%s27] sm:$0xff]
  %v29 = vmax.f32 %v26, %v28
  %s30 = scalar_lea.vmem %s0, 64
  %v31 = vld [vmem:[%s30] sm:$0xff]
  %v32 = vmax.f32 %v29, %v31
  %vm33 = vcmask 261120
  %34 = vst.msk [vmem:[%s1] sm:$0xff] %vm33, %v32
  // Predicated region
  $region6: #{impala_cnn_base_forward.32} parent=0 // pred_check
    _
  $region7: #{impala_cnn_base_forward.32} parent=0 // pred_check_branch
    %36 = sbr.rel (0) target = $region9
  $region8: #{impala_cnn_base_forward.32} parent=0 // pred_region
    _
  $region9: #{impala_cnn_base_forward.32} parent=0 // pred_fallthru
    _
  // Predicated region
  $region10: #{impala_cnn_base_forward.32} parent=0 // pred_check
    _
  $region11: #{impala_cnn_base_forward.32} parent=0 // pred_check_branch
    %38 = sbr.rel (0) target = $region13
  $region12: #{impala_cnn_base_forward.32} parent=0 // pred_region
    _
  $region13: #{impala_cnn_base_forward.32} parent=0 // pred_fallthru
    _

// kernel: impala_cnn_base_forward.33
$region0: #{impala_cnn_base_forward.33}
  #allocation0 [shape = 'u32[]', space=smem, size = 0x4, offset = 0x4, fixed_abs, tag = 'smem constant byte address 0x4 - core index']
  #allocation1 [shape = 'u32[144,128]{1,0:T(1,128)}', space=vmem, size = 0x12000, scoped, tag = 'internal scratch']
  %s0 = inlined_call_operand.vmem [shape: bf16[8,288], index: 0, kind: input, shape index: {}]
  %s1 = inlined_call_operand.vmem [shape: bf16[288,32], index: 1, kind: input, shape index: {}]
  %s2 = inlined_call_operand.vmem [shape: f32[1,32], index: 2, kind: input, shape index: {}]
  %s3 = inlined_call_operand.vmem [shape: f32[8,32], index: 3, kind: output, shape index: {}]
  %s4 = sld [smem:[#allocation0]]
  $region22: #{impala_cnn_base_forward.33} parent=0
    _
  %s6 = ssub.s32 1, %s4
  %s7 = scalar_select 0, %s6, %s4
  // Predicated region
  $region2: #{impala_cnn_base_forward.33} parent=0 // pred_check
    _
  $region3: #{impala_cnn_base_forward.33} parent=0 // pred_check_branch
    %9 = sbr.rel (0) target = $region5
  $region4: #{impala_cnn_base_forward.33} parent=0 // pred_region
    _
  $region5: #{impala_cnn_base_forward.33} parent=0 // pred_fallthru
    _
  // Predicated region
  $region6: #{impala_cnn_base_forward.33} parent=0 // pred_check
    _
  $region7: #{impala_cnn_base_forward.33} parent=0 // pred_check_branch
    %11 = sbr.rel (0) target = $region9
  $region8: #{impala_cnn_base_forward.33} parent=0 // pred_region
    _
  $region9: #{impala_cnn_base_forward.33} parent=0 // pred_fallthru
    _
  // Predicated region
  $region10: #{impala_cnn_base_forward.33} parent=0 // pred_check
    _
  $region11: #{impala_cnn_base_forward.33} parent=0 // pred_check_branch
    %13 = sbr.rel (0) target = $region13
  $region12: #{impala_cnn_base_forward.33} parent=0 // pred_region
    _
  $region13: #{impala_cnn_base_forward.33} parent=0 // pred_fallthru
    _
  %v15 = vld [vmem:[%s0] sm:$0xff]
  %v16 = vld [vmem:[%s0 + $0x8] sm:$0xf]
  %v17 = vld [vmem:[%s1] sm:$0xf]
  %v18 = vld [vmem:[%s1 + $0x4] sm:$0xf]
  %v19 = vld [vmem:[%s1 + $0x8] sm:$0xf]
  %v20 = vld [vmem:[%s1 + $0xc] sm:$0xf]
  %v21 = vld [vmem:[%s1 + $0x10] sm:$0xf]
  %v22 = vld [vmem:[%s1 + $0x14] sm:$0xf]
  %v23 = vld [vmem:[%s1 + $0x18] sm:$0xf]
  %v24 = vld [vmem:[%s1 + $0x1c] sm:$0xf]
  %v25 = vld [vmem:[%s1 + $0x20] sm:$0xf]
  %v26 = vld [vmem:[%s1 + $0x24] sm:$0xf]
  %v27 = vld [vmem:[%s1 + $0x28] sm:$0xf]
  %v28 = vld [vmem:[%s1 + $0x2c] sm:$0xf]
  %v29 = vld [vmem:[%s1 + $0x30] sm:$0xf]
  %v30 = vld [vmem:[%s1 + $0x34] sm:$0xf]
  %v31 = vld [vmem:[%s1 + $0x38] sm:$0xf]
  %v32 = vld [vmem:[%s1 + $0x3c] sm:$0xf]
  %v33 = vld [vmem:[%s1 + $0x40] sm:$0xf]
  %v34 = vld [vmem:[%s1 + $0x44] sm:$0xf]
  %v35 = vld [vmem:[%s1 + $0x48] sm:$0xf]
  %v36 = vld [vmem:[%s1 + $0x4c] sm:$0xf]
  %v37 = vld [vmem:[%s1 + $0x50] sm:$0xf]
  %v38 = vld [vmem:[%s1 + $0x54] sm:$0xf]
  %v39 = vld [vmem:[%s1 + $0x58] sm:$0xf]
  %v40 = vld [vmem:[%s1 + $0x5c] sm:$0xf]
  %v41 = vld [vmem:[%s1 + $0x60] sm:$0xf]
  %v42 = vld [vmem:[%s1 + $0x64] sm:$0xf]
  %v43 = vld [vmem:[%s1 + $0x68] sm:$0xf]
  %v44 = vld [vmem:[%s1 + $0x6c] sm:$0xf]
  %v45 = vld [vmem:[%s1 + $0x70] sm:$0xf]
  %v46 = vld [vmem:[%s1 + $0x74] sm:$0xf]
  %v47 = vld [vmem:[%s1 + $0x78] sm:$0xf]
  %v48 = vld [vmem:[%s1 + $0x7c] sm:$0xf]
  %v49 = vld [vmem:[%s1 + $0x80] sm:$0xf]
  %v50 = vld [vmem:[%s1 + $0x84] sm:$0xf]
  %v51 = vld [vmem:[%s1 + $0x88] sm:$0xf]
  %v52 = vld [vmem:[%s1 + $0x8c] sm:$0xf]
  %v53 = vld [vmem:[%s2] sm:$0x1]
  %v55 = vlaneseq
  %v56 = vshrl.u32 %v55, 7
  %v57 = vsub.s32 0, %v56
  %v58 = vrot.slane %v53, %v57
  %v62 = vunpack.c.l.b16 %v15
  %v63 = vunpack.c.h.b16 %v15
  %v64 = vunpack.c.l.b16 %v16
  %v65 = vpack.c.b16 %v62, %v62
  %v66 = vpack.c.b16 %v63, %v63
  %v67 = vpack.c.b16 %v64, %v64
  %v106 = vunpack.c.l.b16 %v17
  %v107 = vunpack.c.l.b16 %v18
  %v108 = vunpack.c.l.b16 %v19
  %v109 = vunpack.c.l.b16 %v20
  %v110 = vunpack.c.l.b16 %v21
  %v111 = vunpack.c.l.b16 %v22
  %v112 = vunpack.c.l.b16 %v23
  %v113 = vunpack.c.l.b16 %v24
  %v114 = vunpack.c.l.b16 %v25
  %v115 = vunpack.c.l.b16 %v26
  %v116 = vunpack.c.l.b16 %v27
  %v117 = vunpack.c.l.b16 %v28
  %v118 = vunpack.c.l.b16 %v29
  %v119 = vunpack.c.l.b16 %v30
  %v120 = vunpack.c.l.b16 %v31
  %v121 = vunpack.c.l.b16 %v32
  %v122 = vunpack.c.l.b16 %v33
  %v123 = vunpack.c.l.b16 %v34
  %v124 = vunpack.c.l.b16 %v35
  %v125 = vunpack.c.l.b16 %v36
  %v126 = vunpack.c.l.b16 %v37
  %v127 = vunpack.c.l.b16 %v38
  %v128 = vunpack.c.l.b16 %v39
  %v129 = vunpack.c.l.b16 %v40
  %v130 = vunpack.c.l.b16 %v41
  %v131 = vunpack.c.l.b16 %v42
  %v132 = vunpack.c.l.b16 %v43
  %v133 = vunpack.c.l.b16 %v44
  %v134 = vunpack.c.l.b16 %v45
  %v135 = vunpack.c.l.b16 %v46
  %v136 = vunpack.c.l.b16 %v47
  %v137 = vunpack.c.l.b16 %v48
  %v138 = vunpack.c.l.b16 %v49
  %v139 = vunpack.c.l.b16 %v50
  %v140 = vunpack.c.l.b16 %v51
  %v141 = vunpack.c.l.b16 %v52
  %v142 = vpack.c.b16 %v107, %v106
  %v143 = vpack.c.b16 %v109, %v108
  %v144 = vpack.c.b16 %v111, %v110
  %v145 = vpack.c.b16 %v113, %v112
  %v146 = vpack.c.b16 %v115, %v114
  %v147 = vpack.c.b16 %v117, %v116
  %v148 = vpack.c.b16 %v119, %v118
  %v149 = vpack.c.b16 %v121, %v120
  %v150 = vpack.c.b16 %v123, %v122
  %v151 = vpack.c.b16 %v125, %v124
  %v152 = vpack.c.b16 %v127, %v126
  %v153 = vpack.c.b16 %v129, %v128
  %v154 = vpack.c.b16 %v131, %v130
  %v155 = vpack.c.b16 %v133, %v132
  %v156 = vpack.c.b16 %v135, %v134
  %v157 = vpack.c.b16 %v137, %v136
  %v158 = vpack.c.b16 %v139, %v138
  %v159 = vpack.c.b16 %v141, %v140
  %vm178 = vcmask 261120
  %v180 = vsel %vm178, %v67, 0
  %182 = vmatprep.subr.bf16.mxu0 0
  %183 = vmatpush1.bf16.msra.mxu0 %v149
  %184 = vmatprep.subr.bf16.mxu0 0
  %185 = vmatpush1.bf16.msra.mxu0 %v148
  %186 = vmatprep.subr.bf16.mxu0 0
  %187 = vmatpush1.bf16.msra.mxu0 %v147
  %188 = vmatprep.subr.bf16.mxu0 0
  %189 = vmatpush1.bf16.msra.mxu0 %v146
  %190 = vmatprep.subr.bf16.mxu0 0
  %191 = vmatpush1.bf16.msra.mxu0 %v145
  %192 = vmatprep.subr.bf16.mxu0 0
  %193 = vmatpush1.bf16.msra.mxu0 %v144
  %194 = vmatprep.subr.bf16.mxu0 0
  %195 = vmatpush1.bf16.msra.mxu0 %v143
  %196 = vmatprep.subr.bf16.mxu0 0
  %197 = vmatpush1.bf16.msra.mxu0 %v142
  %198 = vmatprep.subr.bf16.mxu0 0
  %199 = vmatpush2.bf16.msra.mxu0 %v157
  %200 = vmatprep.subr.bf16.mxu0 0
  %201 = vmatpush2.bf16.msra.mxu0 %v156
  %202 = vmatprep.subr.bf16.mxu0 0
  %203 = vmatpush2.bf16.msra.mxu0 %v155
  %204 = vmatprep.subr.bf16.mxu0 0
  %205 = vmatpush2.bf16.msra.mxu0 %v154
  %206 = vmatprep.subr.bf16.mxu0 0
  %207 = vmatpush2.bf16.msra.mxu0 %v153
  %208 = vmatprep.subr.bf16.mxu0 0
  %209 = vmatpush2.bf16.msra.mxu0 %v152
  %210 = vmatprep.subr.bf16.mxu0 0
  %211 = vmatpush2.bf16.msra.mxu0 %v151
  %212 = vmatprep.subr.bf16.mxu0 0
  %213 = vmatpush2.bf16.msra.mxu0 %v150
  %214 = vmatprep.mubr.bf16.mxu0 %v66
  %215 = vmatmul.mubr.bf16.gmra.mxu0 %v65
  %v216 = vpop.f32.mrf.mxu0
  %v217 = vadd.f32 %v58, %v216
  %v218 = vpop.f32.mrf.mxu0
  %v219 = vpop.f32.mrf.mxu0
  %v220 = vpop.f32.mrf.mxu0
  %221 = vdwg.mxu0
  %222 = vmatprep.subr.bf16.mxu0 0
  %223 = vmatpush1.bf16.msra.mxu0 0
  %224 = vmatprep.subr.bf16.mxu0 0
  %225 = vmatpush1.bf16.msra.mxu0 0
  %226 = vmatprep.subr.bf16.mxu0 0
  %227 = vmatpush1.bf16.msra.mxu0 0
  %228 = vmatprep.subr.bf16.mxu0 0
  %229 = vmatpush1.bf16.msra.mxu0 0
  %230 = vmatprep.subr.bf16.mxu0 0
  %231 = vmatpush1.bf16.msra.mxu0 0
  %232 = vmatprep.subr.bf16.mxu0 0
  %233 = vmatpush1.bf16.msra.mxu0 0
  %234 = vmatprep.subr.bf16.mxu0 0
  %235 = vmatpush1.bf16.msra.mxu0 %v159
  %236 = vmatprep.subr.bf16.mxu0 0
  %237 = vmatpush1.bf16.msra.mxu0 %v158
  %238 = vmatprep.subr.bf16.mxu0 0
  %239 = vmatpush2.bf16.msra.mxu0 0
  %240 = vmatprep.subr.bf16.mxu0 0
  %241 = vmatpush2.bf16.msra.mxu0 0
  %242 = vmatprep.subr.bf16.mxu0 0
  %243 = vmatpush2.bf16.msra.mxu0 0
  %244 = vmatprep.subr.bf16.mxu0 0
  %245 = vmatpush2.bf16.msra.mxu0 0
  %246 = vmatprep.subr.bf16.mxu0 0
  %247 = vmatpush2.bf16.msra.mxu0 0
  %248 = vmatprep.subr.bf16.mxu0 0
  %249 = vmatpush2.bf16.msra.mxu0 0
  %250 = vmatprep.subr.bf16.mxu0 0
  %251 = vmatpush2.bf16.msra.mxu0 0
  %252 = vmatprep.subr.bf16.mxu0 0
  %253 = vmatpush2.bf16.msra.mxu0 0
  %254 = vmatprep.mubr.bf16.mxu0 0
  %255 = vmatmul.mubr.bf16.gmra.mxu0 %v180
  %v256 = vpop.f32.mrf.mxu0
  %v257 = vadd.f32 %v217, %v256
  %v258 = vpop.f32.mrf.mxu0
  %v259 = vpop.f32.mrf.mxu0
  %v260 = vpop.f32.mrf.mxu0
  %261 = vdwg.mxu0
  %v262 = vmax.f32 %v257, 0.0
  %263 = vst.msk [vmem:[%s3] sm:$0xff] %vm178, %v262
  // Predicated region
  $region14: #{impala_cnn_base_forward.33} parent=0 // pred_check
    _
  $region15: #{impala_cnn_base_forward.33} parent=0 // pred_check_branch
    %265 = sbr.rel (0) target = $region17
  $region16: #{impala_cnn_base_forward.33} parent=0 // pred_region
    _
  $region17: #{impala_cnn_base_forward.33} parent=0 // pred_fallthru
    _
  // Predicated region
  $region18: #{impala_cnn_base_forward.33} parent=0 // pred_check
    _
  $region19: #{impala_cnn_base_forward.33} parent=0 // pred_check_branch
    %267 = sbr.rel (0) target = $region21
  $region20: #{impala_cnn_base_forward.33} parent=0 // pred_region
    _
  $region21: #{impala_cnn_base_forward.33} parent=0 // pred_fallthru
    _

// kernel: impala_cnn_base_forward.34
$region0: #{impala_cnn_base_forward.34}
  #allocation0 [shape = 'u32[]', space=smem, size = 0x4, offset = 0x4, fixed_abs, tag = 'smem constant byte address 0x4 - core index']
  #allocation1 [shape = 'u32[144,128]{1,0:T(1,128)}', space=vmem, size = 0x12000, scoped, tag = 'internal scratch']
  %s0 = inlined_call_operand.vmem [shape: bf16[8,288], index: 0, kind: input, shape index: {}]
  %s1 = inlined_call_operand.vmem [shape: bf16[288,32], index: 1, kind: input, shape index: {}]
  %s2 = inlined_call_operand.vmem [shape: f32[1,32], index: 2, kind: input, shape index: {}]
  %s3 = inlined_call_operand.vmem [shape: f32[8,32], index: 3, kind: input, shape index: {}]
  %s4 = inlined_call_operand.vmem [shape: f32[8,32], index: 4, kind: output, shape index: {}]
  %s5 = sld [smem:[#allocation0]]
  $region26: #{impala_cnn_base_forward.34} parent=0
    _
  %s7 = ssub.s32 1, %s5
  %s8 = scalar_select 0, %s7, %s5
  // Predicated region
  $region2: #{impala_cnn_base_forward.34} parent=0 // pred_check
    _
  $region3: #{impala_cnn_base_forward.34} parent=0 // pred_check_branch
    %10 = sbr.rel (0) target = $region5
  $region4: #{impala_cnn_base_forward.34} parent=0 // pred_region
    _
  $region5: #{impala_cnn_base_forward.34} parent=0 // pred_fallthru
    _
  // Predicated region
  $region6: #{impala_cnn_base_forward.34} parent=0 // pred_check
    _
  $region7: #{impala_cnn_base_forward.34} parent=0 // pred_check_branch
    %12 = sbr.rel (0) target = $region9
  $region8: #{impala_cnn_base_forward.34} parent=0 // pred_region
    _
  $region9: #{impala_cnn_base_forward.34} parent=0 // pred_fallthru
    _
  // Predicated region
  $region10: #{impala_cnn_base_forward.34} parent=0 // pred_check
    _
  $region11: #{impala_cnn_base_forward.34} parent=0 // pred_check_branch
    %14 = sbr.rel (0) target = $region13
  $region12: #{impala_cnn_base_forward.34} parent=0 // pred_region
    _
  $region13: #{impala_cnn_base_forward.34} parent=0 // pred_fallthru
    _
  // Predicated region
  $region14: #{impala_cnn_base_forward.34} parent=0 // pred_check
    _
  $region15: #{impala_cnn_base_forward.34} parent=0 // pred_check_branch
    %16 = sbr.rel (0) target = $region17
  $region16: #{impala_cnn_base_forward.34} parent=0 // pred_region
    _
  $region17: #{impala_cnn_base_forward.34} parent=0 // pred_fallthru
    _
  %v18 = vld [vmem:[%s0] sm:$0xff]
  %v19 = vld [vmem:[%s0 + $0x8] sm:$0xf]
  %v20 = vld [vmem:[%s1] sm:$0xf]
  %v21 = vld [vmem:[%s1 + $0x4] sm:$0xf]
  %v22 = vld [vmem:[%s1 + $0x8] sm:$0xf]
  %v23 = vld [vmem:[%s1 + $0xc] sm:$0xf]
  %v24 = vld [vmem:[%s1 + $0x10] sm:$0xf]
  %v25 = vld [vmem:[%s1 + $0x14] sm:$0xf]
  %v26 = vld [vmem:[%s1 + $0x18] sm:$0xf]
  %v27 = vld [vmem:[%s1 + $0x1c] sm:$0xf]
  %v28 = vld [vmem:[%s1 + $0x20] sm:$0xf]
  %v29 = vld [vmem:[%s1 + $0x24] sm:$0xf]
  %v30 = vld [vmem:[%s1 + $0x28] sm:$0xf]
  %v31 = vld [vmem:[%s1 + $0x2c] sm:$0xf]
  %v32 = vld [vmem:[%s1 + $0x30] sm:$0xf]
  %v33 = vld [vmem:[%s1 + $0x34] sm:$0xf]
  %v34 = vld [vmem:[%s1 + $0x38] sm:$0xf]
  %v35 = vld [vmem:[%s1 + $0x3c] sm:$0xf]
  %v36 = vld [vmem:[%s1 + $0x40] sm:$0xf]
  %v37 = vld [vmem:[%s1 + $0x44] sm:$0xf]
  %v38 = vld [vmem:[%s1 + $0x48] sm:$0xf]
  %v39 = vld [vmem:[%s1 + $0x4c] sm:$0xf]
  %v40 = vld [vmem:[%s1 + $0x50] sm:$0xf]
  %v41 = vld [vmem:[%s1 + $0x54] sm:$0xf]
  %v42 = vld [vmem:[%s1 + $0x58] sm:$0xf]
  %v43 = vld [vmem:[%s1 + $0x5c] sm:$0xf]
  %v44 = vld [vmem:[%s1 + $0x60] sm:$0xf]
  %v45 = vld [vmem:[%s1 + $0x64] sm:$0xf]
  %v46 = vld [vmem:[%s1 + $0x68] sm:$0xf]
  %v47 = vld [vmem:[%s1 + $0x6c] sm:$0xf]
  %v48 = vld [vmem:[%s1 + $0x70] sm:$0xf]
  %v49 = vld [vmem:[%s1 + $0x74] sm:$0xf]
  %v50 = vld [vmem:[%s1 + $0x78] sm:$0xf]
  %v51 = vld [vmem:[%s1 + $0x7c] sm:$0xf]
  %v52 = vld [vmem:[%s1 + $0x80] sm:$0xf]
  %v53 = vld [vmem:[%s1 + $0x84] sm:$0xf]
  %v54 = vld [vmem:[%s1 + $0x88] sm:$0xf]
  %v55 = vld [vmem:[%s1 + $0x8c] sm:$0xf]
  %v56 = vld [vmem:[%s2] sm:$0x1]
  %v58 = vlaneseq
  %v59 = vshrl.u32 %v58, 7
  %v60 = vsub.s32 0, %v59
  %v61 = vrot.slane %v56, %v60
  %v65 = vunpack.c.l.b16 %v18
  %v66 = vunpack.c.h.b16 %v18
  %v67 = vunpack.c.l.b16 %v19
  %v68 = vpack.c.b16 %v65, %v65
  %v69 = vpack.c.b16 %v66, %v66
  %v70 = vpack.c.b16 %v67, %v67
  %v109 = vunpack.c.l.b16 %v20
  %v110 = vunpack.c.l.b16 %v21
  %v111 = vunpack.c.l.b16 %v22
  %v112 = vunpack.c.l.b16 %v23
  %v113 = vunpack.c.l.b16 %v24
  %v114 = vunpack.c.l.b16 %v25
  %v115 = vunpack.c.l.b16 %v26
  %v116 = vunpack.c.l.b16 %v27
  %v117 = vunpack.c.l.b16 %v28
  %v118 = vunpack.c.l.b16 %v29
  %v119 = vunpack.c.l.b16 %v30
  %v120 = vunpack.c.l.b16 %v31
  %v121 = vunpack.c.l.b16 %v32
  %v122 = vunpack.c.l.b16 %v33
  %v123 = vunpack.c.l.b16 %v34
  %v124 = vunpack.c.l.b16 %v35
  %v125 = vunpack.c.l.b16 %v36
  %v126 = vunpack.c.l.b16 %v37
  %v127 = vunpack.c.l.b16 %v38
  %v128 = vunpack.c.l.b16 %v39
  %v129 = vunpack.c.l.b16 %v40
  %v130 = vunpack.c.l.b16 %v41
  %v131 = vunpack.c.l.b16 %v42
  %v132 = vunpack.c.l.b16 %v43
  %v133 = vunpack.c.l.b16 %v44
  %v134 = vunpack.c.l.b16 %v45
  %v135 = vunpack.c.l.b16 %v46
  %v136 = vunpack.c.l.b16 %v47
  %v137 = vunpack.c.l.b16 %v48
  %v138 = vunpack.c.l.b16 %v49
  %v139 = vunpack.c.l.b16 %v50
  %v140 = vunpack.c.l.b16 %v51
  %v141 = vunpack.c.l.b16 %v52
  %v142 = vunpack.c.l.b16 %v53
  %v143 = vunpack.c.l.b16 %v54
  %v144 = vunpack.c.l.b16 %v55
  %v145 = vpack.c.b16 %v110, %v109
  %v146 = vpack.c.b16 %v112, %v111
  %v147 = vpack.c.b16 %v114, %v113
  %v148 = vpack.c.b16 %v116, %v115
  %v149 = vpack.c.b16 %v118, %v117
  %v150 = vpack.c.b16 %v120, %v119
  %v151 = vpack.c.b16 %v122, %v121
  %v152 = vpack.c.b16 %v124, %v123
  %v153 = vpack.c.b16 %v126, %v125
  %v154 = vpack.c.b16 %v128, %v127
  %v155 = vpack.c.b16 %v130, %v129
  %v156 = vpack.c.b16 %v132, %v131
  %v157 = vpack.c.b16 %v134, %v133
  %v158 = vpack.c.b16 %v136, %v135
  %v159 = vpack.c.b16 %v138, %v137
  %v160 = vpack.c.b16 %v140, %v139
  %v161 = vpack.c.b16 %v142, %v141
  %v162 = vpack.c.b16 %v144, %v143
  %vm181 = vcmask 261120
  %v183 = vsel %vm181, %v70, 0
  %185 = vmatprep.subr.bf16.mxu0 0
  %186 = vmatpush1.bf16.msra.mxu0 %v152
  %187 = vmatprep.subr.bf16.mxu0 0
  %188 = vmatpush1.bf16.msra.mxu0 %v151
  %189 = vmatprep.subr.bf16.mxu0 0
  %190 = vmatpush1.bf16.msra.mxu0 %v150
  %191 = vmatprep.subr.bf16.mxu0 0
  %192 = vmatpush1.bf16.msra.mxu0 %v149
  %193 = vmatprep.subr.bf16.mxu0 0
  %194 = vmatpush1.bf16.msra.mxu0 %v148
  %195 = vmatprep.subr.bf16.mxu0 0
  %196 = vmatpush1.bf16.msra.mxu0 %v147
  %197 = vmatprep.subr.bf16.mxu0 0
  %198 = vmatpush1.bf16.msra.mxu0 %v146
  %199 = vmatprep.subr.bf16.mxu0 0
  %200 = vmatpush1.bf16.msra.mxu0 %v145
  %201 = vmatprep.subr.bf16.mxu0 0
  %202 = vmatpush2.bf16.msra.mxu0 %v160
  %203 = vmatprep.subr.bf16.mxu0 0
  %204 = vmatpush2.bf16.msra.mxu0 %v159
  %205 = vmatprep.subr.bf16.mxu0 0
  %206 = vmatpush2.bf16.msra.mxu0 %v158
  %207 = vmatprep.subr.bf16.mxu0 0
  %208 = vmatpush2.bf16.msra.mxu0 %v157
  %209 = vmatprep.subr.bf16.mxu0 0
  %210 = vmatpush2.bf16.msra.mxu0 %v156
  %211 = vmatprep.subr.bf16.mxu0 0
  %212 = vmatpush2.bf16.msra.mxu0 %v155
  %213 = vmatprep.subr.bf16.mxu0 0
  %214 = vmatpush2.bf16.msra.mxu0 %v154
  %215 = vmatprep.subr.bf16.mxu0 0
  %216 = vmatpush2.bf16.msra.mxu0 %v153
  %217 = vmatprep.mubr.bf16.mxu0 %v69
  %218 = vmatmul.mubr.bf16.gmra.mxu0 %v68
  %v219 = vpop.f32.mrf.mxu0
  %v220 = vadd.f32 %v61, %v219
  %v221 = vpop.f32.mrf.mxu0
  %v222 = vpop.f32.mrf.mxu0
  %v223 = vpop.f32.mrf.mxu0
  %224 = vdwg.mxu0
  %225 = vmatprep.subr.bf16.mxu0 0
  %226 = vmatpush1.bf16.msra.mxu0 0
  %227 = vmatprep.subr.bf16.mxu0 0
  %228 = vmatpush1.bf16.msra.mxu0 0
  %229 = vmatprep.subr.bf16.mxu0 0
  %230 = vmatpush1.bf16.msra.mxu0 0
  %231 = vmatprep.subr.bf16.mxu0 0
  %232 = vmatpush1.bf16.msra.mxu0 0
  %233 = vmatprep.subr.bf16.mxu0 0
  %234 = vmatpush1.bf16.msra.mxu0 0
  %235 = vmatprep.subr.bf16.mxu0 0
  %236 = vmatpush1.bf16.msra.mxu0 0
  %237 = vmatprep.subr.bf16.mxu0 0
  %238 = vmatpush1.bf16.msra.mxu0 %v162
  %239 = vmatprep.subr.bf16.mxu0 0
  %240 = vmatpush1.bf16.msra.mxu0 %v161
  %241 = vmatprep.subr.bf16.mxu0 0
  %242 = vmatpush2.bf16.msra.mxu0 0
  %243 = vmatprep.subr.bf16.mxu0 0
  %244 = vmatpush2.bf16.msra.mxu0 0
  %245 = vmatprep.subr.bf16.mxu0 0
  %246 = vmatpush2.bf16.msra.mxu0 0
  %247 = vmatprep.subr.bf16.mxu0 0
  %248 = vmatpush2.bf16.msra.mxu0 0
  %249 = vmatprep.subr.bf16.mxu0 0
  %250 = vmatpush2.bf16.msra.mxu0 0
  %251 = vmatprep.subr.bf16.mxu0 0
  %252 = vmatpush2.bf16.msra.mxu0 0
  %253 = vmatprep.subr.bf16.mxu0 0
  %254 = vmatpush2.bf16.msra.mxu0 0
  %255 = vmatprep.subr.bf16.mxu0 0
  %256 = vmatpush2.bf16.msra.mxu0 0
  %257 = vmatprep.mubr.bf16.mxu0 0
  %258 = vmatmul.mubr.bf16.gmra.mxu0 %v183
  %v259 = vpop.f32.mrf.mxu0
  %v260 = vadd.f32 %v220, %v259
  %v261 = vpop.f32.mrf.mxu0
  %v262 = vpop.f32.mrf.mxu0
  %v263 = vpop.f32.mrf.mxu0
  %264 = vdwg.mxu0
  %v265 = vld [vmem:[%s3] sm:$0xff]
  %v266 = vadd.f32 %v260, %v265
  %267 = vst.msk [vmem:[%s4] sm:$0xff] %vm181, %v266
  // Predicated region
  $region18: #{impala_cnn_base_forward.34} parent=0 // pred_check
    _
  $region19: #{impala_cnn_base_forward.34} parent=0 // pred_check_branch
    %269 = sbr.rel (0) target = $region21
  $region20: #{impala_cnn_base_forward.34} parent=0 // pred_region
    _
  $region21: #{impala_cnn_base_forward.34} parent=0 // pred_fallthru
    _
  // Predicated region
  $region22: #{impala_cnn_base_forward.34} parent=0 // pred_check
    _
  $region23: #{impala_cnn_base_forward.34} parent=0 // pred_check_branch
    %271 = sbr.rel (0) target = $region25
  $region24: #{impala_cnn_base_forward.34} parent=0 // pred_region
    _
  $region25: #{impala_cnn_base_forward.34} parent=0 // pred_fallthru
    _

// kernel: impala_cnn_base_forward.37
$region0: #{impala_cnn_base_forward.37}
  #allocation0 [shape = 'u32[]', space=smem, size = 0x4, offset = 0x4, fixed_abs, tag = 'smem constant byte address 0x4 - core index']
  #allocation1 [shape = 'u32[144,128]{1,0:T(1,128)}', space=vmem, size = 0x12000, scoped, tag = 'internal scratch']
  #allocation2 [shape = 'f32[1,1]{1,0:T(1,128)S(1)}', space=vmem, size = 0x200, scoped, tag = 'scoped memory for impala_cnn_base_forward.37']
  %s0 = inlined_call_operand.vmem [shape: f32[2,128], index: 0, kind: input, shape index: {}]
  %s1 = inlined_call_operand.vmem [shape: bf16[128,32], index: 1, kind: input, shape index: {}]
  %s2 = inlined_call_operand.vmem [shape: f32[1,32], index: 2, kind: input, shape index: {}]
  %s3 = inlined_call_operand.vmem [shape: bf16[32,1], index: 3, kind: input, shape index: {}]
  %s4 = inlined_call_operand.<no memory space> [shape: f32[1,1], index: 4, kind: input, shape index: {}]
  %s5 = inlined_call_operand.hbm [shape: f32[2,32], index: 5, kind: output, shape index: {0}]
  %s6 = inlined_call_operand.vmem [shape: f32[2,1], index: 6, kind: output, shape index: {1}]
  %7 = xla_tuple %s5, %s6
  %s8 = sld [smem:[#allocation0]]
  $region38: #{impala_cnn_base_forward.37} parent=0
    _
  %s10 = ssub.s32 1, %s8
  %s11 = scalar_select 0, %s10, %s8
  %v12 = vstv %s4
  %13 = vst [vmem:[#allocation2] sm:$0x1] %v12
  $region1: #{impala_cnn_base_forward.37} parent=0
    #allocation3 [shape = 'u8[1024]{0}', space=vmem, size = 0x400, scoped, tag = 'output window, operand 0, single buffered']
    #allocation4 [shape = 's32[1]{0}', space=sflag, size = 0x4, scoped, tag = 'scoped memory for impala_cnn_base_forward.37']
    %14 = vsyncpa [#allocation4], 0
    // Predicated region
    $region2: #{impala_cnn_base_forward.37} parent=1 // pred_check
      _
    $region3: #{impala_cnn_base_forward.37} parent=1 // pred_check_branch
      %16 = sbr.rel (0) target = $region5
    $region4: #{impala_cnn_base_forward.37} parent=1 // pred_region
      _
    $region5: #{impala_cnn_base_forward.37} parent=1 // pred_fallthru
      _
    // Predicated region
    $region6: #{impala_cnn_base_forward.37} parent=1 // pred_check
      _
    $region7: #{impala_cnn_base_forward.37} parent=1 // pred_check_branch
      %18 = sbr.rel (0) target = $region9
    $region8: #{impala_cnn_base_forward.37} parent=1 // pred_region
      _
    $region9: #{impala_cnn_base_forward.37} parent=1 // pred_fallthru
      _
    // Predicated region
    $region10: #{impala_cnn_base_forward.37} parent=1 // pred_check
      _
    $region11: #{impala_cnn_base_forward.37} parent=1 // pred_check_branch
      %20 = sbr.rel (0) target = $region13
    $region12: #{impala_cnn_base_forward.37} parent=1 // pred_region
      _
    $region13: #{impala_cnn_base_forward.37} parent=1 // pred_fallthru
      _
    // Predicated region
    $region14: #{impala_cnn_base_forward.37} parent=1 // pred_check
      _
    $region15: #{impala_cnn_base_forward.37} parent=1 // pred_check_branch
      %22 = sbr.rel (0) target = $region17
    $region16: #{impala_cnn_base_forward.37} parent=1 // pred_region
      _
    $region17: #{impala_cnn_base_forward.37} parent=1 // pred_fallthru
      _
    // Predicated region
    $region18: #{impala_cnn_base_forward.37} parent=1 // pred_check
      _
    $region19: #{impala_cnn_base_forward.37} parent=1 // pred_check_branch
      %24 = sbr.rel (0) target = $region21
    $region20: #{impala_cnn_base_forward.37} parent=1 // pred_region
      _
    $region21: #{impala_cnn_base_forward.37} parent=1 // pred_fallthru
      _
    %v26 = vld [vmem:[%s0] sm:$0x3]
    %v27 = vmax.f32 %v26, 0.0
    %v28 = vpack.c.bf16 %v27, %v27
    %v29 = vld [vmem:[%s1] sm:$0xf]
    %v30 = vld [vmem:[%s1 + $0x4] sm:$0xf]
    %v31 = vld [vmem:[%s1 + $0x8] sm:$0xf]
    %v32 = vld [vmem:[%s1 + $0xc] sm:$0xf]
    %v33 = vld [vmem:[%s1 + $0x10] sm:$0xf]
    %v34 = vld [vmem:[%s1 + $0x14] sm:$0xf]
    %v35 = vld [vmem:[%s1 + $0x18] sm:$0xf]
    %v36 = vld [vmem:[%s1 + $0x1c] sm:$0xf]
    %v37 = vld [vmem:[%s1 + $0x20] sm:$0xf]
    %v38 = vld [vmem:[%s1 + $0x24] sm:$0xf]
    %v39 = vld [vmem:[%s1 + $0x28] sm:$0xf]
    %v40 = vld [vmem:[%s1 + $0x2c] sm:$0xf]
    %v41 = vld [vmem:[%s1 + $0x30] sm:$0xf]
    %v42 = vld [vmem:[%s1 + $0x34] sm:$0xf]
    %v43 = vld [vmem:[%s1 + $0x38] sm:$0xf]
    %v44 = vld [vmem:[%s1 + $0x3c] sm:$0xf]
    %v45 = vld [vmem:[%s2] sm:$0x1]
    %v47 = vlaneseq
    %v48 = vshrl.u32 %v47, 7
    %v49 = vsub.s32 0, %v48
    %v50 = vrot.slane %v45, %v49
    %v68 = vunpack.c.l.b16 %v29
    %v69 = vunpack.c.l.b16 %v30
    %v70 = vunpack.c.l.b16 %v31
    %v71 = vunpack.c.l.b16 %v32
    %v72 = vunpack.c.l.b16 %v33
    %v73 = vunpack.c.l.b16 %v34
    %v74 = vunpack.c.l.b16 %v35
    %v75 = vunpack.c.l.b16 %v36
    %v76 = vunpack.c.l.b16 %v37
    %v77 = vunpack.c.l.b16 %v38
    %v78 = vunpack.c.l.b16 %v39
    %v79 = vunpack.c.l.b16 %v40
    %v80 = vunpack.c.l.b16 %v41
    %v81 = vunpack.c.l.b16 %v42
    %v82 = vunpack.c.l.b16 %v43
    %v83 = vunpack.c.l.b16 %v44
    %v84 = vpack.c.b16 %v69, %v68
    %v85 = vpack.c.b16 %v71, %v70
    %v86 = vpack.c.b16 %v73, %v72
    %v87 = vpack.c.b16 %v75, %v74
    %v88 = vpack.c.b16 %v77, %v76
    %v89 = vpack.c.b16 %v79, %v78
    %v90 = vpack.c.b16 %v81, %v80
    %v91 = vpack.c.b16 %v83, %v82
    %100 = vmatprep.subr.bf16.mxu0 0
    %101 = vmatpush1.bf16.msra.mxu0 %v91
    %102 = vmatprep.subr.bf16.mxu0 0
    %103 = vmatpush1.bf16.msra.mxu0 %v90
    %104 = vmatprep.subr.bf16.mxu0 0
    %105 = vmatpush1.bf16.msra.mxu0 %v89
    %106 = vmatprep.subr.bf16.mxu0 0
    %107 = vmatpush1.bf16.msra.mxu0 %v88
    %108 = vmatprep.subr.bf16.mxu0 0
    %109 = vmatpush1.bf16.msra.mxu0 %v87
    %110 = vmatprep.subr.bf16.mxu0 0
    %111 = vmatpush1.bf16.msra.mxu0 %v86
    %112 = vmatprep.subr.bf16.mxu0 0
    %113 = vmatpush1.bf16.msra.mxu0 %v85
    %114 = vmatprep.subr.bf16.mxu0 0
    %115 = vmatpush1.bf16.msra.mxu0 %v84
    %116 = vmatprep.subr.bf16.mxu0 0
    %117 = vmatpush2.bf16.msra.mxu0 0
    %118 = vmatprep.subr.bf16.mxu0 0
    %119 = vmatpush2.bf16.msra.mxu0 0
    %120 = vmatprep.subr.bf16.mxu0 0
    %121 = vmatpush2.bf16.msra.mxu0 0
    %122 = vmatprep.subr.bf16.mxu0 0
    %123 = vmatpush2.bf16.msra.mxu0 0
    %124 = vmatprep.subr.bf16.mxu0 0
    %125 = vmatpush2.bf16.msra.mxu0 0
    %126 = vmatprep.subr.bf16.mxu0 0
    %127 = vmatpush2.bf16.msra.mxu0 0
    %128 = vmatprep.subr.bf16.mxu0 0
    %129 = vmatpush2.bf16.msra.mxu0 0
    %130 = vmatprep.subr.bf16.mxu0 0
    %131 = vmatpush2.bf16.msra.mxu0 0
    %132 = vmatprep.mubr.bf16.mxu0 0
    %133 = vmatmul.mubr.bf16.gmra.mxu0 %v28
    %v134 = vpop.f32.mrf.mxu0
    %v135 = vadd.f32 %v50, %v134
    %v136 = vpop.f32.mrf.mxu0
    %v137 = vpop.f32.mrf.mxu0
    %v138 = vpop.f32.mrf.mxu0
    %139 = vdwg.mxu0
    %v140 = vmax.f32 %v135, 0.0
    %v141 = vpack.c.bf16 %v140, %v140
    %v142 = vld [vmem:[%s3] sm:$0xf]
    %v143 = vld [vmem:[%s3 + $0x4] sm:$0xf]
    %v144 = vld [vmem:[%s3 + $0x8] sm:$0xf]
    %v145 = vld [vmem:[%s3 + $0xc] sm:$0xf]
    %v146 = vld [vmem:[#allocation2] sm:$0x1]
    %v148 = vlaneseq
    %v149 = vshrl.u32 %v148, 7
    %v150 = vsub.s32 0, %v149
    %v151 = vrot.slane %v146, %v150
    %v157 = vunpack.c.l.b16 %v142
    %v158 = vunpack.c.l.b16 %v143
    %v159 = vunpack.c.l.b16 %v144
    %v160 = vunpack.c.l.b16 %v145
    %v161 = vpack.c.b16 %v158, %v157
    %v162 = vpack.c.b16 %v160, %v159
    %vm165 = vcmask 261120
    %v167 = vsel %vm165, %v141, 0
    %169 = vmatprep.subr.bf16.mxu0 0
    %170 = vmatpush1.bf16.msra.mxu0 0
    %171 = vmatprep.subr.bf16.mxu0 0
    %172 = vmatpush1.bf16.msra.mxu0 0
    %173 = vmatprep.subr.bf16.mxu0 0
    %174 = vmatpush1.bf16.msra.mxu0 0
    %175 = vmatprep.subr.bf16.mxu0 0
    %176 = vmatpush1.bf16.msra.mxu0 0
    %177 = vmatprep.subr.bf16.mxu0 0
    %178 = vmatpush1.bf16.msra.mxu0 0
    %179 = vmatprep.subr.bf16.mxu0 0
    %180 = vmatpush1.bf16.msra.mxu0 0
    %181 = vmatprep.subr.bf16.mxu0 0
    %182 = vmatpush1.bf16.msra.mxu0 %v162
    %183 = vmatprep.subr.bf16.mxu0 0
    %184 = vmatpush1.bf16.msra.mxu0 %v161
    %185 = vmatprep.subr.bf16.mxu0 0
    %186 = vmatpush2.bf16.msra.mxu0 0
    %187 = vmatprep.subr.bf16.mxu0 0
    %188 = vmatpush2.bf16.msra.mxu0 0
    %189 = vmatprep.subr.bf16.mxu0 0
    %190 = vmatpush2.bf16.msra.mxu0 0
    %191 = vmatprep.subr.bf16.mxu0 0
    %192 = vmatpush2.bf16.msra.mxu0 0
    %193 = vmatprep.subr.bf16.mxu0 0
    %194 = vmatpush2.bf16.msra.mxu0 0
    %195 = vmatprep.subr.bf16.mxu0 0
    %196 = vmatpush2.bf16.msra.mxu0 0
    %197 = vmatprep.subr.bf16.mxu0 0
    %198 = vmatpush2.bf16.msra.mxu0 0
    %199 = vmatprep.subr.bf16.mxu0 0
    %200 = vmatpush2.bf16.msra.mxu0 0
    %201 = vmatprep.mubr.bf16.mxu0 0
    %202 = vmatmul.mubr.bf16.gmra.mxu0 %v167
    %v203 = vpop.f32.mrf.mxu0
    %v204 = vadd.f32 %v151, %v203
    %v205 = vpop.f32.mrf.mxu0
    %v206 = vpop.f32.mrf.mxu0
    %v207 = vpop.f32.mrf.mxu0
    %208 = vdwg.mxu0
    %vm209 = vcmask 254976
    %210 = vst.msk [vmem:[#allocation3] sm:$0x3] %vm209, %v140
    %vm211 = vcmask 1024
    %212 = vst.msk [vmem:[%s6] sm:$0x3] %vm211, %v204
    // Predicated region
    $region22: #{impala_cnn_base_forward.37} parent=1 // pred_check
      _
    $region23: #{impala_cnn_base_forward.37} parent=1 // pred_check_branch
      %214 = sbr.rel (0) target = $region25
    $region24: #{impala_cnn_base_forward.37} parent=1 // pred_region
      %s216 = ssub.s32 32, 32
      %217 = vsyncadd [#allocation4], %s216
      %s219 = sshll.u32 [#allocation3], 4
      %s220 = int_to_ptr.vmem [resolvable:$true] %s219
      %222 = dma.vmem_to_hbm [thread:$0]  %s220, 32, %s5, [#allocation4]
    $region25: #{impala_cnn_base_forward.37} parent=1 // pred_fallthru
      _
    // Predicated region
    $region26: #{impala_cnn_base_forward.37} parent=1 // pred_check
      _
    $region27: #{impala_cnn_base_forward.37} parent=1 // pred_check_branch
      %224 = sbr.rel (0) target = $region29
    $region28: #{impala_cnn_base_forward.37} parent=1 // pred_region
      _
    $region29: #{impala_cnn_base_forward.37} parent=1 // pred_fallthru
      _
    // Predicated region
    $region30: #{impala_cnn_base_forward.37} parent=1 // pred_check
      _
    $region31: #{impala_cnn_base_forward.37} parent=1 // pred_check_branch
      %226 = sbr.rel (0) target = $region33
    $region32: #{impala_cnn_base_forward.37} parent=1 // pred_region
      %227 = dma.done [#allocation4], 32
    $region33: #{impala_cnn_base_forward.37} parent=1 // pred_fallthru
      _
    // Predicated region
    $region34: #{impala_cnn_base_forward.37} parent=1 // pred_check
      _
    $region35: #{impala_cnn_base_forward.37} parent=1 // pred_check_branch
      %229 = sbr.rel (0) target = $region37
    $region36: #{impala_cnn_base_forward.37} parent=1 // pred_region
      _
    $region37: #{impala_cnn_base_forward.37} parent=1 // pred_fallthru
      _
    %230 = vsyncpa [#allocation4], 1

</llo_original>
